<compile_context>
chip_gen: v6e
topology: v6e:2x2x1
jax: 0.10.0
libtpu: 0.0.40
codegen_flags: <defaults>
</compile_context>

<pallas_src>
import math

import jax
import jax.numpy as jnp
from jax.experimental import pallas as pl
from jax.experimental.pallas import tpu as pltpu


def _rff_kernel(x_ref, b_ref, out_ref):
    # x_ref:   (tile_n, in_dim)  VMEM
    # b_ref:   (in_dim, k)       VMEM (same block every grid step; already *2pi)
    # out_ref: (tile_n, 2*k)     VMEM  -> [cos | sin], lane-dense for k % 64 == 0
    x = x_ref[...]
    embed = jnp.dot(x, b_ref[...], preferred_element_type=jnp.float32)
    # Single full-width store of the whole output tile (2*k lanes).
    out_ref[...] = jnp.concatenate(
        [jnp.cos(embed), jnp.sin(embed)], axis=-1
    ).astype(out_ref.dtype)


def _round_up(a, b):
    return ((a + b - 1) // b) * b


def random_fourier_feat_enc(x, B, *, include_input=True, tile_n=2048):
    """x: [..., in_dim] f32; B: [in_dim, k] f32 -> [..., 2k (+ in_dim)] f32."""
    in_dim, k = B.shape
    assert x.shape[-1] == in_dim, (x.shape, B.shape)

    # Flatten leading batch dims to a single row axis (kernel works on [N, in_dim]).
    lead_shape = x.shape[:-1]
    x2d = x.reshape(-1, in_dim)
    N = x2d.shape[0]

    # Fold the 2*pi scale into B once (tiny constant, done outside the kernel).
    B_scaled = (2.0 * math.pi) * B.astype(jnp.float32)

    # Effective row tile: multiple of 8 sublanes, clamped for small N.
    tile_n_eff = max(8, min(_round_up(tile_n, 8), _round_up(N, 8)))
    grid_n = pl.cdiv(N, tile_n_eff)
    n_pad = grid_n * tile_n_eff

    x_in = x2d if n_pad == N else jnp.pad(x2d, ((0, n_pad - N), (0, 0)))

    out_k = 2 * k  # kernel output width; 128 lanes for the module default k=64

    cost = pl.CostEstimate(
        flops=2 * n_pad * in_dim * k,
        transcendentals=2 * n_pad * k,
        bytes_accessed=4 * n_pad * (in_dim + out_k) + 4 * in_dim * k,
    )

    trig = pl.pallas_call(
        _rff_kernel,
        out_shape=jax.ShapeDtypeStruct((n_pad, out_k), x.dtype),
        grid_spec=pltpu.PrefetchScalarGridSpec(
            num_scalar_prefetch=0,
            grid=(grid_n,),
            in_specs=[
                # x: tiled along rows, full (small) feature axis.
                pl.BlockSpec((tile_n_eff, in_dim), lambda i: (i, 0)),
                # B: whole (tiny) matrix, same block every grid step
                # (fetched once, resident in VMEM).
                pl.BlockSpec((in_dim, k), lambda i: (0, 0)),
            ],
            out_specs=pl.BlockSpec((tile_n_eff, out_k), lambda i: (i, 0)),
        ),
        compiler_params=pltpu.CompilerParams(
            dimension_semantics=("parallel",),
        ),
        cost_estimate=cost,
    )(x_in, B_scaled)

    trig = trig[:N]
    if include_input:
        # Keep the torch output layout [cos | sin | x] via a wrapper concat,
        # so the kernel's own output slab stays lane-dense and unmasked.
        out = jnp.concatenate([trig, x2d.astype(trig.dtype)], axis=-1)
    else:
        out = trig
    return out.reshape(*lead_shape, out.shape[-1])


def random_fourier_feat_enc_ref(x, B, include_input=True):
    embed = 2.0 * math.pi * (x @ B)
    parts = [jnp.cos(embed), jnp.sin(embed)]
    if include_input:
        parts.append(x)
    return jnp.concatenate(parts, axis=-1)


if __name__ == "__main__":
    # Module params (deterministic init, no checkpoint load)
    in_dim = 3
    k = 64
    std = 1.0

    key = jax.random.PRNGKey(0)
    kB, kx1, kx2 = jax.random.split(key, 3)
    B = jax.random.normal(kB, (in_dim, k), dtype=jnp.float32) * std

    # Case 1: small 2-D batch of points, include_input=True.
    N = 128
    x = jax.random.normal(kx1, (N, in_dim), dtype=jnp.float32)
    out = jax.block_until_ready(random_fourier_feat_enc(x, B, include_input=True))
    ref = random_fourier_feat_enc_ref(x, B, include_input=True)
    assert out.shape == (N, 2 * k + in_dim), out.shape
    # Slightly looser tolerance: 2*pi is folded into B before the dot, which
    # changes f32 rounding of the trig argument by O(1e-6).
    assert jnp.allclose(out, ref, atol=1e-4, rtol=1e-4), float(
        jnp.max(jnp.abs(out - ref))
    )

    # Case 2: ragged row count + leading batch dim, include_input=False
    # (exercises the padding path and the batch-flattening wrapper).
    x3 = jax.random.normal(kx2, (2, 37, in_dim), dtype=jnp.float32)
    out3 = jax.block_until_ready(
        random_fourier_feat_enc(x3, B, include_input=False)
    )
    ref3 = random_fourier_feat_enc_ref(x3, B, include_input=False)
    assert out3.shape == (2, 37, 2 * k), out3.shape
    assert jnp.allclose(out3, ref3, atol=1e-4, rtol=1e-4), float(
        jnp.max(jnp.abs(out3 - ref3))
    )

    print("KERNEL_OK")
</pallas_src>

<mosaic_0001>
module attributes {stable_mosaic.version = 11 : i64} {
  func.func @_rff_kernel(%arg0: i32, %arg1: memref<128x3xf32, #tpu.memory_space<vmem>>, %arg2: memref<3x64xf32, #tpu.memory_space<vmem>>, %arg3: memref<128x128xf32, #tpu.memory_space<vmem>>) attributes {dimension_semantics = [#tpu.dimension_semantics<parallel>], iteration_bounds = array<i64: 1>, scalar_prefetch = 0 : i64, scratch_operands = 0 : i64, tpu.core_type = #tpu.core_type<tc>, window_params = [{transform_indices = @transform_0, window_bounds = array<i64: 128, 3>}, {pipeline_mode = #tpu.pipeline_mode<synchronous>, transform_indices = @transform_1, window_bounds = array<i64: 3, 64>}, {transform_indices = @transform_2, window_bounds = array<i64: 128, 128>}]} {
    %c0 = arith.constant 0 : index
    %c0_0 = arith.constant 0 : index
    %0 = vector.load %arg1[%c0, %c0_0] : memref<128x3xf32, #tpu.memory_space<vmem>>, vector<128x3xf32>
    %c0_1 = arith.constant 0 : index
    %c0_2 = arith.constant 0 : index
    %1 = vector.load %arg2[%c0_1, %c0_2] : memref<3x64xf32, #tpu.memory_space<vmem>>, vector<3x64xf32>
    %cst = arith.constant dense<0.000000e+00> : vector<128x64xf32>
    %2 = tpu.matmul %0, %1, %cst {dimension_numbers = #tpu.dot_dimension_numbers<[1], [0], [0], [1], [0, 0, 1, 1], [], []>} : vector<128x3xf32>, vector<3x64xf32>, vector<128x64xf32> -> vector<128x64xf32>
    %3 = math.cos %2 : vector<128x64xf32>
    %4 = math.sin %2 : vector<128x64xf32>
    %5 = tpu.concatenate %3, %4 in 1 : vector<128x64xf32>, vector<128x64xf32> -> vector<128x128xf32>
    %c0_3 = arith.constant 0 : index
    %c0_4 = arith.constant 0 : index
    %6 = vector.load %arg3[%c0_3, %c0_4] : memref<128x128xf32, #tpu.memory_space<vmem>>, vector<128x128xf32>
    tpu.vector_store %arg3[%c0_3, %c0_4], %5 {strides = array<i32>} : memref<128x128xf32, #tpu.memory_space<vmem>>, vector<128x128xf32>,
    return
  }
  func.func @transform_0(%arg0: i32) -> (i32, i32) {
    %c0_i32 = arith.constant 0 : i32
    %c0_i32_0 = arith.constant 0 : i32
    return %arg0, %c0_i32 : i32, i32
  }
  func.func @transform_1(%arg0: i32) -> (i32, i32) {
    %c0_i32 = arith.constant 0 : i32
    %c0_i32_0 = arith.constant 0 : i32
    %c0_i32_1 = arith.constant 0 : i32
    return %c0_i32, %c0_i32_0 : i32, i32
  }
  func.func @transform_2(%arg0: i32) -> (i32, i32) {
    %c0_i32 = arith.constant 0 : i32
    %c0_i32_0 = arith.constant 0 : i32
    return %arg0, %c0_i32 : i32, i32
  }
}

</mosaic_0001>

<llo_original>
// kernel: tpu_custom_call.1
$region0: #{tpu_custom_call.1}
  #allocation0 [shape = 'u32[]', space=smem, size = 0x4, offset = 0x4, fixed_abs, tag = 'smem constant byte address 0x4 - core index']
  #allocation1 [shape = 'u32[144,128]{1,0:T(1,128)}', space=vmem, size = 0x12000, scoped, tag = 'internal scratch']
  %s0 = inlined_call_operand.vmem [shape: f32[128,3], index: 0, kind: input, shape index: {}]
  %s1 = inlined_call_operand.vmem [shape: f32[3,64], index: 1, kind: input, shape index: {}]
  %s2 = inlined_call_operand.hbm [shape: f32[128,128], index: 2, kind: output, shape index: {}]
  %s3 = sld [smem:[#allocation0]]
  $region18: #{tpu_custom_call.1} parent=0
    _
  %s5 = ssub.s32 1, %s3
  %s6 = scalar_select 0, %s5, %s3
  $region1: #{tpu_custom_call.1} parent=0
    #allocation2 [shape = 'u8[65536]{0}', space=vmem, size = 0x10000, scoped, tag = 'output window, operand 0, single buffered']
    #allocation3 [shape = 's32[1]{0}', space=sflag, size = 0x4, scoped, tag = 'scoped memory for tpu_custom_call.1']
    %7 = vsyncpa [#allocation3], 0
    // Predicated region
    $region2: #{tpu_custom_call.1} parent=1 // pred_check
      _
    $region3: #{tpu_custom_call.1} parent=1 // pred_check_branch
      %9 = sbr.rel (0) target = $region5
    $region4: #{tpu_custom_call.1} parent=1 // pred_region
      _
    $region5: #{tpu_custom_call.1} parent=1 // pred_fallthru
      _
    // Predicated region
    $region6: #{tpu_custom_call.1} parent=1 // pred_check
      _
    $region7: #{tpu_custom_call.1} parent=1 // pred_check_branch
      %11 = sbr.rel (0) target = $region9
    $region8: #{tpu_custom_call.1} parent=1 // pred_region
      _
    $region9: #{tpu_custom_call.1} parent=1 // pred_fallthru
      _
    %v12 = vld [vmem:[%s0] sm:$0xff]
    %v13 = vld [vmem:[%s0 + $0x8] sm:$0xff]
    %v14 = vld [vmem:[%s0 + $0x10] sm:$0xff]
    %v15 = vld [vmem:[%s0 + $0x18] sm:$0xff]
    %v16 = vld [vmem:[%s0 + $0x20] sm:$0xff]
    %v17 = vld [vmem:[%s0 + $0x28] sm:$0xff]
    %v18 = vld [vmem:[%s0 + $0x30] sm:$0xff]
    %v19 = vld [vmem:[%s0 + $0x38] sm:$0xff]
    %v20 = vld [vmem:[%s0 + $0x40] sm:$0xff]
    %v21 = vld [vmem:[%s0 + $0x48] sm:$0xff]
    %v22 = vld [vmem:[%s0 + $0x50] sm:$0xff]
    %v23 = vld [vmem:[%s0 + $0x58] sm:$0xff]
    %v24 = vld [vmem:[%s0 + $0x60] sm:$0xff]
    %v25 = vld [vmem:[%s0 + $0x68] sm:$0xff]
    %v26 = vld [vmem:[%s0 + $0x70] sm:$0xff]
    %v27 = vld [vmem:[%s0 + $0x78] sm:$0xff]
    %v28 = vld [vmem:[%s1] sm:$0x7]
    %vm29 = vcmask 23552
    %v31 = vsel %vm29, %v12, 0
    %v34 = vsel %vm29, %v13, 0
    %v37 = vsel %vm29, %v14, 0
    %v40 = vsel %vm29, %v15, 0
    %v43 = vsel %vm29, %v16, 0
    %v46 = vsel %vm29, %v17, 0
    %v49 = vsel %vm29, %v18, 0
    %v52 = vsel %vm29, %v19, 0
    %v55 = vsel %vm29, %v20, 0
    %v58 = vsel %vm29, %v21, 0
    %v61 = vsel %vm29, %v22, 0
    %v64 = vsel %vm29, %v23, 0
    %v67 = vsel %vm29, %v24, 0
    %v70 = vsel %vm29, %v25, 0
    %v73 = vsel %vm29, %v26, 0
    %v76 = vsel %vm29, %v27, 0
    %vm78 = vcmask 1042432
    %v80 = vsel %vm78, %v28, 0
    %82 = vmatprep.subr.mxu0 0.0
    %83 = vmatpush1.msra.mxu0 0.0
    %84 = vmatprep.subr.mxu0 0.0
    %85 = vmatpush1.msra.mxu0 0.0
    %86 = vmatprep.subr.mxu0 0.0
    %87 = vmatpush1.msra.mxu0 0.0
    %88 = vmatprep.subr.mxu0 0.0
    %89 = vmatpush1.msra.mxu0 0.0
    %90 = vmatprep.subr.mxu0 0.0
    %91 = vmatpush1.msra.mxu0 0.0
    %92 = vmatprep.subr.mxu0 0.0
    %93 = vmatpush1.msra.mxu0 0.0
    %94 = vmatprep.subr.mxu0 0.0
    %95 = vmatpush1.msra.mxu0 0.0
    %96 = vmatprep.subr.mxu0 0.0
    %97 = vmatpush1.msra.mxu0 0.0
    %98 = vmatprep.subr.mxu0 0.0
    %99 = vmatpush1.msra.mxu0 0.0
    %100 = vmatprep.subr.mxu0 0.0
    %101 = vmatpush1.msra.mxu0 0.0
    %102 = vmatprep.subr.mxu0 0.0
    %103 = vmatpush1.msra.mxu0 0.0
    %104 = vmatprep.subr.mxu0 0.0
    %105 = vmatpush1.msra.mxu0 0.0
    %106 = vmatprep.subr.mxu0 0.0
    %107 = vmatpush1.msra.mxu0 0.0
    %108 = vmatprep.subr.mxu0 0.0
    %109 = vmatpush1.msra.mxu0 0.0
    %110 = vmatprep.subr.mxu0 0.0
    %111 = vmatpush1.msra.mxu0 0.0
    %112 = vmatprep.subr.mxu0 0.0
    %113 = vmatpush1.msra.mxu0 %v80
    %114 = vmatprep.subr.mxu0 0.0
    %115 = vmatpush2.msra.mxu0 0.0
    %116 = vmatprep.subr.mxu0 0.0
    %117 = vmatpush2.msra.mxu0 0.0
    %118 = vmatprep.subr.mxu0 0.0
    %119 = vmatpush2.msra.mxu0 0.0
    %120 = vmatprep.subr.mxu0 0.0
    %121 = vmatpush2.msra.mxu0 0.0
    %122 = vmatprep.subr.mxu0 0.0
    %123 = vmatpush2.msra.mxu0 0.0
    %124 = vmatprep.subr.mxu0 0.0
    %125 = vmatpush2.msra.mxu0 0.0
    %126 = vmatprep.subr.mxu0 0.0
    %127 = vmatpush2.msra.mxu0 0.0
    %128 = vmatprep.subr.mxu0 0.0
    %129 = vmatpush2.msra.mxu0 0.0
    %130 = vmatprep.subr.mxu0 0.0
    %131 = vmatpush2.msra.mxu0 0.0
    %132 = vmatprep.subr.mxu0 0.0
    %133 = vmatpush2.msra.mxu0 0.0
    %134 = vmatprep.subr.mxu0 0.0
    %135 = vmatpush2.msra.mxu0 0.0
    %136 = vmatprep.subr.mxu0 0.0
    %137 = vmatpush2.msra.mxu0 0.0
    %138 = vmatprep.subr.mxu0 0.0
    %139 = vmatpush2.msra.mxu0 0.0
    %140 = vmatprep.subr.mxu0 0.0
    %141 = vmatpush2.msra.mxu0 0.0
    %142 = vmatprep.subr.mxu0 0.0
    %143 = vmatpush2.msra.mxu0 0.0
    %144 = vmatprep.subr.mxu0 0.0
    %145 = vmatpush2.msra.mxu0 0.0
    %146 = vmatprep.mubr.f32.mxu0 0.0
    %147 = vmatmul.mubr.f32.gmra.mxu0 %v31
    %v148 = vpop.f32.mrf.mxu0
    %v149 = vadd.f32 0.0, %v148
    %v150 = vpop.f32.mrf.mxu0
    %151 = vmatprep.mubr.f32.mxu0 0.0
    %152 = vmatmul.mubr.f32.gmra.mxu0 %v34
    %v153 = vpop.f32.mrf.mxu0
    %v154 = vadd.f32 0.0, %v153
    %v155 = vpop.f32.mrf.mxu0
    %156 = vmatprep.mubr.f32.mxu0 0.0
    %157 = vmatmul.mubr.f32.gmra.mxu0 %v37
    %v158 = vpop.f32.mrf.mxu0
    %v159 = vadd.f32 0.0, %v158
    %v160 = vpop.f32.mrf.mxu0
    %161 = vmatprep.mubr.f32.mxu0 0.0
    %162 = vmatmul.mubr.f32.gmra.mxu0 %v40
    %v163 = vpop.f32.mrf.mxu0
    %v164 = vadd.f32 0.0, %v163
    %v165 = vpop.f32.mrf.mxu0
    %166 = vmatprep.mubr.f32.mxu0 0.0
    %167 = vmatmul.mubr.f32.gmra.mxu0 %v43
    %v168 = vpop.f32.mrf.mxu0
    %v169 = vadd.f32 0.0, %v168
    %v170 = vpop.f32.mrf.mxu0
    %171 = vmatprep.mubr.f32.mxu0 0.0
    %172 = vmatmul.mubr.f32.gmra.mxu0 %v46
    %v173 = vpop.f32.mrf.mxu0
    %v174 = vadd.f32 0.0, %v173
    %v175 = vpop.f32.mrf.mxu0
    %176 = vmatprep.mubr.f32.mxu0 0.0
    %177 = vmatmul.mubr.f32.gmra.mxu0 %v49
    %v178 = vpop.f32.mrf.mxu0
    %v179 = vadd.f32 0.0, %v178
    %v180 = vpop.f32.mrf.mxu0
    %181 = vmatprep.mubr.f32.mxu0 0.0
    %182 = vmatmul.mubr.f32.gmra.mxu0 %v52
    %v183 = vpop.f32.mrf.mxu0
    %v184 = vadd.f32 0.0, %v183
    %v185 = vpop.f32.mrf.mxu0
    %186 = vmatprep.mubr.f32.mxu0 0.0
    %187 = vmatmul.mubr.f32.gmra.mxu0 %v55
    %v188 = vpop.f32.mrf.mxu0
    %v189 = vadd.f32 0.0, %v188
    %v190 = vpop.f32.mrf.mxu0
    %191 = vmatprep.mubr.f32.mxu0 0.0
    %192 = vmatmul.mubr.f32.gmra.mxu0 %v58
    %v193 = vpop.f32.mrf.mxu0
    %v194 = vadd.f32 0.0, %v193
    %v195 = vpop.f32.mrf.mxu0
    %196 = vmatprep.mubr.f32.mxu0 0.0
    %197 = vmatmul.mubr.f32.gmra.mxu0 %v61
    %v198 = vpop.f32.mrf.mxu0
    %v199 = vadd.f32 0.0, %v198
    %v200 = vpop.f32.mrf.mxu0
    %201 = vmatprep.mubr.f32.mxu0 0.0
    %202 = vmatmul.mubr.f32.gmra.mxu0 %v64
    %v203 = vpop.f32.mrf.mxu0
    %v204 = vadd.f32 0.0, %v203
    %v205 = vpop.f32.mrf.mxu0
    %206 = vmatprep.mubr.f32.mxu0 0.0
    %207 = vmatmul.mubr.f32.gmra.mxu0 %v67
    %v208 = vpop.f32.mrf.mxu0
    %v209 = vadd.f32 0.0, %v208
    %v210 = vpop.f32.mrf.mxu0
    %211 = vmatprep.mubr.f32.mxu0 0.0
    %212 = vmatmul.mubr.f32.gmra.mxu0 %v70
    %v213 = vpop.f32.mrf.mxu0
    %v214 = vadd.f32 0.0, %v213
    %v215 = vpop.f32.mrf.mxu0
    %216 = vmatprep.mubr.f32.mxu0 0.0
    %217 = vmatmul.mubr.f32.gmra.mxu0 %v73
    %v218 = vpop.f32.mrf.mxu0
    %v219 = vadd.f32 0.0, %v218
    %v220 = vpop.f32.mrf.mxu0
    %221 = vmatprep.mubr.f32.mxu0 0.0
    %222 = vmatmul.mubr.f32.gmra.mxu0 %v76
    %v223 = vpop.f32.mrf.mxu0
    %v224 = vadd.f32 0.0, %v223
    %v225 = vpop.f32.mrf.mxu0
    %226 = vdwg.mxu0
    %v227 = vand.u32 2147483647, %v149
    %vm228 = vcmp.le.f32.partialorder %v227, 0.7853982
    %vm229 = vcmp.lt.s32.totalorder %v149, 0
    %v230 = vand.u32 %v149, 2139095040
    %v231 = vshrl.u32 %v230, 23
    %v232 = vsub.s32 %v231, 127
    %v233 = vand.u32 2147483647, %v149
    %v234 = vand.u32 %v233, 8388607
    %v235 = vor.u32 %v234, 8388608
    %v236 = vsub.s32 0, %v235
    %v237 = vadd.s32 %v232, 1
    %vm238 = vcmp.gt.s32.totalorder %v237, 0
    %v239 = vsel %vm238, %v237, 0
    %v240 = vshrl.u32 %v239, 5
    %v241 = vand.u32 %v239, 31
    %v242 = vsub.s32 32, %v241
    %v243 = vshrl.u32 683565275, %v242
    %v244 = vshll.u32 683565275, %v241
    %v245 = vshrl.u32 2475754826, %v242
    %v246 = vor.u32 %v244, %v245
    %v247 = vshll.u32 2475754826, %v241
    %v248 = vshrl.u32 2131351028, %v242
    %v249 = vor.u32 %v247, %v248
    %v250 = vshll.u32 2131351028, %v241
    %v251 = vshrl.u32 2102212464, %v242
    %v252 = vor.u32 %v250, %v251
    %v253 = vshll.u32 2102212464, %v241
    %v254 = vshrl.u32 920167782, %v242
    %v255 = vor.u32 %v253, %v254
    %v256 = vshll.u32 920167782, %v241
    %v257 = vshrl.u32 1326507024, %v242
    %v258 = vor.u32 %v256, %v257
    %vm259 = vcmp.lt.s32.totalorder %v240, 1
    %vm260 = vcmp.lt.s32.totalorder %v240, 2
    %vm261 = vcmp.lt.s32.totalorder %v240, 3
    %vm262 = vcmp.lt.s32.totalorder %v240, 4
    %v263 = vsel %vm259, %v243, %v246
    %v264 = vsel %vm262, %v252, 2102212464
    %v265 = vsel %vm261, %v249, %v264
    %v266 = vsel %vm260, %v263, %v265
    %v267 = vsel %vm259, %v246, %v249
    %v268 = vsel %vm262, %v255, 920167782
    %v269 = vsel %vm261, %v252, %v268
    %v270 = vsel %vm260, %v267, %v269
    %v271 = vsel %vm259, %v249, %v252
    %v272 = vsel %vm262, %v258, 1326507024
    %v273 = vsel %vm261, %v255, %v272
    %v274 = vsel %vm260, %v271, %v273
    %v275 = vshll.u32 %v235, 8
    %v276 = vmul.u32.u64.compose %v275, %v274
    %v277 = vextract.low.u32 %v276
    %v278 = vextract.high.u32 %v276
    %v279 = vmul.u32.u64.compose %v275, %v270
    %v280 = vextract.low.u32 %v279
    %v281 = vextract.high.u32 %v279
    %v282 = vmul.u32 %v275, %v266
    %v283 = vadd.s32 %v278, %v280
    %vm284 = vc.u32 %v278, %v280
    %v285 = vadd.s32 %v281, 1
    %v286 = vsel %vm284, %v285, %v281
    %v287 = vadd.s32 %v282, %v286
    %v288 = vadd.s32 %v287, 536870912
    %v289 = vshrl.u32 %v288, 30
    %v290 = vshll.u32 %v289, 30
    %v291 = vsub.s32 %v287, %v290
    %vm292 = vcmp.lt.s32.totalorder %v291, 0
    %v293 = vsub.s32 0, %v291
    %v294 = vsel %vm292, %v293, %v291
    %v295 = vclz %v294
    %v296 = vsub.s32 %v295, 2
    %vm297 = vcmp.gt.s32.totalorder 0, %v296
    %v298 = vsel %vm297, 0, %v296
    %v299 = vsub.s32 32, %v298
    %v300 = vshll.u32 %v291, %v298
    %v301 = vshrl.u32 %v283, %v299
    %v302 = vor.u32 %v300, %v301
    %v303 = vsub.s32 4294967266, %v298
    %v304 = vadd.s32 %v303, 127
    %v305 = vshll.u32 %v304, 23
    %v306 = vor.u32 4788187, %v305
    %v307 = vand.u32 2147483647, %v306
    %v309 = vcvt.s32.f32 %v302
    %v310 = vmul.f32 %v309, %v307
    %v311 = vxor.u32 %v310, 2147483648
    %v312 = vsel %vm229, %v311, %v310
    %v313 = vsub.s32 4, %v289
    %v314 = vsel %vm229, %v313, %v289
    %v315 = vsel %vm228, %v149, %v312
    %v316 = vsel %vm228, 0, %v314
    %v317 = vcosq.f32.pop %v315
    %v318 = vsinq.f32.pop %v315
    %vm319 = vweird.f32 %v149
    %v320 = vand.u32 %v316, 3
    %vm321 = vcmp.lt.s32.totalorder %v320, 2
    %vm322 = vcmp.eq.s32.totalorder %v320, 0
    %v323 = vxor.u32 %v318, 2147483648
    %v324 = vsel %vm322, %v317, %v323
    %vm325 = vcmp.eq.s32.totalorder %v320, 2
    %v326 = vxor.u32 %v317, 2147483648
    %v327 = vsel %vm325, %v326, %v318
    %v328 = vsel %vm321, %v324, %v327
    %v329 = vsel %vm319, nan, %v328
    %v330 = vand.u32 2147483647, %v154
    %vm331 = vcmp.le.f32.partialorder %v330, 0.7853982
    %vm332 = vcmp.lt.s32.totalorder %v154, 0
    %v333 = vand.u32 %v154, 2139095040
    %v334 = vshrl.u32 %v333, 23
    %v335 = vsub.s32 %v334, 127
    %v336 = vand.u32 2147483647, %v154
    %v337 = vand.u32 %v336, 8388607
    %v338 = vor.u32 %v337, 8388608
    %v339 = vsub.s32 0, %v338
    %v340 = vadd.s32 %v335, 1
    %vm341 = vcmp.gt.s32.totalorder %v340, 0
    %v342 = vsel %vm341, %v340, 0
    %v343 = vshrl.u32 %v342, 5
    %v344 = vand.u32 %v342, 31
    %v345 = vsub.s32 32, %v344
    %v346 = vshrl.u32 683565275, %v345
    %v347 = vshll.u32 683565275, %v344
    %v348 = vshrl.u32 2475754826, %v345
    %v349 = vor.u32 %v347, %v348
    %v350 = vshll.u32 2475754826, %v344
    %v351 = vshrl.u32 2131351028, %v345
    %v352 = vor.u32 %v350, %v351
    %v353 = vshll.u32 2131351028, %v344
    %v354 = vshrl.u32 2102212464, %v345
    %v355 = vor.u32 %v353, %v354
    %v356 = vshll.u32 2102212464, %v344
    %v357 = vshrl.u32 920167782, %v345
    %v358 = vor.u32 %v356, %v357
    %v359 = vshll.u32 920167782, %v344
    %v360 = vshrl.u32 1326507024, %v345
    %v361 = vor.u32 %v359, %v360
    %vm362 = vcmp.lt.s32.totalorder %v343, 1
    %vm363 = vcmp.lt.s32.totalorder %v343, 2
    %vm364 = vcmp.lt.s32.totalorder %v343, 3
    %vm365 = vcmp.lt.s32.totalorder %v343, 4
    %v366 = vsel %vm362, %v346, %v349
    %v367 = vsel %vm365, %v355, 2102212464
    %v368 = vsel %vm364, %v352, %v367
    %v369 = vsel %vm363, %v366, %v368
    %v370 = vsel %vm362, %v349, %v352
    %v371 = vsel %vm365, %v358, 920167782
    %v372 = vsel %vm364, %v355, %v371
    %v373 = vsel %vm363, %v370, %v372
    %v374 = vsel %vm362, %v352, %v355
    %v375 = vsel %vm365, %v361, 1326507024
    %v376 = vsel %vm364, %v358, %v375
    %v377 = vsel %vm363, %v374, %v376
    %v378 = vshll.u32 %v338, 8
    %v379 = vmul.u32.u64.compose %v378, %v377
    %v380 = vextract.low.u32 %v379
    %v381 = vextract.high.u32 %v379
    %v382 = vmul.u32.u64.compose %v378, %v373
    %v383 = vextract.low.u32 %v382
    %v384 = vextract.high.u32 %v382
    %v385 = vmul.u32 %v378, %v369
    %v386 = vadd.s32 %v381, %v383
    %vm387 = vc.u32 %v381, %v383
    %v388 = vadd.s32 %v384, 1
    %v389 = vsel %vm387, %v388, %v384
    %v390 = vadd.s32 %v385, %v389
    %v391 = vadd.s32 %v390, 536870912
    %v392 = vshrl.u32 %v391, 30
    %v393 = vshll.u32 %v392, 30
    %v394 = vsub.s32 %v390, %v393
    %vm395 = vcmp.lt.s32.totalorder %v394, 0
    %v396 = vsub.s32 0, %v394
    %v397 = vsel %vm395, %v396, %v394
    %v398 = vclz %v397
    %v399 = vsub.s32 %v398, 2
    %vm400 = vcmp.gt.s32.totalorder 0, %v399
    %v401 = vsel %vm400, 0, %v399
    %v402 = vsub.s32 32, %v401
    %v403 = vshll.u32 %v394, %v401
    %v404 = vshrl.u32 %v386, %v402
    %v405 = vor.u32 %v403, %v404
    %v406 = vsub.s32 4294967266, %v401
    %v407 = vadd.s32 %v406, 127
    %v408 = vshll.u32 %v407, 23
    %v409 = vor.u32 4788187, %v408
    %v410 = vand.u32 2147483647, %v409
    %v412 = vcvt.s32.f32 %v405
    %v413 = vmul.f32 %v412, %v410
    %v414 = vxor.u32 %v413, 2147483648
    %v415 = vsel %vm332, %v414, %v413
    %v416 = vsub.s32 4, %v392
    %v417 = vsel %vm332, %v416, %v392
    %v418 = vsel %vm331, %v154, %v415
    %v419 = vsel %vm331, 0, %v417
    %v420 = vcosq.f32.pop %v418
    %v421 = vsinq.f32.pop %v418
    %vm422 = vweird.f32 %v154
    %v423 = vand.u32 %v419, 3
    %vm424 = vcmp.lt.s32.totalorder %v423, 2
    %vm425 = vcmp.eq.s32.totalorder %v423, 0
    %v426 = vxor.u32 %v421, 2147483648
    %v427 = vsel %vm425, %v420, %v426
    %vm428 = vcmp.eq.s32.totalorder %v423, 2
    %v429 = vxor.u32 %v420, 2147483648
    %v430 = vsel %vm428, %v429, %v421
    %v431 = vsel %vm424, %v427, %v430
    %v432 = vsel %vm422, nan, %v431
    %v433 = vand.u32 2147483647, %v159
    %vm434 = vcmp.le.f32.partialorder %v433, 0.7853982
    %vm435 = vcmp.lt.s32.totalorder %v159, 0
    %v436 = vand.u32 %v159, 2139095040
    %v437 = vshrl.u32 %v436, 23
    %v438 = vsub.s32 %v437, 127
    %v439 = vand.u32 2147483647, %v159
    %v440 = vand.u32 %v439, 8388607
    %v441 = vor.u32 %v440, 8388608
    %v442 = vsub.s32 0, %v441
    %v443 = vadd.s32 %v438, 1
    %vm444 = vcmp.gt.s32.totalorder %v443, 0
    %v445 = vsel %vm444, %v443, 0
    %v446 = vshrl.u32 %v445, 5
    %v447 = vand.u32 %v445, 31
    %v448 = vsub.s32 32, %v447
    %v449 = vshrl.u32 683565275, %v448
    %v450 = vshll.u32 683565275, %v447
    %v451 = vshrl.u32 2475754826, %v448
    %v452 = vor.u32 %v450, %v451
    %v453 = vshll.u32 2475754826, %v447
    %v454 = vshrl.u32 2131351028, %v448
    %v455 = vor.u32 %v453, %v454
    %v456 = vshll.u32 2131351028, %v447
    %v457 = vshrl.u32 2102212464, %v448
    %v458 = vor.u32 %v456, %v457
    %v459 = vshll.u32 2102212464, %v447
    %v460 = vshrl.u32 920167782, %v448
    %v461 = vor.u32 %v459, %v460
    %v462 = vshll.u32 920167782, %v447
    %v463 = vshrl.u32 1326507024, %v448
    %v464 = vor.u32 %v462, %v463
    %vm465 = vcmp.lt.s32.totalorder %v446, 1
    %vm466 = vcmp.lt.s32.totalorder %v446, 2
    %vm467 = vcmp.lt.s32.totalorder %v446, 3
    %vm468 = vcmp.lt.s32.totalorder %v446, 4
    %v469 = vsel %vm465, %v449, %v452
    %v470 = vsel %vm468, %v458, 2102212464
    %v471 = vsel %vm467, %v455, %v470
    %v472 = vsel %vm466, %v469, %v471
    %v473 = vsel %vm465, %v452, %v455
    %v474 = vsel %vm468, %v461, 920167782
    %v475 = vsel %vm467, %v458, %v474
    %v476 = vsel %vm466, %v473, %v475
    %v477 = vsel %vm465, %v455, %v458
    %v478 = vsel %vm468, %v464, 1326507024
    %v479 = vsel %vm467, %v461, %v478
    %v480 = vsel %vm466, %v477, %v479
    %v481 = vshll.u32 %v441, 8
    %v482 = vmul.u32.u64.compose %v481, %v480
    %v483 = vextract.low.u32 %v482
    %v484 = vextract.high.u32 %v482
    %v485 = vmul.u32.u64.compose %v481, %v476
    %v486 = vextract.low.u32 %v485
    %v487 = vextract.high.u32 %v485
    %v488 = vmul.u32 %v481, %v472
    %v489 = vadd.s32 %v484, %v486
    %vm490 = vc.u32 %v484, %v486
    %v491 = vadd.s32 %v487, 1
    %v492 = vsel %vm490, %v491, %v487
    %v493 = vadd.s32 %v488, %v492
    %v494 = vadd.s32 %v493, 536870912
    %v495 = vshrl.u32 %v494, 30
    %v496 = vshll.u32 %v495, 30
    %v497 = vsub.s32 %v493, %v496
    %vm498 = vcmp.lt.s32.totalorder %v497, 0
    %v499 = vsub.s32 0, %v497
    %v500 = vsel %vm498, %v499, %v497
    %v501 = vclz %v500
    %v502 = vsub.s32 %v501, 2
    %vm503 = vcmp.gt.s32.totalorder 0, %v502
    %v504 = vsel %vm503, 0, %v502
    %v505 = vsub.s32 32, %v504
    %v506 = vshll.u32 %v497, %v504
    %v507 = vshrl.u32 %v489, %v505
    %v508 = vor.u32 %v506, %v507
    %v509 = vsub.s32 4294967266, %v504
    %v510 = vadd.s32 %v509, 127
    %v511 = vshll.u32 %v510, 23
    %v512 = vor.u32 4788187, %v511
    %v513 = vand.u32 2147483647, %v512
    %v515 = vcvt.s32.f32 %v508
    %v516 = vmul.f32 %v515, %v513
    %v517 = vxor.u32 %v516, 2147483648
    %v518 = vsel %vm435, %v517, %v516
    %v519 = vsub.s32 4, %v495
    %v520 = vsel %vm435, %v519, %v495
    %v521 = vsel %vm434, %v159, %v518
    %v522 = vsel %vm434, 0, %v520
    %v523 = vcosq.f32.pop %v521
    %v524 = vsinq.f32.pop %v521
    %vm525 = vweird.f32 %v159
    %v526 = vand.u32 %v522, 3
    %vm527 = vcmp.lt.s32.totalorder %v526, 2
    %vm528 = vcmp.eq.s32.totalorder %v526, 0
    %v529 = vxor.u32 %v524, 2147483648
    %v530 = vsel %vm528, %v523, %v529
    %vm531 = vcmp.eq.s32.totalorder %v526, 2
    %v532 = vxor.u32 %v523, 2147483648
    %v533 = vsel %vm531, %v532, %v524
    %v534 = vsel %vm527, %v530, %v533
    %v535 = vsel %vm525, nan, %v534
    %v536 = vand.u32 2147483647, %v164
    %vm537 = vcmp.le.f32.partialorder %v536, 0.7853982
    %vm538 = vcmp.lt.s32.totalorder %v164, 0
    %v539 = vand.u32 %v164, 2139095040
    %v540 = vshrl.u32 %v539, 23
    %v541 = vsub.s32 %v540, 127
    %v542 = vand.u32 2147483647, %v164
    %v543 = vand.u32 %v542, 8388607
    %v544 = vor.u32 %v543, 8388608
    %v545 = vsub.s32 0, %v544
    %v546 = vadd.s32 %v541, 1
    %vm547 = vcmp.gt.s32.totalorder %v546, 0
    %v548 = vsel %vm547, %v546, 0
    %v549 = vshrl.u32 %v548, 5
    %v550 = vand.u32 %v548, 31
    %v551 = vsub.s32 32, %v550
    %v552 = vshrl.u32 683565275, %v551
    %v553 = vshll.u32 683565275, %v550
    %v554 = vshrl.u32 2475754826, %v551
    %v555 = vor.u32 %v553, %v554
    %v556 = vshll.u32 2475754826, %v550
    %v557 = vshrl.u32 2131351028, %v551
    %v558 = vor.u32 %v556, %v557
    %v559 = vshll.u32 2131351028, %v550
    %v560 = vshrl.u32 2102212464, %v551
    %v561 = vor.u32 %v559, %v560
    %v562 = vshll.u32 2102212464, %v550
    %v563 = vshrl.u32 920167782, %v551
    %v564 = vor.u32 %v562, %v563
    %v565 = vshll.u32 920167782, %v550
    %v566 = vshrl.u32 1326507024, %v551
    %v567 = vor.u32 %v565, %v566
    %vm568 = vcmp.lt.s32.totalorder %v549, 1
    %vm569 = vcmp.lt.s32.totalorder %v549, 2
    %vm570 = vcmp.lt.s32.totalorder %v549, 3
    %vm571 = vcmp.lt.s32.totalorder %v549, 4
    %v572 = vsel %vm568, %v552, %v555
    %v573 = vsel %vm571, %v561, 2102212464
    %v574 = vsel %vm570, %v558, %v573
    %v575 = vsel %vm569, %v572, %v574
    %v576 = vsel %vm568, %v555, %v558
    %v577 = vsel %vm571, %v564, 920167782
    %v578 = vsel %vm570, %v561, %v577
    %v579 = vsel %vm569, %v576, %v578
    %v580 = vsel %vm568, %v558, %v561
    %v581 = vsel %vm571, %v567, 1326507024
    %v582 = vsel %vm570, %v564, %v581
    %v583 = vsel %vm569, %v580, %v582
    %v584 = vshll.u32 %v544, 8
    %v585 = vmul.u32.u64.compose %v584, %v583
    %v586 = vextract.low.u32 %v585
    %v587 = vextract.high.u32 %v585
    %v588 = vmul.u32.u64.compose %v584, %v579
    %v589 = vextract.low.u32 %v588
    %v590 = vextract.high.u32 %v588
    %v591 = vmul.u32 %v584, %v575
    %v592 = vadd.s32 %v587, %v589
    %vm593 = vc.u32 %v587, %v589
    %v594 = vadd.s32 %v590, 1
    %v595 = vsel %vm593, %v594, %v590
    %v596 = vadd.s32 %v591, %v595
    %v597 = vadd.s32 %v596, 536870912
    %v598 = vshrl.u32 %v597, 30
    %v599 = vshll.u32 %v598, 30
    %v600 = vsub.s32 %v596, %v599
    %vm601 = vcmp.lt.s32.totalorder %v600, 0
    %v602 = vsub.s32 0, %v600
    %v603 = vsel %vm601, %v602, %v600
    %v604 = vclz %v603
    %v605 = vsub.s32 %v604, 2
    %vm606 = vcmp.gt.s32.totalorder 0, %v605
    %v607 = vsel %vm606, 0, %v605
    %v608 = vsub.s32 32, %v607
    %v609 = vshll.u32 %v600, %v607
    %v610 = vshrl.u32 %v592, %v608
    %v611 = vor.u32 %v609, %v610
    %v612 = vsub.s32 4294967266, %v607
    %v613 = vadd.s32 %v612, 127
    %v614 = vshll.u32 %v613, 23
    %v615 = vor.u32 4788187, %v614
    %v616 = vand.u32 2147483647, %v615
    %v618 = vcvt.s32.f32 %v611
    %v619 = vmul.f32 %v618, %v616
    %v620 = vxor.u32 %v619, 2147483648
    %v621 = vsel %vm538, %v620, %v619
    %v622 = vsub.s32 4, %v598
    %v623 = vsel %vm538, %v622, %v598
    %v624 = vsel %vm537, %v164, %v621
    %v625 = vsel %vm537, 0, %v623
    %v626 = vcosq.f32.pop %v624
    %v627 = vsinq.f32.pop %v624
    %vm628 = vweird.f32 %v164
    %v629 = vand.u32 %v625, 3
    %vm630 = vcmp.lt.s32.totalorder %v629, 2
    %vm631 = vcmp.eq.s32.totalorder %v629, 0
    %v632 = vxor.u32 %v627, 2147483648
    %v633 = vsel %vm631, %v626, %v632
    %vm634 = vcmp.eq.s32.totalorder %v629, 2
    %v635 = vxor.u32 %v626, 2147483648
    %v636 = vsel %vm634, %v635, %v627
    %v637 = vsel %vm630, %v633, %v636
    %v638 = vsel %vm628, nan, %v637
    %v639 = vand.u32 2147483647, %v169
    %vm640 = vcmp.le.f32.partialorder %v639, 0.7853982
    %vm641 = vcmp.lt.s32.totalorder %v169, 0
    %v642 = vand.u32 %v169, 2139095040
    %v643 = vshrl.u32 %v642, 23
    %v644 = vsub.s32 %v643, 127
    %v645 = vand.u32 2147483647, %v169
    %v646 = vand.u32 %v645, 8388607
    %v647 = vor.u32 %v646, 8388608
    %v648 = vsub.s32 0, %v647
    %v649 = vadd.s32 %v644, 1
    %vm650 = vcmp.gt.s32.totalorder %v649, 0
    %v651 = vsel %vm650, %v649, 0
    %v652 = vshrl.u32 %v651, 5
    %v653 = vand.u32 %v651, 31
    %v654 = vsub.s32 32, %v653
    %v655 = vshrl.u32 683565275, %v654
    %v656 = vshll.u32 683565275, %v653
    %v657 = vshrl.u32 2475754826, %v654
    %v658 = vor.u32 %v656, %v657
    %v659 = vshll.u32 2475754826, %v653
    %v660 = vshrl.u32 2131351028, %v654
    %v661 = vor.u32 %v659, %v660
    %v662 = vshll.u32 2131351028, %v653
    %v663 = vshrl.u32 2102212464, %v654
    %v664 = vor.u32 %v662, %v663
    %v665 = vshll.u32 2102212464, %v653
    %v666 = vshrl.u32 920167782, %v654
    %v667 = vor.u32 %v665, %v666
    %v668 = vshll.u32 920167782, %v653
    %v669 = vshrl.u32 1326507024, %v654
    %v670 = vor.u32 %v668, %v669
    %vm671 = vcmp.lt.s32.totalorder %v652, 1
    %vm672 = vcmp.lt.s32.totalorder %v652, 2
    %vm673 = vcmp.lt.s32.totalorder %v652, 3
    %vm674 = vcmp.lt.s32.totalorder %v652, 4
    %v675 = vsel %vm671, %v655, %v658
    %v676 = vsel %vm674, %v664, 2102212464
    %v677 = vsel %vm673, %v661, %v676
    %v678 = vsel %vm672, %v675, %v677
    %v679 = vsel %vm671, %v658, %v661
    %v680 = vsel %vm674, %v667, 920167782
    %v681 = vsel %vm673, %v664, %v680
    %v682 = vsel %vm672, %v679, %v681
    %v683 = vsel %vm671, %v661, %v664
    %v684 = vsel %vm674, %v670, 1326507024
    %v685 = vsel %vm673, %v667, %v684
    %v686 = vsel %vm672, %v683, %v685
    %v687 = vshll.u32 %v647, 8
    %v688 = vmul.u32.u64.compose %v687, %v686
    %v689 = vextract.low.u32 %v688
    %v690 = vextract.high.u32 %v688
    %v691 = vmul.u32.u64.compose %v687, %v682
    %v692 = vextract.low.u32 %v691
    %v693 = vextract.high.u32 %v691
    %v694 = vmul.u32 %v687, %v678
    %v695 = vadd.s32 %v690, %v692
    %vm696 = vc.u32 %v690, %v692
    %v697 = vadd.s32 %v693, 1
    %v698 = vsel %vm696, %v697, %v693
    %v699 = vadd.s32 %v694, %v698
    %v700 = vadd.s32 %v699, 536870912
    %v701 = vshrl.u32 %v700, 30
    %v702 = vshll.u32 %v701, 30
    %v703 = vsub.s32 %v699, %v702
    %vm704 = vcmp.lt.s32.totalorder %v703, 0
    %v705 = vsub.s32 0, %v703
    %v706 = vsel %vm704, %v705, %v703
    %v707 = vclz %v706
    %v708 = vsub.s32 %v707, 2
    %vm709 = vcmp.gt.s32.totalorder 0, %v708
    %v710 = vsel %vm709, 0, %v708
    %v711 = vsub.s32 32, %v710
    %v712 = vshll.u32 %v703, %v710
    %v713 = vshrl.u32 %v695, %v711
    %v714 = vor.u32 %v712, %v713
    %v715 = vsub.s32 4294967266, %v710
    %v716 = vadd.s32 %v715, 127
    %v717 = vshll.u32 %v716, 23
    %v718 = vor.u32 4788187, %v717
    %v719 = vand.u32 2147483647, %v718
    %v721 = vcvt.s32.f32 %v714
    %v722 = vmul.f32 %v721, %v719
    %v723 = vxor.u32 %v722, 2147483648
    %v724 = vsel %vm641, %v723, %v722
    %v725 = vsub.s32 4, %v701
    %v726 = vsel %vm641, %v725, %v701
    %v727 = vsel %vm640, %v169, %v724
    %v728 = vsel %vm640, 0, %v726
    %v729 = vcosq.f32.pop %v727
    %v730 = vsinq.f32.pop %v727
    %vm731 = vweird.f32 %v169
    %v732 = vand.u32 %v728, 3
    %vm733 = vcmp.lt.s32.totalorder %v732, 2
    %vm734 = vcmp.eq.s32.totalorder %v732, 0
    %v735 = vxor.u32 %v730, 2147483648
    %v736 = vsel %vm734, %v729, %v735
    %vm737 = vcmp.eq.s32.totalorder %v732, 2
    %v738 = vxor.u32 %v729, 2147483648
    %v739 = vsel %vm737, %v738, %v730
    %v740 = vsel %vm733, %v736, %v739
    %v741 = vsel %vm731, nan, %v740
    %v742 = vand.u32 2147483647, %v174
    %vm743 = vcmp.le.f32.partialorder %v742, 0.7853982
    %vm744 = vcmp.lt.s32.totalorder %v174, 0
    %v745 = vand.u32 %v174, 2139095040
    %v746 = vshrl.u32 %v745, 23
    %v747 = vsub.s32 %v746, 127
    %v748 = vand.u32 2147483647, %v174
    %v749 = vand.u32 %v748, 8388607
    %v750 = vor.u32 %v749, 8388608
    %v751 = vsub.s32 0, %v750
    %v752 = vadd.s32 %v747, 1
    %vm753 = vcmp.gt.s32.totalorder %v752, 0
    %v754 = vsel %vm753, %v752, 0
    %v755 = vshrl.u32 %v754, 5
    %v756 = vand.u32 %v754, 31
    %v757 = vsub.s32 32, %v756
    %v758 = vshrl.u32 683565275, %v757
    %v759 = vshll.u32 683565275, %v756
    %v760 = vshrl.u32 2475754826, %v757
    %v761 = vor.u32 %v759, %v760
    %v762 = vshll.u32 2475754826, %v756
    %v763 = vshrl.u32 2131351028, %v757
    %v764 = vor.u32 %v762, %v763
    %v765 = vshll.u32 2131351028, %v756
    %v766 = vshrl.u32 2102212464, %v757
    %v767 = vor.u32 %v765, %v766
    %v768 = vshll.u32 2102212464, %v756
    %v769 = vshrl.u32 920167782, %v757
    %v770 = vor.u32 %v768, %v769
    %v771 = vshll.u32 920167782, %v756
    %v772 = vshrl.u32 1326507024, %v757
    %v773 = vor.u32 %v771, %v772
    %vm774 = vcmp.lt.s32.totalorder %v755, 1
    %vm775 = vcmp.lt.s32.totalorder %v755, 2
    %vm776 = vcmp.lt.s32.totalorder %v755, 3
    %vm777 = vcmp.lt.s32.totalorder %v755, 4
    %v778 = vsel %vm774, %v758, %v761
    %v779 = vsel %vm777, %v767, 2102212464
    %v780 = vsel %vm776, %v764, %v779
    %v781 = vsel %vm775, %v778, %v780
    %v782 = vsel %vm774, %v761, %v764
    %v783 = vsel %vm777, %v770, 920167782
    %v784 = vsel %vm776, %v767, %v783
    %v785 = vsel %vm775, %v782, %v784
    %v786 = vsel %vm774, %v764, %v767
    %v787 = vsel %vm777, %v773, 1326507024
    %v788 = vsel %vm776, %v770, %v787
    %v789 = vsel %vm775, %v786, %v788
    %v790 = vshll.u32 %v750, 8
    %v791 = vmul.u32.u64.compose %v790, %v789
    %v792 = vextract.low.u32 %v791
    %v793 = vextract.high.u32 %v791
    %v794 = vmul.u32.u64.compose %v790, %v785
    %v795 = vextract.low.u32 %v794
    %v796 = vextract.high.u32 %v794
    %v797 = vmul.u32 %v790, %v781
    %v798 = vadd.s32 %v793, %v795
    %vm799 = vc.u32 %v793, %v795
    %v800 = vadd.s32 %v796, 1
    %v801 = vsel %vm799, %v800, %v796
    %v802 = vadd.s32 %v797, %v801
    %v803 = vadd.s32 %v802, 536870912
    %v804 = vshrl.u32 %v803, 30
    %v805 = vshll.u32 %v804, 30
    %v806 = vsub.s32 %v802, %v805
    %vm807 = vcmp.lt.s32.totalorder %v806, 0
    %v808 = vsub.s32 0, %v806
    %v809 = vsel %vm807, %v808, %v806
    %v810 = vclz %v809
    %v811 = vsub.s32 %v810, 2
    %vm812 = vcmp.gt.s32.totalorder 0, %v811
    %v813 = vsel %vm812, 0, %v811
    %v814 = vsub.s32 32, %v813
    %v815 = vshll.u32 %v806, %v813
    %v816 = vshrl.u32 %v798, %v814
    %v817 = vor.u32 %v815, %v816
    %v818 = vsub.s32 4294967266, %v813
    %v819 = vadd.s32 %v818, 127
    %v820 = vshll.u32 %v819, 23
    %v821 = vor.u32 4788187, %v820
    %v822 = vand.u32 2147483647, %v821
    %v824 = vcvt.s32.f32 %v817
    %v825 = vmul.f32 %v824, %v822
    %v826 = vxor.u32 %v825, 2147483648
    %v827 = vsel %vm744, %v826, %v825
    %v828 = vsub.s32 4, %v804
    %v829 = vsel %vm744, %v828, %v804
    %v830 = vsel %vm743, %v174, %v827
    %v831 = vsel %vm743, 0, %v829
    %v832 = vcosq.f32.pop %v830
    %v833 = vsinq.f32.pop %v830
    %vm834 = vweird.f32 %v174
    %v835 = vand.u32 %v831, 3
    %vm836 = vcmp.lt.s32.totalorder %v835, 2
    %vm837 = vcmp.eq.s32.totalorder %v835, 0
    %v838 = vxor.u32 %v833, 2147483648
    %v839 = vsel %vm837, %v832, %v838
    %vm840 = vcmp.eq.s32.totalorder %v835, 2
    %v841 = vxor.u32 %v832, 2147483648
    %v842 = vsel %vm840, %v841, %v833
    %v843 = vsel %vm836, %v839, %v842
    %v844 = vsel %vm834, nan, %v843
    %v845 = vand.u32 2147483647, %v179
    %vm846 = vcmp.le.f32.partialorder %v845, 0.7853982
    %vm847 = vcmp.lt.s32.totalorder %v179, 0
    %v848 = vand.u32 %v179, 2139095040
    %v849 = vshrl.u32 %v848, 23
    %v850 = vsub.s32 %v849, 127
    %v851 = vand.u32 2147483647, %v179
    %v852 = vand.u32 %v851, 8388607
    %v853 = vor.u32 %v852, 8388608
    %v854 = vsub.s32 0, %v853
    %v855 = vadd.s32 %v850, 1
    %vm856 = vcmp.gt.s32.totalorder %v855, 0
    %v857 = vsel %vm856, %v855, 0
    %v858 = vshrl.u32 %v857, 5
    %v859 = vand.u32 %v857, 31
    %v860 = vsub.s32 32, %v859
    %v861 = vshrl.u32 683565275, %v860
    %v862 = vshll.u32 683565275, %v859
    %v863 = vshrl.u32 2475754826, %v860
    %v864 = vor.u32 %v862, %v863
    %v865 = vshll.u32 2475754826, %v859
    %v866 = vshrl.u32 2131351028, %v860
    %v867 = vor.u32 %v865, %v866
    %v868 = vshll.u32 2131351028, %v859
    %v869 = vshrl.u32 2102212464, %v860
    %v870 = vor.u32 %v868, %v869
    %v871 = vshll.u32 2102212464, %v859
    %v872 = vshrl.u32 920167782, %v860
    %v873 = vor.u32 %v871, %v872
    %v874 = vshll.u32 920167782, %v859
    %v875 = vshrl.u32 1326507024, %v860
    %v876 = vor.u32 %v874, %v875
    %vm877 = vcmp.lt.s32.totalorder %v858, 1
    %vm878 = vcmp.lt.s32.totalorder %v858, 2
    %vm879 = vcmp.lt.s32.totalorder %v858, 3
    %vm880 = vcmp.lt.s32.totalorder %v858, 4
    %v881 = vsel %vm877, %v861, %v864
    %v882 = vsel %vm880, %v870, 2102212464
    %v883 = vsel %vm879, %v867, %v882
    %v884 = vsel %vm878, %v881, %v883
    %v885 = vsel %vm877, %v864, %v867
    %v886 = vsel %vm880, %v873, 920167782
    %v887 = vsel %vm879, %v870, %v886
    %v888 = vsel %vm878, %v885, %v887
    %v889 = vsel %vm877, %v867, %v870
    %v890 = vsel %vm880, %v876, 1326507024
    %v891 = vsel %vm879, %v873, %v890
    %v892 = vsel %vm878, %v889, %v891
    %v893 = vshll.u32 %v853, 8
    %v894 = vmul.u32.u64.compose %v893, %v892
    %v895 = vextract.low.u32 %v894
    %v896 = vextract.high.u32 %v894
    %v897 = vmul.u32.u64.compose %v893, %v888
    %v898 = vextract.low.u32 %v897
    %v899 = vextract.high.u32 %v897
    %v900 = vmul.u32 %v893, %v884
    %v901 = vadd.s32 %v896, %v898
    %vm902 = vc.u32 %v896, %v898
    %v903 = vadd.s32 %v899, 1
    %v904 = vsel %vm902, %v903, %v899
    %v905 = vadd.s32 %v900, %v904
    %v906 = vadd.s32 %v905, 536870912
    %v907 = vshrl.u32 %v906, 30
    %v908 = vshll.u32 %v907, 30
    %v909 = vsub.s32 %v905, %v908
    %vm910 = vcmp.lt.s32.totalorder %v909, 0
    %v911 = vsub.s32 0, %v909
    %v912 = vsel %vm910, %v911, %v909
    %v913 = vclz %v912
    %v914 = vsub.s32 %v913, 2
    %vm915 = vcmp.gt.s32.totalorder 0, %v914
    %v916 = vsel %vm915, 0, %v914
    %v917 = vsub.s32 32, %v916
    %v918 = vshll.u32 %v909, %v916
    %v919 = vshrl.u32 %v901, %v917
    %v920 = vor.u32 %v918, %v919
    %v921 = vsub.s32 4294967266, %v916
    %v922 = vadd.s32 %v921, 127
    %v923 = vshll.u32 %v922, 23
    %v924 = vor.u32 4788187, %v923
    %v925 = vand.u32 2147483647, %v924
    %v927 = vcvt.s32.f32 %v920
    %v928 = vmul.f32 %v927, %v925
    %v929 = vxor.u32 %v928, 2147483648
    %v930 = vsel %vm847, %v929, %v928
    %v931 = vsub.s32 4, %v907
    %v932 = vsel %vm847, %v931, %v907
    %v933 = vsel %vm846, %v179, %v930
    %v934 = vsel %vm846, 0, %v932
    %v935 = vcosq.f32.pop %v933
    %v936 = vsinq.f32.pop %v933
    %vm937 = vweird.f32 %v179
    %v938 = vand.u32 %v934, 3
    %vm939 = vcmp.lt.s32.totalorder %v938, 2
    %vm940 = vcmp.eq.s32.totalorder %v938, 0
    %v941 = vxor.u32 %v936, 2147483648
    %v942 = vsel %vm940, %v935, %v941
    %vm943 = vcmp.eq.s32.totalorder %v938, 2
    %v944 = vxor.u32 %v935, 2147483648
    %v945 = vsel %vm943, %v944, %v936
    %v946 = vsel %vm939, %v942, %v945
    %v947 = vsel %vm937, nan, %v946
    %v948 = vand.u32 2147483647, %v184
    %vm949 = vcmp.le.f32.partialorder %v948, 0.7853982
    %vm950 = vcmp.lt.s32.totalorder %v184, 0
    %v951 = vand.u32 %v184, 2139095040
    %v952 = vshrl.u32 %v951, 23
    %v953 = vsub.s32 %v952, 127
    %v954 = vand.u32 2147483647, %v184
    %v955 = vand.u32 %v954, 8388607
    %v956 = vor.u32 %v955, 8388608
    %v957 = vsub.s32 0, %v956
    %v958 = vadd.s32 %v953, 1
    %vm959 = vcmp.gt.s32.totalorder %v958, 0
    %v960 = vsel %vm959, %v958, 0
    %v961 = vshrl.u32 %v960, 5
    %v962 = vand.u32 %v960, 31
    %v963 = vsub.s32 32, %v962
    %v964 = vshrl.u32 683565275, %v963
    %v965 = vshll.u32 683565275, %v962
    %v966 = vshrl.u32 2475754826, %v963
    %v967 = vor.u32 %v965, %v966
    %v968 = vshll.u32 2475754826, %v962
    %v969 = vshrl.u32 2131351028, %v963
    %v970 = vor.u32 %v968, %v969
    %v971 = vshll.u32 2131351028, %v962
    %v972 = vshrl.u32 2102212464, %v963
    %v973 = vor.u32 %v971, %v972
    %v974 = vshll.u32 2102212464, %v962
    %v975 = vshrl.u32 920167782, %v963
    %v976 = vor.u32 %v974, %v975
    %v977 = vshll.u32 920167782, %v962
    %v978 = vshrl.u32 1326507024, %v963
    %v979 = vor.u32 %v977, %v978
    %vm980 = vcmp.lt.s32.totalorder %v961, 1
    %vm981 = vcmp.lt.s32.totalorder %v961, 2
    %vm982 = vcmp.lt.s32.totalorder %v961, 3
    %vm983 = vcmp.lt.s32.totalorder %v961, 4
    %v984 = vsel %vm980, %v964, %v967
    %v985 = vsel %vm983, %v973, 2102212464
    %v986 = vsel %vm982, %v970, %v985
    %v987 = vsel %vm981, %v984, %v986
    %v988 = vsel %vm980, %v967, %v970
    %v989 = vsel %vm983, %v976, 920167782
    %v990 = vsel %vm982, %v973, %v989
    %v991 = vsel %vm981, %v988, %v990
    %v992 = vsel %vm980, %v970, %v973
    %v993 = vsel %vm983, %v979, 1326507024
    %v994 = vsel %vm982, %v976, %v993
    %v995 = vsel %vm981, %v992, %v994
    %v996 = vshll.u32 %v956, 8
    %v997 = vmul.u32.u64.compose %v996, %v995
    %v998 = vextract.low.u32 %v997
    %v999 = vextract.high.u32 %v997
    %v1000 = vmul.u32.u64.compose %v996, %v991
    %v1001 = vextract.low.u32 %v1000
    %v1002 = vextract.high.u32 %v1000
    %v1003 = vmul.u32 %v996, %v987
    %v1004 = vadd.s32 %v999, %v1001
    %vm1005 = vc.u32 %v999, %v1001
    %v1006 = vadd.s32 %v1002, 1
    %v1007 = vsel %vm1005, %v1006, %v1002
    %v1008 = vadd.s32 %v1003, %v1007
    %v1009 = vadd.s32 %v1008, 536870912
    %v1010 = vshrl.u32 %v1009, 30
    %v1011 = vshll.u32 %v1010, 30
    %v1012 = vsub.s32 %v1008, %v1011
    %vm1013 = vcmp.lt.s32.totalorder %v1012, 0
    %v1014 = vsub.s32 0, %v1012
    %v1015 = vsel %vm1013, %v1014, %v1012
    %v1016 = vclz %v1015
    %v1017 = vsub.s32 %v1016, 2
    %vm1018 = vcmp.gt.s32.totalorder 0, %v1017
    %v1019 = vsel %vm1018, 0, %v1017
    %v1020 = vsub.s32 32, %v1019
    %v1021 = vshll.u32 %v1012, %v1019
    %v1022 = vshrl.u32 %v1004, %v1020
    %v1023 = vor.u32 %v1021, %v1022
    %v1024 = vsub.s32 4294967266, %v1019
    %v1025 = vadd.s32 %v1024, 127
    %v1026 = vshll.u32 %v1025, 23
    %v1027 = vor.u32 4788187, %v1026
    %v1028 = vand.u32 2147483647, %v1027
    %v1030 = vcvt.s32.f32 %v1023
    %v1031 = vmul.f32 %v1030, %v1028
    %v1032 = vxor.u32 %v1031, 2147483648
    %v1033 = vsel %vm950, %v1032, %v1031
    %v1034 = vsub.s32 4, %v1010
    %v1035 = vsel %vm950, %v1034, %v1010
    %v1036 = vsel %vm949, %v184, %v1033
    %v1037 = vsel %vm949, 0, %v1035
    %v1038 = vcosq.f32.pop %v1036
    %v1039 = vsinq.f32.pop %v1036
    %vm1040 = vweird.f32 %v184
    %v1041 = vand.u32 %v1037, 3
    %vm1042 = vcmp.lt.s32.totalorder %v1041, 2
    %vm1043 = vcmp.eq.s32.totalorder %v1041, 0
    %v1044 = vxor.u32 %v1039, 2147483648
    %v1045 = vsel %vm1043, %v1038, %v1044
    %vm1046 = vcmp.eq.s32.totalorder %v1041, 2
    %v1047 = vxor.u32 %v1038, 2147483648
    %v1048 = vsel %vm1046, %v1047, %v1039
    %v1049 = vsel %vm1042, %v1045, %v1048
    %v1050 = vsel %vm1040, nan, %v1049
    %v1051 = vand.u32 2147483647, %v189
    %vm1052 = vcmp.le.f32.partialorder %v1051, 0.7853982
    %vm1053 = vcmp.lt.s32.totalorder %v189, 0
    %v1054 = vand.u32 %v189, 2139095040
    %v1055 = vshrl.u32 %v1054, 23
    %v1056 = vsub.s32 %v1055, 127
    %v1057 = vand.u32 2147483647, %v189
    %v1058 = vand.u32 %v1057, 8388607
    %v1059 = vor.u32 %v1058, 8388608
    %v1060 = vsub.s32 0, %v1059
    %v1061 = vadd.s32 %v1056, 1
    %vm1062 = vcmp.gt.s32.totalorder %v1061, 0
    %v1063 = vsel %vm1062, %v1061, 0
    %v1064 = vshrl.u32 %v1063, 5
    %v1065 = vand.u32 %v1063, 31
    %v1066 = vsub.s32 32, %v1065
    %v1067 = vshrl.u32 683565275, %v1066
    %v1068 = vshll.u32 683565275, %v1065
    %v1069 = vshrl.u32 2475754826, %v1066
    %v1070 = vor.u32 %v1068, %v1069
    %v1071 = vshll.u32 2475754826, %v1065
    %v1072 = vshrl.u32 2131351028, %v1066
    %v1073 = vor.u32 %v1071, %v1072
    %v1074 = vshll.u32 2131351028, %v1065
    %v1075 = vshrl.u32 2102212464, %v1066
    %v1076 = vor.u32 %v1074, %v1075
    %v1077 = vshll.u32 2102212464, %v1065
    %v1078 = vshrl.u32 920167782, %v1066
    %v1079 = vor.u32 %v1077, %v1078
    %v1080 = vshll.u32 920167782, %v1065
    %v1081 = vshrl.u32 1326507024, %v1066
    %v1082 = vor.u32 %v1080, %v1081
    %vm1083 = vcmp.lt.s32.totalorder %v1064, 1
    %vm1084 = vcmp.lt.s32.totalorder %v1064, 2
    %vm1085 = vcmp.lt.s32.totalorder %v1064, 3
    %vm1086 = vcmp.lt.s32.totalorder %v1064, 4
    %v1087 = vsel %vm1083, %v1067, %v1070
    %v1088 = vsel %vm1086, %v1076, 2102212464
    %v1089 = vsel %vm1085, %v1073, %v1088
    %v1090 = vsel %vm1084, %v1087, %v1089
    %v1091 = vsel %vm1083, %v1070, %v1073
    %v1092 = vsel %vm1086, %v1079, 920167782
    %v1093 = vsel %vm1085, %v1076, %v1092
    %v1094 = vsel %vm1084, %v1091, %v1093
    %v1095 = vsel %vm1083, %v1073, %v1076
    %v1096 = vsel %vm1086, %v1082, 1326507024
    %v1097 = vsel %vm1085, %v1079, %v1096
    %v1098 = vsel %vm1084, %v1095, %v1097
    %v1099 = vshll.u32 %v1059, 8
    %v1100 = vmul.u32.u64.compose %v1099, %v1098
    %v1101 = vextract.low.u32 %v1100
    %v1102 = vextract.high.u32 %v1100
    %v1103 = vmul.u32.u64.compose %v1099, %v1094
    %v1104 = vextract.low.u32 %v1103
    %v1105 = vextract.high.u32 %v1103
    %v1106 = vmul.u32 %v1099, %v1090
    %v1107 = vadd.s32 %v1102, %v1104
    %vm1108 = vc.u32 %v1102, %v1104
    %v1109 = vadd.s32 %v1105, 1
    %v1110 = vsel %vm1108, %v1109, %v1105
    %v1111 = vadd.s32 %v1106, %v1110
    %v1112 = vadd.s32 %v1111, 536870912
    %v1113 = vshrl.u32 %v1112, 30
    %v1114 = vshll.u32 %v1113, 30
    %v1115 = vsub.s32 %v1111, %v1114
    %vm1116 = vcmp.lt.s32.totalorder %v1115, 0
    %v1117 = vsub.s32 0, %v1115
    %v1118 = vsel %vm1116, %v1117, %v1115
    %v1119 = vclz %v1118
    %v1120 = vsub.s32 %v1119, 2
    %vm1121 = vcmp.gt.s32.totalorder 0, %v1120
    %v1122 = vsel %vm1121, 0, %v1120
    %v1123 = vsub.s32 32, %v1122
    %v1124 = vshll.u32 %v1115, %v1122
    %v1125 = vshrl.u32 %v1107, %v1123
    %v1126 = vor.u32 %v1124, %v1125
    %v1127 = vsub.s32 4294967266, %v1122
    %v1128 = vadd.s32 %v1127, 127
    %v1129 = vshll.u32 %v1128, 23
    %v1130 = vor.u32 4788187, %v1129
    %v1131 = vand.u32 2147483647, %v1130
    %v1133 = vcvt.s32.f32 %v1126
    %v1134 = vmul.f32 %v1133, %v1131
    %v1135 = vxor.u32 %v1134, 2147483648
    %v1136 = vsel %vm1053, %v1135, %v1134
    %v1137 = vsub.s32 4, %v1113
    %v1138 = vsel %vm1053, %v1137, %v1113
    %v1139 = vsel %vm1052, %v189, %v1136
    %v1140 = vsel %vm1052, 0, %v1138
    %v1141 = vcosq.f32.pop %v1139
    %v1142 = vsinq.f32.pop %v1139
    %vm1143 = vweird.f32 %v189
    %v1144 = vand.u32 %v1140, 3
    %vm1145 = vcmp.lt.s32.totalorder %v1144, 2
    %vm1146 = vcmp.eq.s32.totalorder %v1144, 0
    %v1147 = vxor.u32 %v1142, 2147483648
    %v1148 = vsel %vm1146, %v1141, %v1147
    %vm1149 = vcmp.eq.s32.totalorder %v1144, 2
    %v1150 = vxor.u32 %v1141, 2147483648
    %v1151 = vsel %vm1149, %v1150, %v1142
    %v1152 = vsel %vm1145, %v1148, %v1151
    %v1153 = vsel %vm1143, nan, %v1152
    %v1154 = vand.u32 2147483647, %v194
    %vm1155 = vcmp.le.f32.partialorder %v1154, 0.7853982
    %vm1156 = vcmp.lt.s32.totalorder %v194, 0
    %v1157 = vand.u32 %v194, 2139095040
    %v1158 = vshrl.u32 %v1157, 23
    %v1159 = vsub.s32 %v1158, 127
    %v1160 = vand.u32 2147483647, %v194
    %v1161 = vand.u32 %v1160, 8388607
    %v1162 = vor.u32 %v1161, 8388608
    %v1163 = vsub.s32 0, %v1162
    %v1164 = vadd.s32 %v1159, 1
    %vm1165 = vcmp.gt.s32.totalorder %v1164, 0
    %v1166 = vsel %vm1165, %v1164, 0
    %v1167 = vshrl.u32 %v1166, 5
    %v1168 = vand.u32 %v1166, 31
    %v1169 = vsub.s32 32, %v1168
    %v1170 = vshrl.u32 683565275, %v1169
    %v1171 = vshll.u32 683565275, %v1168
    %v1172 = vshrl.u32 2475754826, %v1169
    %v1173 = vor.u32 %v1171, %v1172
    %v1174 = vshll.u32 2475754826, %v1168
    %v1175 = vshrl.u32 2131351028, %v1169
    %v1176 = vor.u32 %v1174, %v1175
    %v1177 = vshll.u32 2131351028, %v1168
    %v1178 = vshrl.u32 2102212464, %v1169
    %v1179 = vor.u32 %v1177, %v1178
    %v1180 = vshll.u32 2102212464, %v1168
    %v1181 = vshrl.u32 920167782, %v1169
    %v1182 = vor.u32 %v1180, %v1181
    %v1183 = vshll.u32 920167782, %v1168
    %v1184 = vshrl.u32 1326507024, %v1169
    %v1185 = vor.u32 %v1183, %v1184
    %vm1186 = vcmp.lt.s32.totalorder %v1167, 1
    %vm1187 = vcmp.lt.s32.totalorder %v1167, 2
    %vm1188 = vcmp.lt.s32.totalorder %v1167, 3
    %vm1189 = vcmp.lt.s32.totalorder %v1167, 4
    %v1190 = vsel %vm1186, %v1170, %v1173
    %v1191 = vsel %vm1189, %v1179, 2102212464
    %v1192 = vsel %vm1188, %v1176, %v1191
    %v1193 = vsel %vm1187, %v1190, %v1192
    %v1194 = vsel %vm1186, %v1173, %v1176
    %v1195 = vsel %vm1189, %v1182, 920167782
    %v1196 = vsel %vm1188, %v1179, %v1195
    %v1197 = vsel %vm1187, %v1194, %v1196
    %v1198 = vsel %vm1186, %v1176, %v1179
    %v1199 = vsel %vm1189, %v1185, 1326507024
    %v1200 = vsel %vm1188, %v1182, %v1199
    %v1201 = vsel %vm1187, %v1198, %v1200
    %v1202 = vshll.u32 %v1162, 8
    %v1203 = vmul.u32.u64.compose %v1202, %v1201
    %v1204 = vextract.low.u32 %v1203
    %v1205 = vextract.high.u32 %v1203
    %v1206 = vmul.u32.u64.compose %v1202, %v1197
    %v1207 = vextract.low.u32 %v1206
    %v1208 = vextract.high.u32 %v1206
    %v1209 = vmul.u32 %v1202, %v1193
    %v1210 = vadd.s32 %v1205, %v1207
    %vm1211 = vc.u32 %v1205, %v1207
    %v1212 = vadd.s32 %v1208, 1
    %v1213 = vsel %vm1211, %v1212, %v1208
    %v1214 = vadd.s32 %v1209, %v1213
    %v1215 = vadd.s32 %v1214, 536870912
    %v1216 = vshrl.u32 %v1215, 30
    %v1217 = vshll.u32 %v1216, 30
    %v1218 = vsub.s32 %v1214, %v1217
    %vm1219 = vcmp.lt.s32.totalorder %v1218, 0
    %v1220 = vsub.s32 0, %v1218
    %v1221 = vsel %vm1219, %v1220, %v1218
    %v1222 = vclz %v1221
    %v1223 = vsub.s32 %v1222, 2
    %vm1224 = vcmp.gt.s32.totalorder 0, %v1223
    %v1225 = vsel %vm1224, 0, %v1223
    %v1226 = vsub.s32 32, %v1225
    %v1227 = vshll.u32 %v1218, %v1225
    %v1228 = vshrl.u32 %v1210, %v1226
    %v1229 = vor.u32 %v1227, %v1228
    %v1230 = vsub.s32 4294967266, %v1225
    %v1231 = vadd.s32 %v1230, 127
    %v1232 = vshll.u32 %v1231, 23
    %v1233 = vor.u32 4788187, %v1232
    %v1234 = vand.u32 2147483647, %v1233
    %v1236 = vcvt.s32.f32 %v1229
    %v1237 = vmul.f32 %v1236, %v1234
    %v1238 = vxor.u32 %v1237, 2147483648
    %v1239 = vsel %vm1156, %v1238, %v1237
    %v1240 = vsub.s32 4, %v1216
    %v1241 = vsel %vm1156, %v1240, %v1216
    %v1242 = vsel %vm1155, %v194, %v1239
    %v1243 = vsel %vm1155, 0, %v1241
    %v1244 = vcosq.f32.pop %v1242
    %v1245 = vsinq.f32.pop %v1242
    %vm1246 = vweird.f32 %v194
    %v1247 = vand.u32 %v1243, 3
    %vm1248 = vcmp.lt.s32.totalorder %v1247, 2
    %vm1249 = vcmp.eq.s32.totalorder %v1247, 0
    %v1250 = vxor.u32 %v1245, 2147483648
    %v1251 = vsel %vm1249, %v1244, %v1250
    %vm1252 = vcmp.eq.s32.totalorder %v1247, 2
    %v1253 = vxor.u32 %v1244, 2147483648
    %v1254 = vsel %vm1252, %v1253, %v1245
    %v1255 = vsel %vm1248, %v1251, %v1254
    %v1256 = vsel %vm1246, nan, %v1255
    %v1257 = vand.u32 2147483647, %v199
    %vm1258 = vcmp.le.f32.partialorder %v1257, 0.7853982
    %vm1259 = vcmp.lt.s32.totalorder %v199, 0
    %v1260 = vand.u32 %v199, 2139095040
    %v1261 = vshrl.u32 %v1260, 23
    %v1262 = vsub.s32 %v1261, 127
    %v1263 = vand.u32 2147483647, %v199
    %v1264 = vand.u32 %v1263, 8388607
    %v1265 = vor.u32 %v1264, 8388608
    %v1266 = vsub.s32 0, %v1265
    %v1267 = vadd.s32 %v1262, 1
    %vm1268 = vcmp.gt.s32.totalorder %v1267, 0
    %v1269 = vsel %vm1268, %v1267, 0
    %v1270 = vshrl.u32 %v1269, 5
    %v1271 = vand.u32 %v1269, 31
    %v1272 = vsub.s32 32, %v1271
    %v1273 = vshrl.u32 683565275, %v1272
    %v1274 = vshll.u32 683565275, %v1271
    %v1275 = vshrl.u32 2475754826, %v1272
    %v1276 = vor.u32 %v1274, %v1275
    %v1277 = vshll.u32 2475754826, %v1271
    %v1278 = vshrl.u32 2131351028, %v1272
    %v1279 = vor.u32 %v1277, %v1278
    %v1280 = vshll.u32 2131351028, %v1271
    %v1281 = vshrl.u32 2102212464, %v1272
    %v1282 = vor.u32 %v1280, %v1281
    %v1283 = vshll.u32 2102212464, %v1271
    %v1284 = vshrl.u32 920167782, %v1272
    %v1285 = vor.u32 %v1283, %v1284
    %v1286 = vshll.u32 920167782, %v1271
    %v1287 = vshrl.u32 1326507024, %v1272
    %v1288 = vor.u32 %v1286, %v1287
    %vm1289 = vcmp.lt.s32.totalorder %v1270, 1
    %vm1290 = vcmp.lt.s32.totalorder %v1270, 2
    %vm1291 = vcmp.lt.s32.totalorder %v1270, 3
    %vm1292 = vcmp.lt.s32.totalorder %v1270, 4
    %v1293 = vsel %vm1289, %v1273, %v1276
    %v1294 = vsel %vm1292, %v1282, 2102212464
    %v1295 = vsel %vm1291, %v1279, %v1294
    %v1296 = vsel %vm1290, %v1293, %v1295
    %v1297 = vsel %vm1289, %v1276, %v1279
    %v1298 = vsel %vm1292, %v1285, 920167782
    %v1299 = vsel %vm1291, %v1282, %v1298
    %v1300 = vsel %vm1290, %v1297, %v1299
    %v1301 = vsel %vm1289, %v1279, %v1282
    %v1302 = vsel %vm1292, %v1288, 1326507024
    %v1303 = vsel %vm1291, %v1285, %v1302
    %v1304 = vsel %vm1290, %v1301, %v1303
    %v1305 = vshll.u32 %v1265, 8
    %v1306 = vmul.u32.u64.compose %v1305, %v1304
    %v1307 = vextract.low.u32 %v1306
    %v1308 = vextract.high.u32 %v1306
    %v1309 = vmul.u32.u64.compose %v1305, %v1300
    %v1310 = vextract.low.u32 %v1309
    %v1311 = vextract.high.u32 %v1309
    %v1312 = vmul.u32 %v1305, %v1296
    %v1313 = vadd.s32 %v1308, %v1310
    %vm1314 = vc.u32 %v1308, %v1310
    %v1315 = vadd.s32 %v1311, 1
    %v1316 = vsel %vm1314, %v1315, %v1311
    %v1317 = vadd.s32 %v1312, %v1316
    %v1318 = vadd.s32 %v1317, 536870912
    %v1319 = vshrl.u32 %v1318, 30
    %v1320 = vshll.u32 %v1319, 30
    %v1321 = vsub.s32 %v1317, %v1320
    %vm1322 = vcmp.lt.s32.totalorder %v1321, 0
    %v1323 = vsub.s32 0, %v1321
    %v1324 = vsel %vm1322, %v1323, %v1321
    %v1325 = vclz %v1324
    %v1326 = vsub.s32 %v1325, 2
    %vm1327 = vcmp.gt.s32.totalorder 0, %v1326
    %v1328 = vsel %vm1327, 0, %v1326
    %v1329 = vsub.s32 32, %v1328
    %v1330 = vshll.u32 %v1321, %v1328
    %v1331 = vshrl.u32 %v1313, %v1329
    %v1332 = vor.u32 %v1330, %v1331
    %v1333 = vsub.s32 4294967266, %v1328
    %v1334 = vadd.s32 %v1333, 127
    %v1335 = vshll.u32 %v1334, 23
    %v1336 = vor.u32 4788187, %v1335
    %v1337 = vand.u32 2147483647, %v1336
    %v1339 = vcvt.s32.f32 %v1332
    %v1340 = vmul.f32 %v1339, %v1337
    %v1341 = vxor.u32 %v1340, 2147483648
    %v1342 = vsel %vm1259, %v1341, %v1340
    %v1343 = vsub.s32 4, %v1319
    %v1344 = vsel %vm1259, %v1343, %v1319
    %v1345 = vsel %vm1258, %v199, %v1342
    %v1346 = vsel %vm1258, 0, %v1344
    %v1347 = vcosq.f32.pop %v1345
    %v1348 = vsinq.f32.pop %v1345
    %vm1349 = vweird.f32 %v199
    %v1350 = vand.u32 %v1346, 3
    %vm1351 = vcmp.lt.s32.totalorder %v1350, 2
    %vm1352 = vcmp.eq.s32.totalorder %v1350, 0
    %v1353 = vxor.u32 %v1348, 2147483648
    %v1354 = vsel %vm1352, %v1347, %v1353
    %vm1355 = vcmp.eq.s32.totalorder %v1350, 2
    %v1356 = vxor.u32 %v1347, 2147483648
    %v1357 = vsel %vm1355, %v1356, %v1348
    %v1358 = vsel %vm1351, %v1354, %v1357
    %v1359 = vsel %vm1349, nan, %v1358
    %v1360 = vand.u32 2147483647, %v204
    %vm1361 = vcmp.le.f32.partialorder %v1360, 0.7853982
    %vm1362 = vcmp.lt.s32.totalorder %v204, 0
    %v1363 = vand.u32 %v204, 2139095040
    %v1364 = vshrl.u32 %v1363, 23
    %v1365 = vsub.s32 %v1364, 127
    %v1366 = vand.u32 2147483647, %v204
    %v1367 = vand.u32 %v1366, 8388607
    %v1368 = vor.u32 %v1367, 8388608
    %v1369 = vsub.s32 0, %v1368
    %v1370 = vadd.s32 %v1365, 1
    %vm1371 = vcmp.gt.s32.totalorder %v1370, 0
    %v1372 = vsel %vm1371, %v1370, 0
    %v1373 = vshrl.u32 %v1372, 5
    %v1374 = vand.u32 %v1372, 31
    %v1375 = vsub.s32 32, %v1374
    %v1376 = vshrl.u32 683565275, %v1375
    %v1377 = vshll.u32 683565275, %v1374
    %v1378 = vshrl.u32 2475754826, %v1375
    %v1379 = vor.u32 %v1377, %v1378
    %v1380 = vshll.u32 2475754826, %v1374
    %v1381 = vshrl.u32 2131351028, %v1375
    %v1382 = vor.u32 %v1380, %v1381
    %v1383 = vshll.u32 2131351028, %v1374
    %v1384 = vshrl.u32 2102212464, %v1375
    %v1385 = vor.u32 %v1383, %v1384
    %v1386 = vshll.u32 2102212464, %v1374
    %v1387 = vshrl.u32 920167782, %v1375
    %v1388 = vor.u32 %v1386, %v1387
    %v1389 = vshll.u32 920167782, %v1374
    %v1390 = vshrl.u32 1326507024, %v1375
    %v1391 = vor.u32 %v1389, %v1390
    %vm1392 = vcmp.lt.s32.totalorder %v1373, 1
    %vm1393 = vcmp.lt.s32.totalorder %v1373, 2
    %vm1394 = vcmp.lt.s32.totalorder %v1373, 3
    %vm1395 = vcmp.lt.s32.totalorder %v1373, 4
    %v1396 = vsel %vm1392, %v1376, %v1379
    %v1397 = vsel %vm1395, %v1385, 2102212464
    %v1398 = vsel %vm1394, %v1382, %v1397
    %v1399 = vsel %vm1393, %v1396, %v1398
    %v1400 = vsel %vm1392, %v1379, %v1382
    %v1401 = vsel %vm1395, %v1388, 920167782
    %v1402 = vsel %vm1394, %v1385, %v1401
    %v1403 = vsel %vm1393, %v1400, %v1402
    %v1404 = vsel %vm1392, %v1382, %v1385
    %v1405 = vsel %vm1395, %v1391, 1326507024
    %v1406 = vsel %vm1394, %v1388, %v1405
    %v1407 = vsel %vm1393, %v1404, %v1406
    %v1408 = vshll.u32 %v1368, 8
    %v1409 = vmul.u32.u64.compose %v1408, %v1407
    %v1410 = vextract.low.u32 %v1409
    %v1411 = vextract.high.u32 %v1409
    %v1412 = vmul.u32.u64.compose %v1408, %v1403
    %v1413 = vextract.low.u32 %v1412
    %v1414 = vextract.high.u32 %v1412
    %v1415 = vmul.u32 %v1408, %v1399
    %v1416 = vadd.s32 %v1411, %v1413
    %vm1417 = vc.u32 %v1411, %v1413
    %v1418 = vadd.s32 %v1414, 1
    %v1419 = vsel %vm1417, %v1418, %v1414
    %v1420 = vadd.s32 %v1415, %v1419
    %v1421 = vadd.s32 %v1420, 536870912
    %v1422 = vshrl.u32 %v1421, 30
    %v1423 = vshll.u32 %v1422, 30
    %v1424 = vsub.s32 %v1420, %v1423
    %vm1425 = vcmp.lt.s32.totalorder %v1424, 0
    %v1426 = vsub.s32 0, %v1424
    %v1427 = vsel %vm1425, %v1426, %v1424
    %v1428 = vclz %v1427
    %v1429 = vsub.s32 %v1428, 2
    %vm1430 = vcmp.gt.s32.totalorder 0, %v1429
    %v1431 = vsel %vm1430, 0, %v1429
    %v1432 = vsub.s32 32, %v1431
    %v1433 = vshll.u32 %v1424, %v1431
    %v1434 = vshrl.u32 %v1416, %v1432
    %v1435 = vor.u32 %v1433, %v1434
    %v1436 = vsub.s32 4294967266, %v1431
    %v1437 = vadd.s32 %v1436, 127
    %v1438 = vshll.u32 %v1437, 23
    %v1439 = vor.u32 4788187, %v1438
    %v1440 = vand.u32 2147483647, %v1439
    %v1442 = vcvt.s32.f32 %v1435
    %v1443 = vmul.f32 %v1442, %v1440
    %v1444 = vxor.u32 %v1443, 2147483648
    %v1445 = vsel %vm1362, %v1444, %v1443
    %v1446 = vsub.s32 4, %v1422
    %v1447 = vsel %vm1362, %v1446, %v1422
    %v1448 = vsel %vm1361, %v204, %v1445
    %v1449 = vsel %vm1361, 0, %v1447
    %v1450 = vcosq.f32.pop %v1448
    %v1451 = vsinq.f32.pop %v1448
    %vm1452 = vweird.f32 %v204
    %v1453 = vand.u32 %v1449, 3
    %vm1454 = vcmp.lt.s32.totalorder %v1453, 2
    %vm1455 = vcmp.eq.s32.totalorder %v1453, 0
    %v1456 = vxor.u32 %v1451, 2147483648
    %v1457 = vsel %vm1455, %v1450, %v1456
    %vm1458 = vcmp.eq.s32.totalorder %v1453, 2
    %v1459 = vxor.u32 %v1450, 2147483648
    %v1460 = vsel %vm1458, %v1459, %v1451
    %v1461 = vsel %vm1454, %v1457, %v1460
    %v1462 = vsel %vm1452, nan, %v1461
    %v1463 = vand.u32 2147483647, %v209
    %vm1464 = vcmp.le.f32.partialorder %v1463, 0.7853982
    %vm1465 = vcmp.lt.s32.totalorder %v209, 0
    %v1466 = vand.u32 %v209, 2139095040
    %v1467 = vshrl.u32 %v1466, 23
    %v1468 = vsub.s32 %v1467, 127
    %v1469 = vand.u32 2147483647, %v209
    %v1470 = vand.u32 %v1469, 8388607
    %v1471 = vor.u32 %v1470, 8388608
    %v1472 = vsub.s32 0, %v1471
    %v1473 = vadd.s32 %v1468, 1
    %vm1474 = vcmp.gt.s32.totalorder %v1473, 0
    %v1475 = vsel %vm1474, %v1473, 0
    %v1476 = vshrl.u32 %v1475, 5
    %v1477 = vand.u32 %v1475, 31
    %v1478 = vsub.s32 32, %v1477
    %v1479 = vshrl.u32 683565275, %v1478
    %v1480 = vshll.u32 683565275, %v1477
    %v1481 = vshrl.u32 2475754826, %v1478
    %v1482 = vor.u32 %v1480, %v1481
    %v1483 = vshll.u32 2475754826, %v1477
    %v1484 = vshrl.u32 2131351028, %v1478
    %v1485 = vor.u32 %v1483, %v1484
    %v1486 = vshll.u32 2131351028, %v1477
    %v1487 = vshrl.u32 2102212464, %v1478
    %v1488 = vor.u32 %v1486, %v1487
    %v1489 = vshll.u32 2102212464, %v1477
    %v1490 = vshrl.u32 920167782, %v1478
    %v1491 = vor.u32 %v1489, %v1490
    %v1492 = vshll.u32 920167782, %v1477
    %v1493 = vshrl.u32 1326507024, %v1478
    %v1494 = vor.u32 %v1492, %v1493
    %vm1495 = vcmp.lt.s32.totalorder %v1476, 1
    %vm1496 = vcmp.lt.s32.totalorder %v1476, 2
    %vm1497 = vcmp.lt.s32.totalorder %v1476, 3
    %vm1498 = vcmp.lt.s32.totalorder %v1476, 4
    %v1499 = vsel %vm1495, %v1479, %v1482
    %v1500 = vsel %vm1498, %v1488, 2102212464
    %v1501 = vsel %vm1497, %v1485, %v1500
    %v1502 = vsel %vm1496, %v1499, %v1501
    %v1503 = vsel %vm1495, %v1482, %v1485
    %v1504 = vsel %vm1498, %v1491, 920167782
    %v1505 = vsel %vm1497, %v1488, %v1504
    %v1506 = vsel %vm1496, %v1503, %v1505
    %v1507 = vsel %vm1495, %v1485, %v1488
    %v1508 = vsel %vm1498, %v1494, 1326507024
    %v1509 = vsel %vm1497, %v1491, %v1508
    %v1510 = vsel %vm1496, %v1507, %v1509
    %v1511 = vshll.u32 %v1471, 8
    %v1512 = vmul.u32.u64.compose %v1511, %v1510
    %v1513 = vextract.low.u32 %v1512
    %v1514 = vextract.high.u32 %v1512
    %v1515 = vmul.u32.u64.compose %v1511, %v1506
    %v1516 = vextract.low.u32 %v1515
    %v1517 = vextract.high.u32 %v1515
    %v1518 = vmul.u32 %v1511, %v1502
    %v1519 = vadd.s32 %v1514, %v1516
    %vm1520 = vc.u32 %v1514, %v1516
    %v1521 = vadd.s32 %v1517, 1
    %v1522 = vsel %vm1520, %v1521, %v1517
    %v1523 = vadd.s32 %v1518, %v1522
    %v1524 = vadd.s32 %v1523, 536870912
    %v1525 = vshrl.u32 %v1524, 30
    %v1526 = vshll.u32 %v1525, 30
    %v1527 = vsub.s32 %v1523, %v1526
    %vm1528 = vcmp.lt.s32.totalorder %v1527, 0
    %v1529 = vsub.s32 0, %v1527
    %v1530 = vsel %vm1528, %v1529, %v1527
    %v1531 = vclz %v1530
    %v1532 = vsub.s32 %v1531, 2
    %vm1533 = vcmp.gt.s32.totalorder 0, %v1532
    %v1534 = vsel %vm1533, 0, %v1532
    %v1535 = vsub.s32 32, %v1534
    %v1536 = vshll.u32 %v1527, %v1534
    %v1537 = vshrl.u32 %v1519, %v1535
    %v1538 = vor.u32 %v1536, %v1537
    %v1539 = vsub.s32 4294967266, %v1534
    %v1540 = vadd.s32 %v1539, 127
    %v1541 = vshll.u32 %v1540, 23
    %v1542 = vor.u32 4788187, %v1541
    %v1543 = vand.u32 2147483647, %v1542
    %v1545 = vcvt.s32.f32 %v1538
    %v1546 = vmul.f32 %v1545, %v1543
    %v1547 = vxor.u32 %v1546, 2147483648
    %v1548 = vsel %vm1465, %v1547, %v1546
    %v1549 = vsub.s32 4, %v1525
    %v1550 = vsel %vm1465, %v1549, %v1525
    %v1551 = vsel %vm1464, %v209, %v1548
    %v1552 = vsel %vm1464, 0, %v1550
    %v1553 = vcosq.f32.pop %v1551
    %v1554 = vsinq.f32.pop %v1551
    %vm1555 = vweird.f32 %v209
    %v1556 = vand.u32 %v1552, 3
    %vm1557 = vcmp.lt.s32.totalorder %v1556, 2
    %vm1558 = vcmp.eq.s32.totalorder %v1556, 0
    %v1559 = vxor.u32 %v1554, 2147483648
    %v1560 = vsel %vm1558, %v1553, %v1559
    %vm1561 = vcmp.eq.s32.totalorder %v1556, 2
    %v1562 = vxor.u32 %v1553, 2147483648
    %v1563 = vsel %vm1561, %v1562, %v1554
    %v1564 = vsel %vm1557, %v1560, %v1563
    %v1565 = vsel %vm1555, nan, %v1564
    %v1566 = vand.u32 2147483647, %v214
    %vm1567 = vcmp.le.f32.partialorder %v1566, 0.7853982
    %vm1568 = vcmp.lt.s32.totalorder %v214, 0
    %v1569 = vand.u32 %v214, 2139095040
    %v1570 = vshrl.u32 %v1569, 23
    %v1571 = vsub.s32 %v1570, 127
    %v1572 = vand.u32 2147483647, %v214
    %v1573 = vand.u32 %v1572, 8388607
    %v1574 = vor.u32 %v1573, 8388608
    %v1575 = vsub.s32 0, %v1574
    %v1576 = vadd.s32 %v1571, 1
    %vm1577 = vcmp.gt.s32.totalorder %v1576, 0
    %v1578 = vsel %vm1577, %v1576, 0
    %v1579 = vshrl.u32 %v1578, 5
    %v1580 = vand.u32 %v1578, 31
    %v1581 = vsub.s32 32, %v1580
    %v1582 = vshrl.u32 683565275, %v1581
    %v1583 = vshll.u32 683565275, %v1580
    %v1584 = vshrl.u32 2475754826, %v1581
    %v1585 = vor.u32 %v1583, %v1584
    %v1586 = vshll.u32 2475754826, %v1580
    %v1587 = vshrl.u32 2131351028, %v1581
    %v1588 = vor.u32 %v1586, %v1587
    %v1589 = vshll.u32 2131351028, %v1580
    %v1590 = vshrl.u32 2102212464, %v1581
    %v1591 = vor.u32 %v1589, %v1590
    %v1592 = vshll.u32 2102212464, %v1580
    %v1593 = vshrl.u32 920167782, %v1581
    %v1594 = vor.u32 %v1592, %v1593
    %v1595 = vshll.u32 920167782, %v1580
    %v1596 = vshrl.u32 1326507024, %v1581
    %v1597 = vor.u32 %v1595, %v1596
    %vm1598 = vcmp.lt.s32.totalorder %v1579, 1
    %vm1599 = vcmp.lt.s32.totalorder %v1579, 2
    %vm1600 = vcmp.lt.s32.totalorder %v1579, 3
    %vm1601 = vcmp.lt.s32.totalorder %v1579, 4
    %v1602 = vsel %vm1598, %v1582, %v1585
    %v1603 = vsel %vm1601, %v1591, 2102212464
    %v1604 = vsel %vm1600, %v1588, %v1603
    %v1605 = vsel %vm1599, %v1602, %v1604
    %v1606 = vsel %vm1598, %v1585, %v1588
    %v1607 = vsel %vm1601, %v1594, 920167782
    %v1608 = vsel %vm1600, %v1591, %v1607
    %v1609 = vsel %vm1599, %v1606, %v1608
    %v1610 = vsel %vm1598, %v1588, %v1591
    %v1611 = vsel %vm1601, %v1597, 1326507024
    %v1612 = vsel %vm1600, %v1594, %v1611
    %v1613 = vsel %vm1599, %v1610, %v1612
    %v1614 = vshll.u32 %v1574, 8
    %v1615 = vmul.u32.u64.compose %v1614, %v1613
    %v1616 = vextract.low.u32 %v1615
    %v1617 = vextract.high.u32 %v1615
    %v1618 = vmul.u32.u64.compose %v1614, %v1609
    %v1619 = vextract.low.u32 %v1618
    %v1620 = vextract.high.u32 %v1618
    %v1621 = vmul.u32 %v1614, %v1605
    %v1622 = vadd.s32 %v1617, %v1619
    %vm1623 = vc.u32 %v1617, %v1619
    %v1624 = vadd.s32 %v1620, 1
    %v1625 = vsel %vm1623, %v1624, %v1620
    %v1626 = vadd.s32 %v1621, %v1625
    %v1627 = vadd.s32 %v1626, 536870912
    %v1628 = vshrl.u32 %v1627, 30
    %v1629 = vshll.u32 %v1628, 30
    %v1630 = vsub.s32 %v1626, %v1629
    %vm1631 = vcmp.lt.s32.totalorder %v1630, 0
    %v1632 = vsub.s32 0, %v1630
    %v1633 = vsel %vm1631, %v1632, %v1630
    %v1634 = vclz %v1633
    %v1635 = vsub.s32 %v1634, 2
    %vm1636 = vcmp.gt.s32.totalorder 0, %v1635
    %v1637 = vsel %vm1636, 0, %v1635
    %v1638 = vsub.s32 32, %v1637
    %v1639 = vshll.u32 %v1630, %v1637
    %v1640 = vshrl.u32 %v1622, %v1638
    %v1641 = vor.u32 %v1639, %v1640
    %v1642 = vsub.s32 4294967266, %v1637
    %v1643 = vadd.s32 %v1642, 127
    %v1644 = vshll.u32 %v1643, 23
    %v1645 = vor.u32 4788187, %v1644
    %v1646 = vand.u32 2147483647, %v1645
    %v1648 = vcvt.s32.f32 %v1641
    %v1649 = vmul.f32 %v1648, %v1646
    %v1650 = vxor.u32 %v1649, 2147483648
    %v1651 = vsel %vm1568, %v1650, %v1649
    %v1652 = vsub.s32 4, %v1628
    %v1653 = vsel %vm1568, %v1652, %v1628
    %v1654 = vsel %vm1567, %v214, %v1651
    %v1655 = vsel %vm1567, 0, %v1653
    %v1656 = vcosq.f32.pop %v1654
    %v1657 = vsinq.f32.pop %v1654
    %vm1658 = vweird.f32 %v214
    %v1659 = vand.u32 %v1655, 3
    %vm1660 = vcmp.lt.s32.totalorder %v1659, 2
    %vm1661 = vcmp.eq.s32.totalorder %v1659, 0
    %v1662 = vxor.u32 %v1657, 2147483648
    %v1663 = vsel %vm1661, %v1656, %v1662
    %vm1664 = vcmp.eq.s32.totalorder %v1659, 2
    %v1665 = vxor.u32 %v1656, 2147483648
    %v1666 = vsel %vm1664, %v1665, %v1657
    %v1667 = vsel %vm1660, %v1663, %v1666
    %v1668 = vsel %vm1658, nan, %v1667
    %v1669 = vand.u32 2147483647, %v219
    %vm1670 = vcmp.le.f32.partialorder %v1669, 0.7853982
    %vm1671 = vcmp.lt.s32.totalorder %v219, 0
    %v1672 = vand.u32 %v219, 2139095040
    %v1673 = vshrl.u32 %v1672, 23
    %v1674 = vsub.s32 %v1673, 127
    %v1675 = vand.u32 2147483647, %v219
    %v1676 = vand.u32 %v1675, 8388607
    %v1677 = vor.u32 %v1676, 8388608
    %v1678 = vsub.s32 0, %v1677
    %v1679 = vadd.s32 %v1674, 1
    %vm1680 = vcmp.gt.s32.totalorder %v1679, 0
    %v1681 = vsel %vm1680, %v1679, 0
    %v1682 = vshrl.u32 %v1681, 5
    %v1683 = vand.u32 %v1681, 31
    %v1684 = vsub.s32 32, %v1683
    %v1685 = vshrl.u32 683565275, %v1684
    %v1686 = vshll.u32 683565275, %v1683
    %v1687 = vshrl.u32 2475754826, %v1684
    %v1688 = vor.u32 %v1686, %v1687
    %v1689 = vshll.u32 2475754826, %v1683
    %v1690 = vshrl.u32 2131351028, %v1684
    %v1691 = vor.u32 %v1689, %v1690
    %v1692 = vshll.u32 2131351028, %v1683
    %v1693 = vshrl.u32 2102212464, %v1684
    %v1694 = vor.u32 %v1692, %v1693
    %v1695 = vshll.u32 2102212464, %v1683
    %v1696 = vshrl.u32 920167782, %v1684
    %v1697 = vor.u32 %v1695, %v1696
    %v1698 = vshll.u32 920167782, %v1683
    %v1699 = vshrl.u32 1326507024, %v1684
    %v1700 = vor.u32 %v1698, %v1699
    %vm1701 = vcmp.lt.s32.totalorder %v1682, 1
    %vm1702 = vcmp.lt.s32.totalorder %v1682, 2
    %vm1703 = vcmp.lt.s32.totalorder %v1682, 3
    %vm1704 = vcmp.lt.s32.totalorder %v1682, 4
    %v1705 = vsel %vm1701, %v1685, %v1688
    %v1706 = vsel %vm1704, %v1694, 2102212464
    %v1707 = vsel %vm1703, %v1691, %v1706
    %v1708 = vsel %vm1702, %v1705, %v1707
    %v1709 = vsel %vm1701, %v1688, %v1691
    %v1710 = vsel %vm1704, %v1697, 920167782
    %v1711 = vsel %vm1703, %v1694, %v1710
    %v1712 = vsel %vm1702, %v1709, %v1711
    %v1713 = vsel %vm1701, %v1691, %v1694
    %v1714 = vsel %vm1704, %v1700, 1326507024
    %v1715 = vsel %vm1703, %v1697, %v1714
    %v1716 = vsel %vm1702, %v1713, %v1715
    %v1717 = vshll.u32 %v1677, 8
    %v1718 = vmul.u32.u64.compose %v1717, %v1716
    %v1719 = vextract.low.u32 %v1718
    %v1720 = vextract.high.u32 %v1718
    %v1721 = vmul.u32.u64.compose %v1717, %v1712
    %v1722 = vextract.low.u32 %v1721
    %v1723 = vextract.high.u32 %v1721
    %v1724 = vmul.u32 %v1717, %v1708
    %v1725 = vadd.s32 %v1720, %v1722
    %vm1726 = vc.u32 %v1720, %v1722
    %v1727 = vadd.s32 %v1723, 1
    %v1728 = vsel %vm1726, %v1727, %v1723
    %v1729 = vadd.s32 %v1724, %v1728
    %v1730 = vadd.s32 %v1729, 536870912
    %v1731 = vshrl.u32 %v1730, 30
    %v1732 = vshll.u32 %v1731, 30
    %v1733 = vsub.s32 %v1729, %v1732
    %vm1734 = vcmp.lt.s32.totalorder %v1733, 0
    %v1735 = vsub.s32 0, %v1733
    %v1736 = vsel %vm1734, %v1735, %v1733
    %v1737 = vclz %v1736
    %v1738 = vsub.s32 %v1737, 2
    %vm1739 = vcmp.gt.s32.totalorder 0, %v1738
    %v1740 = vsel %vm1739, 0, %v1738
    %v1741 = vsub.s32 32, %v1740
    %v1742 = vshll.u32 %v1733, %v1740
    %v1743 = vshrl.u32 %v1725, %v1741
    %v1744 = vor.u32 %v1742, %v1743
    %v1745 = vsub.s32 4294967266, %v1740
    %v1746 = vadd.s32 %v1745, 127
    %v1747 = vshll.u32 %v1746, 23
    %v1748 = vor.u32 4788187, %v1747
    %v1749 = vand.u32 2147483647, %v1748
    %v1751 = vcvt.s32.f32 %v1744
    %v1752 = vmul.f32 %v1751, %v1749
    %v1753 = vxor.u32 %v1752, 2147483648
    %v1754 = vsel %vm1671, %v1753, %v1752
    %v1755 = vsub.s32 4, %v1731
    %v1756 = vsel %vm1671, %v1755, %v1731
    %v1757 = vsel %vm1670, %v219, %v1754
    %v1758 = vsel %vm1670, 0, %v1756
    %v1759 = vcosq.f32.pop %v1757
    %v1760 = vsinq.f32.pop %v1757
    %vm1761 = vweird.f32 %v219
    %v1762 = vand.u32 %v1758, 3
    %vm1763 = vcmp.lt.s32.totalorder %v1762, 2
    %vm1764 = vcmp.eq.s32.totalorder %v1762, 0
    %v1765 = vxor.u32 %v1760, 2147483648
    %v1766 = vsel %vm1764, %v1759, %v1765
    %vm1767 = vcmp.eq.s32.totalorder %v1762, 2
    %v1768 = vxor.u32 %v1759, 2147483648
    %v1769 = vsel %vm1767, %v1768, %v1760
    %v1770 = vsel %vm1763, %v1766, %v1769
    %v1771 = vsel %vm1761, nan, %v1770
    %v1772 = vand.u32 2147483647, %v224
    %vm1773 = vcmp.le.f32.partialorder %v1772, 0.7853982
    %vm1774 = vcmp.lt.s32.totalorder %v224, 0
    %v1775 = vand.u32 %v224, 2139095040
    %v1776 = vshrl.u32 %v1775, 23
    %v1777 = vsub.s32 %v1776, 127
    %v1778 = vand.u32 2147483647, %v224
    %v1779 = vand.u32 %v1778, 8388607
    %v1780 = vor.u32 %v1779, 8388608
    %v1781 = vsub.s32 0, %v1780
    %v1782 = vadd.s32 %v1777, 1
    %vm1783 = vcmp.gt.s32.totalorder %v1782, 0
    %v1784 = vsel %vm1783, %v1782, 0
    %v1785 = vshrl.u32 %v1784, 5
    %v1786 = vand.u32 %v1784, 31
    %v1787 = vsub.s32 32, %v1786
    %v1788 = vshrl.u32 683565275, %v1787
    %v1789 = vshll.u32 683565275, %v1786
    %v1790 = vshrl.u32 2475754826, %v1787
    %v1791 = vor.u32 %v1789, %v1790
    %v1792 = vshll.u32 2475754826, %v1786
    %v1793 = vshrl.u32 2131351028, %v1787
    %v1794 = vor.u32 %v1792, %v1793
    %v1795 = vshll.u32 2131351028, %v1786
    %v1796 = vshrl.u32 2102212464, %v1787
    %v1797 = vor.u32 %v1795, %v1796
    %v1798 = vshll.u32 2102212464, %v1786
    %v1799 = vshrl.u32 920167782, %v1787
    %v1800 = vor.u32 %v1798, %v1799
    %v1801 = vshll.u32 920167782, %v1786
    %v1802 = vshrl.u32 1326507024, %v1787
    %v1803 = vor.u32 %v1801, %v1802
    %vm1804 = vcmp.lt.s32.totalorder %v1785, 1
    %vm1805 = vcmp.lt.s32.totalorder %v1785, 2
    %vm1806 = vcmp.lt.s32.totalorder %v1785, 3
    %vm1807 = vcmp.lt.s32.totalorder %v1785, 4
    %v1808 = vsel %vm1804, %v1788, %v1791
    %v1809 = vsel %vm1807, %v1797, 2102212464
    %v1810 = vsel %vm1806, %v1794, %v1809
    %v1811 = vsel %vm1805, %v1808, %v1810
    %v1812 = vsel %vm1804, %v1791, %v1794
    %v1813 = vsel %vm1807, %v1800, 920167782
    %v1814 = vsel %vm1806, %v1797, %v1813
    %v1815 = vsel %vm1805, %v1812, %v1814
    %v1816 = vsel %vm1804, %v1794, %v1797
    %v1817 = vsel %vm1807, %v1803, 1326507024
    %v1818 = vsel %vm1806, %v1800, %v1817
    %v1819 = vsel %vm1805, %v1816, %v1818
    %v1820 = vshll.u32 %v1780, 8
    %v1821 = vmul.u32.u64.compose %v1820, %v1819
    %v1822 = vextract.low.u32 %v1821
    %v1823 = vextract.high.u32 %v1821
    %v1824 = vmul.u32.u64.compose %v1820, %v1815
    %v1825 = vextract.low.u32 %v1824
    %v1826 = vextract.high.u32 %v1824
    %v1827 = vmul.u32 %v1820, %v1811
    %v1828 = vadd.s32 %v1823, %v1825
    %vm1829 = vc.u32 %v1823, %v1825
    %v1830 = vadd.s32 %v1826, 1
    %v1831 = vsel %vm1829, %v1830, %v1826
    %v1832 = vadd.s32 %v1827, %v1831
    %v1833 = vadd.s32 %v1832, 536870912
    %v1834 = vshrl.u32 %v1833, 30
    %v1835 = vshll.u32 %v1834, 30
    %v1836 = vsub.s32 %v1832, %v1835
    %vm1837 = vcmp.lt.s32.totalorder %v1836, 0
    %v1838 = vsub.s32 0, %v1836
    %v1839 = vsel %vm1837, %v1838, %v1836
    %v1840 = vclz %v1839
    %v1841 = vsub.s32 %v1840, 2
    %vm1842 = vcmp.gt.s32.totalorder 0, %v1841
    %v1843 = vsel %vm1842, 0, %v1841
    %v1844 = vsub.s32 32, %v1843
    %v1845 = vshll.u32 %v1836, %v1843
    %v1846 = vshrl.u32 %v1828, %v1844
    %v1847 = vor.u32 %v1845, %v1846
    %v1848 = vsub.s32 4294967266, %v1843
    %v1849 = vadd.s32 %v1848, 127
    %v1850 = vshll.u32 %v1849, 23
    %v1851 = vor.u32 4788187, %v1850
    %v1852 = vand.u32 2147483647, %v1851
    %v1854 = vcvt.s32.f32 %v1847
    %v1855 = vmul.f32 %v1854, %v1852
    %v1856 = vxor.u32 %v1855, 2147483648
    %v1857 = vsel %vm1774, %v1856, %v1855
    %v1858 = vsub.s32 4, %v1834
    %v1859 = vsel %vm1774, %v1858, %v1834
    %v1860 = vsel %vm1773, %v224, %v1857
    %v1861 = vsel %vm1773, 0, %v1859
    %v1862 = vcosq.f32.pop %v1860
    %v1863 = vsinq.f32.pop %v1860
    %vm1864 = vweird.f32 %v224
    %v1865 = vand.u32 %v1861, 3
    %vm1866 = vcmp.lt.s32.totalorder %v1865, 2
    %vm1867 = vcmp.eq.s32.totalorder %v1865, 0
    %v1868 = vxor.u32 %v1863, 2147483648
    %v1869 = vsel %vm1867, %v1862, %v1868
    %vm1870 = vcmp.eq.s32.totalorder %v1865, 2
    %v1871 = vxor.u32 %v1862, 2147483648
    %v1872 = vsel %vm1870, %v1871, %v1863
    %v1873 = vsel %vm1866, %v1869, %v1872
    %v1874 = vsel %vm1864, nan, %v1873
    %v1875 = vand.u32 2147483647, %v149
    %vm1876 = vcmp.le.f32.partialorder %v1875, 0.7853982
    %vm1877 = vcmp.lt.s32.totalorder %v149, 0
    %v1878 = vand.u32 %v149, 2139095040
    %v1879 = vshrl.u32 %v1878, 23
    %v1880 = vsub.s32 %v1879, 127
    %v1881 = vand.u32 2147483647, %v149
    %v1882 = vand.u32 %v1881, 8388607
    %v1883 = vor.u32 %v1882, 8388608
    %v1884 = vsub.s32 0, %v1883
    %v1885 = vadd.s32 %v1880, 1
    %vm1886 = vcmp.gt.s32.totalorder %v1885, 0
    %v1887 = vsel %vm1886, %v1885, 0
    %v1888 = vshrl.u32 %v1887, 5
    %v1889 = vand.u32 %v1887, 31
    %v1890 = vsub.s32 32, %v1889
    %v1891 = vshrl.u32 683565275, %v1890
    %v1892 = vshll.u32 683565275, %v1889
    %v1893 = vshrl.u32 2475754826, %v1890
    %v1894 = vor.u32 %v1892, %v1893
    %v1895 = vshll.u32 2475754826, %v1889
    %v1896 = vshrl.u32 2131351028, %v1890
    %v1897 = vor.u32 %v1895, %v1896
    %v1898 = vshll.u32 2131351028, %v1889
    %v1899 = vshrl.u32 2102212464, %v1890
    %v1900 = vor.u32 %v1898, %v1899
    %v1901 = vshll.u32 2102212464, %v1889
    %v1902 = vshrl.u32 920167782, %v1890
    %v1903 = vor.u32 %v1901, %v1902
    %v1904 = vshll.u32 920167782, %v1889
    %v1905 = vshrl.u32 1326507024, %v1890
    %v1906 = vor.u32 %v1904, %v1905
    %vm1907 = vcmp.lt.s32.totalorder %v1888, 1
    %vm1908 = vcmp.lt.s32.totalorder %v1888, 2
    %vm1909 = vcmp.lt.s32.totalorder %v1888, 3
    %vm1910 = vcmp.lt.s32.totalorder %v1888, 4
    %v1911 = vsel %vm1907, %v1891, %v1894
    %v1912 = vsel %vm1910, %v1900, 2102212464
    %v1913 = vsel %vm1909, %v1897, %v1912
    %v1914 = vsel %vm1908, %v1911, %v1913
    %v1915 = vsel %vm1907, %v1894, %v1897
    %v1916 = vsel %vm1910, %v1903, 920167782
    %v1917 = vsel %vm1909, %v1900, %v1916
    %v1918 = vsel %vm1908, %v1915, %v1917
    %v1919 = vsel %vm1907, %v1897, %v1900
    %v1920 = vsel %vm1910, %v1906, 1326507024
    %v1921 = vsel %vm1909, %v1903, %v1920
    %v1922 = vsel %vm1908, %v1919, %v1921
    %v1923 = vshll.u32 %v1883, 8
    %v1924 = vmul.u32.u64.compose %v1923, %v1922
    %v1925 = vextract.low.u32 %v1924
    %v1926 = vextract.high.u32 %v1924
    %v1927 = vmul.u32.u64.compose %v1923, %v1918
    %v1928 = vextract.low.u32 %v1927
    %v1929 = vextract.high.u32 %v1927
    %v1930 = vmul.u32 %v1923, %v1914
    %v1931 = vadd.s32 %v1926, %v1928
    %vm1932 = vc.u32 %v1926, %v1928
    %v1933 = vadd.s32 %v1929, 1
    %v1934 = vsel %vm1932, %v1933, %v1929
    %v1935 = vadd.s32 %v1930, %v1934
    %v1936 = vadd.s32 %v1935, 536870912
    %v1937 = vshrl.u32 %v1936, 30
    %v1938 = vshll.u32 %v1937, 30
    %v1939 = vsub.s32 %v1935, %v1938
    %vm1940 = vcmp.lt.s32.totalorder %v1939, 0
    %v1941 = vsub.s32 0, %v1939
    %v1942 = vsel %vm1940, %v1941, %v1939
    %v1943 = vclz %v1942
    %v1944 = vsub.s32 %v1943, 2
    %vm1945 = vcmp.gt.s32.totalorder 0, %v1944
    %v1946 = vsel %vm1945, 0, %v1944
    %v1947 = vsub.s32 32, %v1946
    %v1948 = vshll.u32 %v1939, %v1946
    %v1949 = vshrl.u32 %v1931, %v1947
    %v1950 = vor.u32 %v1948, %v1949
    %v1951 = vsub.s32 4294967266, %v1946
    %v1952 = vadd.s32 %v1951, 127
    %v1953 = vshll.u32 %v1952, 23
    %v1954 = vor.u32 4788187, %v1953
    %v1955 = vand.u32 2147483647, %v1954
    %v1957 = vcvt.s32.f32 %v1950
    %v1958 = vmul.f32 %v1957, %v1955
    %v1959 = vxor.u32 %v1958, 2147483648
    %v1960 = vsel %vm1877, %v1959, %v1958
    %v1961 = vsub.s32 4, %v1937
    %v1962 = vsel %vm1877, %v1961, %v1937
    %v1963 = vsel %vm1876, %v149, %v1960
    %v1964 = vsel %vm1876, 0, %v1962
    %v1965 = vcosq.f32.pop %v1963
    %v1966 = vsinq.f32.pop %v1963
    %vm1967 = vweird.f32 %v149
    %v1968 = vadd.s32 %v1964, 3
    %v1969 = vand.u32 %v1968, 3
    %vm1970 = vcmp.lt.s32.totalorder %v1969, 2
    %vm1971 = vcmp.eq.s32.totalorder %v1969, 0
    %v1972 = vxor.u32 %v1966, 2147483648
    %v1973 = vsel %vm1971, %v1965, %v1972
    %vm1974 = vcmp.eq.s32.totalorder %v1969, 2
    %v1975 = vxor.u32 %v1965, 2147483648
    %v1976 = vsel %vm1974, %v1975, %v1966
    %v1977 = vsel %vm1970, %v1973, %v1976
    %v1978 = vsel %vm1967, nan, %v1977
    %v1979 = vand.u32 2147483647, %v154
    %vm1980 = vcmp.le.f32.partialorder %v1979, 0.7853982
    %vm1981 = vcmp.lt.s32.totalorder %v154, 0
    %v1982 = vand.u32 %v154, 2139095040
    %v1983 = vshrl.u32 %v1982, 23
    %v1984 = vsub.s32 %v1983, 127
    %v1985 = vand.u32 2147483647, %v154
    %v1986 = vand.u32 %v1985, 8388607
    %v1987 = vor.u32 %v1986, 8388608
    %v1988 = vsub.s32 0, %v1987
    %v1989 = vadd.s32 %v1984, 1
    %vm1990 = vcmp.gt.s32.totalorder %v1989, 0
    %v1991 = vsel %vm1990, %v1989, 0
    %v1992 = vshrl.u32 %v1991, 5
    %v1993 = vand.u32 %v1991, 31
    %v1994 = vsub.s32 32, %v1993
    %v1995 = vshrl.u32 683565275, %v1994
    %v1996 = vshll.u32 683565275, %v1993
    %v1997 = vshrl.u32 2475754826, %v1994
    %v1998 = vor.u32 %v1996, %v1997
    %v1999 = vshll.u32 2475754826, %v1993
    %v2000 = vshrl.u32 2131351028, %v1994
    %v2001 = vor.u32 %v1999, %v2000
    %v2002 = vshll.u32 2131351028, %v1993
    %v2003 = vshrl.u32 2102212464, %v1994
    %v2004 = vor.u32 %v2002, %v2003
    %v2005 = vshll.u32 2102212464, %v1993
    %v2006 = vshrl.u32 920167782, %v1994
    %v2007 = vor.u32 %v2005, %v2006
    %v2008 = vshll.u32 920167782, %v1993
    %v2009 = vshrl.u32 1326507024, %v1994
    %v2010 = vor.u32 %v2008, %v2009
    %vm2011 = vcmp.lt.s32.totalorder %v1992, 1
    %vm2012 = vcmp.lt.s32.totalorder %v1992, 2
    %vm2013 = vcmp.lt.s32.totalorder %v1992, 3
    %vm2014 = vcmp.lt.s32.totalorder %v1992, 4
    %v2015 = vsel %vm2011, %v1995, %v1998
    %v2016 = vsel %vm2014, %v2004, 2102212464
    %v2017 = vsel %vm2013, %v2001, %v2016
    %v2018 = vsel %vm2012, %v2015, %v2017
    %v2019 = vsel %vm2011, %v1998, %v2001
    %v2020 = vsel %vm2014, %v2007, 920167782
    %v2021 = vsel %vm2013, %v2004, %v2020
    %v2022 = vsel %vm2012, %v2019, %v2021
    %v2023 = vsel %vm2011, %v2001, %v2004
    %v2024 = vsel %vm2014, %v2010, 1326507024
    %v2025 = vsel %vm2013, %v2007, %v2024
    %v2026 = vsel %vm2012, %v2023, %v2025
    %v2027 = vshll.u32 %v1987, 8
    %v2028 = vmul.u32.u64.compose %v2027, %v2026
    %v2029 = vextract.low.u32 %v2028
    %v2030 = vextract.high.u32 %v2028
    %v2031 = vmul.u32.u64.compose %v2027, %v2022
    %v2032 = vextract.low.u32 %v2031
    %v2033 = vextract.high.u32 %v2031
    %v2034 = vmul.u32 %v2027, %v2018
    %v2035 = vadd.s32 %v2030, %v2032
    %vm2036 = vc.u32 %v2030, %v2032
    %v2037 = vadd.s32 %v2033, 1
    %v2038 = vsel %vm2036, %v2037, %v2033
    %v2039 = vadd.s32 %v2034, %v2038
    %v2040 = vadd.s32 %v2039, 536870912
    %v2041 = vshrl.u32 %v2040, 30
    %v2042 = vshll.u32 %v2041, 30
    %v2043 = vsub.s32 %v2039, %v2042
    %vm2044 = vcmp.lt.s32.totalorder %v2043, 0
    %v2045 = vsub.s32 0, %v2043
    %v2046 = vsel %vm2044, %v2045, %v2043
    %v2047 = vclz %v2046
    %v2048 = vsub.s32 %v2047, 2
    %vm2049 = vcmp.gt.s32.totalorder 0, %v2048
    %v2050 = vsel %vm2049, 0, %v2048
    %v2051 = vsub.s32 32, %v2050
    %v2052 = vshll.u32 %v2043, %v2050
    %v2053 = vshrl.u32 %v2035, %v2051
    %v2054 = vor.u32 %v2052, %v2053
    %v2055 = vsub.s32 4294967266, %v2050
    %v2056 = vadd.s32 %v2055, 127
    %v2057 = vshll.u32 %v2056, 23
    %v2058 = vor.u32 4788187, %v2057
    %v2059 = vand.u32 2147483647, %v2058
    %v2061 = vcvt.s32.f32 %v2054
    %v2062 = vmul.f32 %v2061, %v2059
    %v2063 = vxor.u32 %v2062, 2147483648
    %v2064 = vsel %vm1981, %v2063, %v2062
    %v2065 = vsub.s32 4, %v2041
    %v2066 = vsel %vm1981, %v2065, %v2041
    %v2067 = vsel %vm1980, %v154, %v2064
    %v2068 = vsel %vm1980, 0, %v2066
    %v2069 = vcosq.f32.pop %v2067
    %v2070 = vsinq.f32.pop %v2067
    %vm2071 = vweird.f32 %v154
    %v2072 = vadd.s32 %v2068, 3
    %v2073 = vand.u32 %v2072, 3
    %vm2074 = vcmp.lt.s32.totalorder %v2073, 2
    %vm2075 = vcmp.eq.s32.totalorder %v2073, 0
    %v2076 = vxor.u32 %v2070, 2147483648
    %v2077 = vsel %vm2075, %v2069, %v2076
    %vm2078 = vcmp.eq.s32.totalorder %v2073, 2
    %v2079 = vxor.u32 %v2069, 2147483648
    %v2080 = vsel %vm2078, %v2079, %v2070
    %v2081 = vsel %vm2074, %v2077, %v2080
    %v2082 = vsel %vm2071, nan, %v2081
    %v2083 = vand.u32 2147483647, %v159
    %vm2084 = vcmp.le.f32.partialorder %v2083, 0.7853982
    %vm2085 = vcmp.lt.s32.totalorder %v159, 0
    %v2086 = vand.u32 %v159, 2139095040
    %v2087 = vshrl.u32 %v2086, 23
    %v2088 = vsub.s32 %v2087, 127
    %v2089 = vand.u32 2147483647, %v159
    %v2090 = vand.u32 %v2089, 8388607
    %v2091 = vor.u32 %v2090, 8388608
    %v2092 = vsub.s32 0, %v2091
    %v2093 = vadd.s32 %v2088, 1
    %vm2094 = vcmp.gt.s32.totalorder %v2093, 0
    %v2095 = vsel %vm2094, %v2093, 0
    %v2096 = vshrl.u32 %v2095, 5
    %v2097 = vand.u32 %v2095, 31
    %v2098 = vsub.s32 32, %v2097
    %v2099 = vshrl.u32 683565275, %v2098
    %v2100 = vshll.u32 683565275, %v2097
    %v2101 = vshrl.u32 2475754826, %v2098
    %v2102 = vor.u32 %v2100, %v2101
    %v2103 = vshll.u32 2475754826, %v2097
    %v2104 = vshrl.u32 2131351028, %v2098
    %v2105 = vor.u32 %v2103, %v2104
    %v2106 = vshll.u32 2131351028, %v2097
    %v2107 = vshrl.u32 2102212464, %v2098
    %v2108 = vor.u32 %v2106, %v2107
    %v2109 = vshll.u32 2102212464, %v2097
    %v2110 = vshrl.u32 920167782, %v2098
    %v2111 = vor.u32 %v2109, %v2110
    %v2112 = vshll.u32 920167782, %v2097
    %v2113 = vshrl.u32 1326507024, %v2098
    %v2114 = vor.u32 %v2112, %v2113
    %vm2115 = vcmp.lt.s32.totalorder %v2096, 1
    %vm2116 = vcmp.lt.s32.totalorder %v2096, 2
    %vm2117 = vcmp.lt.s32.totalorder %v2096, 3
    %vm2118 = vcmp.lt.s32.totalorder %v2096, 4
    %v2119 = vsel %vm2115, %v2099, %v2102
    %v2120 = vsel %vm2118, %v2108, 2102212464
    %v2121 = vsel %vm2117, %v2105, %v2120
    %v2122 = vsel %vm2116, %v2119, %v2121
    %v2123 = vsel %vm2115, %v2102, %v2105
    %v2124 = vsel %vm2118, %v2111, 920167782
    %v2125 = vsel %vm2117, %v2108, %v2124
    %v2126 = vsel %vm2116, %v2123, %v2125
    %v2127 = vsel %vm2115, %v2105, %v2108
    %v2128 = vsel %vm2118, %v2114, 1326507024
    %v2129 = vsel %vm2117, %v2111, %v2128
    %v2130 = vsel %vm2116, %v2127, %v2129
    %v2131 = vshll.u32 %v2091, 8
    %v2132 = vmul.u32.u64.compose %v2131, %v2130
    %v2133 = vextract.low.u32 %v2132
    %v2134 = vextract.high.u32 %v2132
    %v2135 = vmul.u32.u64.compose %v2131, %v2126
    %v2136 = vextract.low.u32 %v2135
    %v2137 = vextract.high.u32 %v2135
    %v2138 = vmul.u32 %v2131, %v2122
    %v2139 = vadd.s32 %v2134, %v2136
    %vm2140 = vc.u32 %v2134, %v2136
    %v2141 = vadd.s32 %v2137, 1
    %v2142 = vsel %vm2140, %v2141, %v2137
    %v2143 = vadd.s32 %v2138, %v2142
    %v2144 = vadd.s32 %v2143, 536870912
    %v2145 = vshrl.u32 %v2144, 30
    %v2146 = vshll.u32 %v2145, 30
    %v2147 = vsub.s32 %v2143, %v2146
    %vm2148 = vcmp.lt.s32.totalorder %v2147, 0
    %v2149 = vsub.s32 0, %v2147
    %v2150 = vsel %vm2148, %v2149, %v2147
    %v2151 = vclz %v2150
    %v2152 = vsub.s32 %v2151, 2
    %vm2153 = vcmp.gt.s32.totalorder 0, %v2152
    %v2154 = vsel %vm2153, 0, %v2152
    %v2155 = vsub.s32 32, %v2154
    %v2156 = vshll.u32 %v2147, %v2154
    %v2157 = vshrl.u32 %v2139, %v2155
    %v2158 = vor.u32 %v2156, %v2157
    %v2159 = vsub.s32 4294967266, %v2154
    %v2160 = vadd.s32 %v2159, 127
    %v2161 = vshll.u32 %v2160, 23
    %v2162 = vor.u32 4788187, %v2161
    %v2163 = vand.u32 2147483647, %v2162
    %v2165 = vcvt.s32.f32 %v2158
    %v2166 = vmul.f32 %v2165, %v2163
    %v2167 = vxor.u32 %v2166, 2147483648
    %v2168 = vsel %vm2085, %v2167, %v2166
    %v2169 = vsub.s32 4, %v2145
    %v2170 = vsel %vm2085, %v2169, %v2145
    %v2171 = vsel %vm2084, %v159, %v2168
    %v2172 = vsel %vm2084, 0, %v2170
    %v2173 = vcosq.f32.pop %v2171
    %v2174 = vsinq.f32.pop %v2171
    %vm2175 = vweird.f32 %v159
    %v2176 = vadd.s32 %v2172, 3
    %v2177 = vand.u32 %v2176, 3
    %vm2178 = vcmp.lt.s32.totalorder %v2177, 2
    %vm2179 = vcmp.eq.s32.totalorder %v2177, 0
    %v2180 = vxor.u32 %v2174, 2147483648
    %v2181 = vsel %vm2179, %v2173, %v2180
    %vm2182 = vcmp.eq.s32.totalorder %v2177, 2
    %v2183 = vxor.u32 %v2173, 2147483648
    %v2184 = vsel %vm2182, %v2183, %v2174
    %v2185 = vsel %vm2178, %v2181, %v2184
    %v2186 = vsel %vm2175, nan, %v2185
    %v2187 = vand.u32 2147483647, %v164
    %vm2188 = vcmp.le.f32.partialorder %v2187, 0.7853982
    %vm2189 = vcmp.lt.s32.totalorder %v164, 0
    %v2190 = vand.u32 %v164, 2139095040
    %v2191 = vshrl.u32 %v2190, 23
    %v2192 = vsub.s32 %v2191, 127
    %v2193 = vand.u32 2147483647, %v164
    %v2194 = vand.u32 %v2193, 8388607
    %v2195 = vor.u32 %v2194, 8388608
    %v2196 = vsub.s32 0, %v2195
    %v2197 = vadd.s32 %v2192, 1
    %vm2198 = vcmp.gt.s32.totalorder %v2197, 0
    %v2199 = vsel %vm2198, %v2197, 0
    %v2200 = vshrl.u32 %v2199, 5
    %v2201 = vand.u32 %v2199, 31
    %v2202 = vsub.s32 32, %v2201
    %v2203 = vshrl.u32 683565275, %v2202
    %v2204 = vshll.u32 683565275, %v2201
    %v2205 = vshrl.u32 2475754826, %v2202
    %v2206 = vor.u32 %v2204, %v2205
    %v2207 = vshll.u32 2475754826, %v2201
    %v2208 = vshrl.u32 2131351028, %v2202
    %v2209 = vor.u32 %v2207, %v2208
    %v2210 = vshll.u32 2131351028, %v2201
    %v2211 = vshrl.u32 2102212464, %v2202
    %v2212 = vor.u32 %v2210, %v2211
    %v2213 = vshll.u32 2102212464, %v2201
    %v2214 = vshrl.u32 920167782, %v2202
    %v2215 = vor.u32 %v2213, %v2214
    %v2216 = vshll.u32 920167782, %v2201
    %v2217 = vshrl.u32 1326507024, %v2202
    %v2218 = vor.u32 %v2216, %v2217
    %vm2219 = vcmp.lt.s32.totalorder %v2200, 1
    %vm2220 = vcmp.lt.s32.totalorder %v2200, 2
    %vm2221 = vcmp.lt.s32.totalorder %v2200, 3
    %vm2222 = vcmp.lt.s32.totalorder %v2200, 4
    %v2223 = vsel %vm2219, %v2203, %v2206
    %v2224 = vsel %vm2222, %v2212, 2102212464
    %v2225 = vsel %vm2221, %v2209, %v2224
    %v2226 = vsel %vm2220, %v2223, %v2225
    %v2227 = vsel %vm2219, %v2206, %v2209
    %v2228 = vsel %vm2222, %v2215, 920167782
    %v2229 = vsel %vm2221, %v2212, %v2228
    %v2230 = vsel %vm2220, %v2227, %v2229
    %v2231 = vsel %vm2219, %v2209, %v2212
    %v2232 = vsel %vm2222, %v2218, 1326507024
    %v2233 = vsel %vm2221, %v2215, %v2232
    %v2234 = vsel %vm2220, %v2231, %v2233
    %v2235 = vshll.u32 %v2195, 8
    %v2236 = vmul.u32.u64.compose %v2235, %v2234
    %v2237 = vextract.low.u32 %v2236
    %v2238 = vextract.high.u32 %v2236
    %v2239 = vmul.u32.u64.compose %v2235, %v2230
    %v2240 = vextract.low.u32 %v2239
    %v2241 = vextract.high.u32 %v2239
    %v2242 = vmul.u32 %v2235, %v2226
    %v2243 = vadd.s32 %v2238, %v2240
    %vm2244 = vc.u32 %v2238, %v2240
    %v2245 = vadd.s32 %v2241, 1
    %v2246 = vsel %vm2244, %v2245, %v2241
    %v2247 = vadd.s32 %v2242, %v2246
    %v2248 = vadd.s32 %v2247, 536870912
    %v2249 = vshrl.u32 %v2248, 30
    %v2250 = vshll.u32 %v2249, 30
    %v2251 = vsub.s32 %v2247, %v2250
    %vm2252 = vcmp.lt.s32.totalorder %v2251, 0
    %v2253 = vsub.s32 0, %v2251
    %v2254 = vsel %vm2252, %v2253, %v2251
    %v2255 = vclz %v2254
    %v2256 = vsub.s32 %v2255, 2
    %vm2257 = vcmp.gt.s32.totalorder 0, %v2256
    %v2258 = vsel %vm2257, 0, %v2256
    %v2259 = vsub.s32 32, %v2258
    %v2260 = vshll.u32 %v2251, %v2258
    %v2261 = vshrl.u32 %v2243, %v2259
    %v2262 = vor.u32 %v2260, %v2261
    %v2263 = vsub.s32 4294967266, %v2258
    %v2264 = vadd.s32 %v2263, 127
    %v2265 = vshll.u32 %v2264, 23
    %v2266 = vor.u32 4788187, %v2265
    %v2267 = vand.u32 2147483647, %v2266
    %v2269 = vcvt.s32.f32 %v2262
    %v2270 = vmul.f32 %v2269, %v2267
    %v2271 = vxor.u32 %v2270, 2147483648
    %v2272 = vsel %vm2189, %v2271, %v2270
    %v2273 = vsub.s32 4, %v2249
    %v2274 = vsel %vm2189, %v2273, %v2249
    %v2275 = vsel %vm2188, %v164, %v2272
    %v2276 = vsel %vm2188, 0, %v2274
    %v2277 = vcosq.f32.pop %v2275
    %v2278 = vsinq.f32.pop %v2275
    %vm2279 = vweird.f32 %v164
    %v2280 = vadd.s32 %v2276, 3
    %v2281 = vand.u32 %v2280, 3
    %vm2282 = vcmp.lt.s32.totalorder %v2281, 2
    %vm2283 = vcmp.eq.s32.totalorder %v2281, 0
    %v2284 = vxor.u32 %v2278, 2147483648
    %v2285 = vsel %vm2283, %v2277, %v2284
    %vm2286 = vcmp.eq.s32.totalorder %v2281, 2
    %v2287 = vxor.u32 %v2277, 2147483648
    %v2288 = vsel %vm2286, %v2287, %v2278
    %v2289 = vsel %vm2282, %v2285, %v2288
    %v2290 = vsel %vm2279, nan, %v2289
    %v2291 = vand.u32 2147483647, %v169
    %vm2292 = vcmp.le.f32.partialorder %v2291, 0.7853982
    %vm2293 = vcmp.lt.s32.totalorder %v169, 0
    %v2294 = vand.u32 %v169, 2139095040
    %v2295 = vshrl.u32 %v2294, 23
    %v2296 = vsub.s32 %v2295, 127
    %v2297 = vand.u32 2147483647, %v169
    %v2298 = vand.u32 %v2297, 8388607
    %v2299 = vor.u32 %v2298, 8388608
    %v2300 = vsub.s32 0, %v2299
    %v2301 = vadd.s32 %v2296, 1
    %vm2302 = vcmp.gt.s32.totalorder %v2301, 0
    %v2303 = vsel %vm2302, %v2301, 0
    %v2304 = vshrl.u32 %v2303, 5
    %v2305 = vand.u32 %v2303, 31
    %v2306 = vsub.s32 32, %v2305
    %v2307 = vshrl.u32 683565275, %v2306
    %v2308 = vshll.u32 683565275, %v2305
    %v2309 = vshrl.u32 2475754826, %v2306
    %v2310 = vor.u32 %v2308, %v2309
    %v2311 = vshll.u32 2475754826, %v2305
    %v2312 = vshrl.u32 2131351028, %v2306
    %v2313 = vor.u32 %v2311, %v2312
    %v2314 = vshll.u32 2131351028, %v2305
    %v2315 = vshrl.u32 2102212464, %v2306
    %v2316 = vor.u32 %v2314, %v2315
    %v2317 = vshll.u32 2102212464, %v2305
    %v2318 = vshrl.u32 920167782, %v2306
    %v2319 = vor.u32 %v2317, %v2318
    %v2320 = vshll.u32 920167782, %v2305
    %v2321 = vshrl.u32 1326507024, %v2306
    %v2322 = vor.u32 %v2320, %v2321
    %vm2323 = vcmp.lt.s32.totalorder %v2304, 1
    %vm2324 = vcmp.lt.s32.totalorder %v2304, 2
    %vm2325 = vcmp.lt.s32.totalorder %v2304, 3
    %vm2326 = vcmp.lt.s32.totalorder %v2304, 4
    %v2327 = vsel %vm2323, %v2307, %v2310
    %v2328 = vsel %vm2326, %v2316, 2102212464
    %v2329 = vsel %vm2325, %v2313, %v2328
    %v2330 = vsel %vm2324, %v2327, %v2329
    %v2331 = vsel %vm2323, %v2310, %v2313
    %v2332 = vsel %vm2326, %v2319, 920167782
    %v2333 = vsel %vm2325, %v2316, %v2332
    %v2334 = vsel %vm2324, %v2331, %v2333
    %v2335 = vsel %vm2323, %v2313, %v2316
    %v2336 = vsel %vm2326, %v2322, 1326507024
    %v2337 = vsel %vm2325, %v2319, %v2336
    %v2338 = vsel %vm2324, %v2335, %v2337
    %v2339 = vshll.u32 %v2299, 8
    %v2340 = vmul.u32.u64.compose %v2339, %v2338
    %v2341 = vextract.low.u32 %v2340
    %v2342 = vextract.high.u32 %v2340
    %v2343 = vmul.u32.u64.compose %v2339, %v2334
    %v2344 = vextract.low.u32 %v2343
    %v2345 = vextract.high.u32 %v2343
    %v2346 = vmul.u32 %v2339, %v2330
    %v2347 = vadd.s32 %v2342, %v2344
    %vm2348 = vc.u32 %v2342, %v2344
    %v2349 = vadd.s32 %v2345, 1
    %v2350 = vsel %vm2348, %v2349, %v2345
    %v2351 = vadd.s32 %v2346, %v2350
    %v2352 = vadd.s32 %v2351, 536870912
    %v2353 = vshrl.u32 %v2352, 30
    %v2354 = vshll.u32 %v2353, 30
    %v2355 = vsub.s32 %v2351, %v2354
    %vm2356 = vcmp.lt.s32.totalorder %v2355, 0
    %v2357 = vsub.s32 0, %v2355
    %v2358 = vsel %vm2356, %v2357, %v2355
    %v2359 = vclz %v2358
    %v2360 = vsub.s32 %v2359, 2
    %vm2361 = vcmp.gt.s32.totalorder 0, %v2360
    %v2362 = vsel %vm2361, 0, %v2360
    %v2363 = vsub.s32 32, %v2362
    %v2364 = vshll.u32 %v2355, %v2362
    %v2365 = vshrl.u32 %v2347, %v2363
    %v2366 = vor.u32 %v2364, %v2365
    %v2367 = vsub.s32 4294967266, %v2362
    %v2368 = vadd.s32 %v2367, 127
    %v2369 = vshll.u32 %v2368, 23
    %v2370 = vor.u32 4788187, %v2369
    %v2371 = vand.u32 2147483647, %v2370
    %v2373 = vcvt.s32.f32 %v2366
    %v2374 = vmul.f32 %v2373, %v2371
    %v2375 = vxor.u32 %v2374, 2147483648
    %v2376 = vsel %vm2293, %v2375, %v2374
    %v2377 = vsub.s32 4, %v2353
    %v2378 = vsel %vm2293, %v2377, %v2353
    %v2379 = vsel %vm2292, %v169, %v2376
    %v2380 = vsel %vm2292, 0, %v2378
    %v2381 = vcosq.f32.pop %v2379
    %v2382 = vsinq.f32.pop %v2379
    %vm2383 = vweird.f32 %v169
    %v2384 = vadd.s32 %v2380, 3
    %v2385 = vand.u32 %v2384, 3
    %vm2386 = vcmp.lt.s32.totalorder %v2385, 2
    %vm2387 = vcmp.eq.s32.totalorder %v2385, 0
    %v2388 = vxor.u32 %v2382, 2147483648
    %v2389 = vsel %vm2387, %v2381, %v2388
    %vm2390 = vcmp.eq.s32.totalorder %v2385, 2
    %v2391 = vxor.u32 %v2381, 2147483648
    %v2392 = vsel %vm2390, %v2391, %v2382
    %v2393 = vsel %vm2386, %v2389, %v2392
    %v2394 = vsel %vm2383, nan, %v2393
    %v2395 = vand.u32 2147483647, %v174
    %vm2396 = vcmp.le.f32.partialorder %v2395, 0.7853982
    %vm2397 = vcmp.lt.s32.totalorder %v174, 0
    %v2398 = vand.u32 %v174, 2139095040
    %v2399 = vshrl.u32 %v2398, 23
    %v2400 = vsub.s32 %v2399, 127
    %v2401 = vand.u32 2147483647, %v174
    %v2402 = vand.u32 %v2401, 8388607
    %v2403 = vor.u32 %v2402, 8388608
    %v2404 = vsub.s32 0, %v2403
    %v2405 = vadd.s32 %v2400, 1
    %vm2406 = vcmp.gt.s32.totalorder %v2405, 0
    %v2407 = vsel %vm2406, %v2405, 0
    %v2408 = vshrl.u32 %v2407, 5
    %v2409 = vand.u32 %v2407, 31
    %v2410 = vsub.s32 32, %v2409
    %v2411 = vshrl.u32 683565275, %v2410
    %v2412 = vshll.u32 683565275, %v2409
    %v2413 = vshrl.u32 2475754826, %v2410
    %v2414 = vor.u32 %v2412, %v2413
    %v2415 = vshll.u32 2475754826, %v2409
    %v2416 = vshrl.u32 2131351028, %v2410
    %v2417 = vor.u32 %v2415, %v2416
    %v2418 = vshll.u32 2131351028, %v2409
    %v2419 = vshrl.u32 2102212464, %v2410
    %v2420 = vor.u32 %v2418, %v2419
    %v2421 = vshll.u32 2102212464, %v2409
    %v2422 = vshrl.u32 920167782, %v2410
    %v2423 = vor.u32 %v2421, %v2422
    %v2424 = vshll.u32 920167782, %v2409
    %v2425 = vshrl.u32 1326507024, %v2410
    %v2426 = vor.u32 %v2424, %v2425
    %vm2427 = vcmp.lt.s32.totalorder %v2408, 1
    %vm2428 = vcmp.lt.s32.totalorder %v2408, 2
    %vm2429 = vcmp.lt.s32.totalorder %v2408, 3
    %vm2430 = vcmp.lt.s32.totalorder %v2408, 4
    %v2431 = vsel %vm2427, %v2411, %v2414
    %v2432 = vsel %vm2430, %v2420, 2102212464
    %v2433 = vsel %vm2429, %v2417, %v2432
    %v2434 = vsel %vm2428, %v2431, %v2433
    %v2435 = vsel %vm2427, %v2414, %v2417
    %v2436 = vsel %vm2430, %v2423, 920167782
    %v2437 = vsel %vm2429, %v2420, %v2436
    %v2438 = vsel %vm2428, %v2435, %v2437
    %v2439 = vsel %vm2427, %v2417, %v2420
    %v2440 = vsel %vm2430, %v2426, 1326507024
    %v2441 = vsel %vm2429, %v2423, %v2440
    %v2442 = vsel %vm2428, %v2439, %v2441
    %v2443 = vshll.u32 %v2403, 8
    %v2444 = vmul.u32.u64.compose %v2443, %v2442
    %v2445 = vextract.low.u32 %v2444
    %v2446 = vextract.high.u32 %v2444
    %v2447 = vmul.u32.u64.compose %v2443, %v2438
    %v2448 = vextract.low.u32 %v2447
    %v2449 = vextract.high.u32 %v2447
    %v2450 = vmul.u32 %v2443, %v2434
    %v2451 = vadd.s32 %v2446, %v2448
    %vm2452 = vc.u32 %v2446, %v2448
    %v2453 = vadd.s32 %v2449, 1
    %v2454 = vsel %vm2452, %v2453, %v2449
    %v2455 = vadd.s32 %v2450, %v2454
    %v2456 = vadd.s32 %v2455, 536870912
    %v2457 = vshrl.u32 %v2456, 30
    %v2458 = vshll.u32 %v2457, 30
    %v2459 = vsub.s32 %v2455, %v2458
    %vm2460 = vcmp.lt.s32.totalorder %v2459, 0
    %v2461 = vsub.s32 0, %v2459
    %v2462 = vsel %vm2460, %v2461, %v2459
    %v2463 = vclz %v2462
    %v2464 = vsub.s32 %v2463, 2
    %vm2465 = vcmp.gt.s32.totalorder 0, %v2464
    %v2466 = vsel %vm2465, 0, %v2464
    %v2467 = vsub.s32 32, %v2466
    %v2468 = vshll.u32 %v2459, %v2466
    %v2469 = vshrl.u32 %v2451, %v2467
    %v2470 = vor.u32 %v2468, %v2469
    %v2471 = vsub.s32 4294967266, %v2466
    %v2472 = vadd.s32 %v2471, 127
    %v2473 = vshll.u32 %v2472, 23
    %v2474 = vor.u32 4788187, %v2473
    %v2475 = vand.u32 2147483647, %v2474
    %v2477 = vcvt.s32.f32 %v2470
    %v2478 = vmul.f32 %v2477, %v2475
    %v2479 = vxor.u32 %v2478, 2147483648
    %v2480 = vsel %vm2397, %v2479, %v2478
    %v2481 = vsub.s32 4, %v2457
    %v2482 = vsel %vm2397, %v2481, %v2457
    %v2483 = vsel %vm2396, %v174, %v2480
    %v2484 = vsel %vm2396, 0, %v2482
    %v2485 = vcosq.f32.pop %v2483
    %v2486 = vsinq.f32.pop %v2483
    %vm2487 = vweird.f32 %v174
    %v2488 = vadd.s32 %v2484, 3
    %v2489 = vand.u32 %v2488, 3
    %vm2490 = vcmp.lt.s32.totalorder %v2489, 2
    %vm2491 = vcmp.eq.s32.totalorder %v2489, 0
    %v2492 = vxor.u32 %v2486, 2147483648
    %v2493 = vsel %vm2491, %v2485, %v2492
    %vm2494 = vcmp.eq.s32.totalorder %v2489, 2
    %v2495 = vxor.u32 %v2485, 2147483648
    %v2496 = vsel %vm2494, %v2495, %v2486
    %v2497 = vsel %vm2490, %v2493, %v2496
    %v2498 = vsel %vm2487, nan, %v2497
    %v2499 = vand.u32 2147483647, %v179
    %vm2500 = vcmp.le.f32.partialorder %v2499, 0.7853982
    %vm2501 = vcmp.lt.s32.totalorder %v179, 0
    %v2502 = vand.u32 %v179, 2139095040
    %v2503 = vshrl.u32 %v2502, 23
    %v2504 = vsub.s32 %v2503, 127
    %v2505 = vand.u32 2147483647, %v179
    %v2506 = vand.u32 %v2505, 8388607
    %v2507 = vor.u32 %v2506, 8388608
    %v2508 = vsub.s32 0, %v2507
    %v2509 = vadd.s32 %v2504, 1
    %vm2510 = vcmp.gt.s32.totalorder %v2509, 0
    %v2511 = vsel %vm2510, %v2509, 0
    %v2512 = vshrl.u32 %v2511, 5
    %v2513 = vand.u32 %v2511, 31
    %v2514 = vsub.s32 32, %v2513
    %v2515 = vshrl.u32 683565275, %v2514
    %v2516 = vshll.u32 683565275, %v2513
    %v2517 = vshrl.u32 2475754826, %v2514
    %v2518 = vor.u32 %v2516, %v2517
    %v2519 = vshll.u32 2475754826, %v2513
    %v2520 = vshrl.u32 2131351028, %v2514
    %v2521 = vor.u32 %v2519, %v2520
    %v2522 = vshll.u32 2131351028, %v2513
    %v2523 = vshrl.u32 2102212464, %v2514
    %v2524 = vor.u32 %v2522, %v2523
    %v2525 = vshll.u32 2102212464, %v2513
    %v2526 = vshrl.u32 920167782, %v2514
    %v2527 = vor.u32 %v2525, %v2526
    %v2528 = vshll.u32 920167782, %v2513
    %v2529 = vshrl.u32 1326507024, %v2514
    %v2530 = vor.u32 %v2528, %v2529
    %vm2531 = vcmp.lt.s32.totalorder %v2512, 1
    %vm2532 = vcmp.lt.s32.totalorder %v2512, 2
    %vm2533 = vcmp.lt.s32.totalorder %v2512, 3
    %vm2534 = vcmp.lt.s32.totalorder %v2512, 4
    %v2535 = vsel %vm2531, %v2515, %v2518
    %v2536 = vsel %vm2534, %v2524, 2102212464
    %v2537 = vsel %vm2533, %v2521, %v2536
    %v2538 = vsel %vm2532, %v2535, %v2537
    %v2539 = vsel %vm2531, %v2518, %v2521
    %v2540 = vsel %vm2534, %v2527, 920167782
    %v2541 = vsel %vm2533, %v2524, %v2540
    %v2542 = vsel %vm2532, %v2539, %v2541
    %v2543 = vsel %vm2531, %v2521, %v2524
    %v2544 = vsel %vm2534, %v2530, 1326507024
    %v2545 = vsel %vm2533, %v2527, %v2544
    %v2546 = vsel %vm2532, %v2543, %v2545
    %v2547 = vshll.u32 %v2507, 8
    %v2548 = vmul.u32.u64.compose %v2547, %v2546
    %v2549 = vextract.low.u32 %v2548
    %v2550 = vextract.high.u32 %v2548
    %v2551 = vmul.u32.u64.compose %v2547, %v2542
    %v2552 = vextract.low.u32 %v2551
    %v2553 = vextract.high.u32 %v2551
    %v2554 = vmul.u32 %v2547, %v2538
    %v2555 = vadd.s32 %v2550, %v2552
    %vm2556 = vc.u32 %v2550, %v2552
    %v2557 = vadd.s32 %v2553, 1
    %v2558 = vsel %vm2556, %v2557, %v2553
    %v2559 = vadd.s32 %v2554, %v2558
    %v2560 = vadd.s32 %v2559, 536870912
    %v2561 = vshrl.u32 %v2560, 30
    %v2562 = vshll.u32 %v2561, 30
    %v2563 = vsub.s32 %v2559, %v2562
    %vm2564 = vcmp.lt.s32.totalorder %v2563, 0
    %v2565 = vsub.s32 0, %v2563
    %v2566 = vsel %vm2564, %v2565, %v2563
    %v2567 = vclz %v2566
    %v2568 = vsub.s32 %v2567, 2
    %vm2569 = vcmp.gt.s32.totalorder 0, %v2568
    %v2570 = vsel %vm2569, 0, %v2568
    %v2571 = vsub.s32 32, %v2570
    %v2572 = vshll.u32 %v2563, %v2570
    %v2573 = vshrl.u32 %v2555, %v2571
    %v2574 = vor.u32 %v2572, %v2573
    %v2575 = vsub.s32 4294967266, %v2570
    %v2576 = vadd.s32 %v2575, 127
    %v2577 = vshll.u32 %v2576, 23
    %v2578 = vor.u32 4788187, %v2577
    %v2579 = vand.u32 2147483647, %v2578
    %v2581 = vcvt.s32.f32 %v2574
    %v2582 = vmul.f32 %v2581, %v2579
    %v2583 = vxor.u32 %v2582, 2147483648
    %v2584 = vsel %vm2501, %v2583, %v2582
    %v2585 = vsub.s32 4, %v2561
    %v2586 = vsel %vm2501, %v2585, %v2561
    %v2587 = vsel %vm2500, %v179, %v2584
    %v2588 = vsel %vm2500, 0, %v2586
    %v2589 = vcosq.f32.pop %v2587
    %v2590 = vsinq.f32.pop %v2587
    %vm2591 = vweird.f32 %v179
    %v2592 = vadd.s32 %v2588, 3
    %v2593 = vand.u32 %v2592, 3
    %vm2594 = vcmp.lt.s32.totalorder %v2593, 2
    %vm2595 = vcmp.eq.s32.totalorder %v2593, 0
    %v2596 = vxor.u32 %v2590, 2147483648
    %v2597 = vsel %vm2595, %v2589, %v2596
    %vm2598 = vcmp.eq.s32.totalorder %v2593, 2
    %v2599 = vxor.u32 %v2589, 2147483648
    %v2600 = vsel %vm2598, %v2599, %v2590
    %v2601 = vsel %vm2594, %v2597, %v2600
    %v2602 = vsel %vm2591, nan, %v2601
    %v2603 = vand.u32 2147483647, %v184
    %vm2604 = vcmp.le.f32.partialorder %v2603, 0.7853982
    %vm2605 = vcmp.lt.s32.totalorder %v184, 0
    %v2606 = vand.u32 %v184, 2139095040
    %v2607 = vshrl.u32 %v2606, 23
    %v2608 = vsub.s32 %v2607, 127
    %v2609 = vand.u32 2147483647, %v184
    %v2610 = vand.u32 %v2609, 8388607
    %v2611 = vor.u32 %v2610, 8388608
    %v2612 = vsub.s32 0, %v2611
    %v2613 = vadd.s32 %v2608, 1
    %vm2614 = vcmp.gt.s32.totalorder %v2613, 0
    %v2615 = vsel %vm2614, %v2613, 0
    %v2616 = vshrl.u32 %v2615, 5
    %v2617 = vand.u32 %v2615, 31
    %v2618 = vsub.s32 32, %v2617
    %v2619 = vshrl.u32 683565275, %v2618
    %v2620 = vshll.u32 683565275, %v2617
    %v2621 = vshrl.u32 2475754826, %v2618
    %v2622 = vor.u32 %v2620, %v2621
    %v2623 = vshll.u32 2475754826, %v2617
    %v2624 = vshrl.u32 2131351028, %v2618
    %v2625 = vor.u32 %v2623, %v2624
    %v2626 = vshll.u32 2131351028, %v2617
    %v2627 = vshrl.u32 2102212464, %v2618
    %v2628 = vor.u32 %v2626, %v2627
    %v2629 = vshll.u32 2102212464, %v2617
    %v2630 = vshrl.u32 920167782, %v2618
    %v2631 = vor.u32 %v2629, %v2630
    %v2632 = vshll.u32 920167782, %v2617
    %v2633 = vshrl.u32 1326507024, %v2618
    %v2634 = vor.u32 %v2632, %v2633
    %vm2635 = vcmp.lt.s32.totalorder %v2616, 1
    %vm2636 = vcmp.lt.s32.totalorder %v2616, 2
    %vm2637 = vcmp.lt.s32.totalorder %v2616, 3
    %vm2638 = vcmp.lt.s32.totalorder %v2616, 4
    %v2639 = vsel %vm2635, %v2619, %v2622
    %v2640 = vsel %vm2638, %v2628, 2102212464
    %v2641 = vsel %vm2637, %v2625, %v2640
    %v2642 = vsel %vm2636, %v2639, %v2641
    %v2643 = vsel %vm2635, %v2622, %v2625
    %v2644 = vsel %vm2638, %v2631, 920167782
    %v2645 = vsel %vm2637, %v2628, %v2644
    %v2646 = vsel %vm2636, %v2643, %v2645
    %v2647 = vsel %vm2635, %v2625, %v2628
    %v2648 = vsel %vm2638, %v2634, 1326507024
    %v2649 = vsel %vm2637, %v2631, %v2648
    %v2650 = vsel %vm2636, %v2647, %v2649
    %v2651 = vshll.u32 %v2611, 8
    %v2652 = vmul.u32.u64.compose %v2651, %v2650
    %v2653 = vextract.low.u32 %v2652
    %v2654 = vextract.high.u32 %v2652
    %v2655 = vmul.u32.u64.compose %v2651, %v2646
    %v2656 = vextract.low.u32 %v2655
    %v2657 = vextract.high.u32 %v2655
    %v2658 = vmul.u32 %v2651, %v2642
    %v2659 = vadd.s32 %v2654, %v2656
    %vm2660 = vc.u32 %v2654, %v2656
    %v2661 = vadd.s32 %v2657, 1
    %v2662 = vsel %vm2660, %v2661, %v2657
    %v2663 = vadd.s32 %v2658, %v2662
    %v2664 = vadd.s32 %v2663, 536870912
    %v2665 = vshrl.u32 %v2664, 30
    %v2666 = vshll.u32 %v2665, 30
    %v2667 = vsub.s32 %v2663, %v2666
    %vm2668 = vcmp.lt.s32.totalorder %v2667, 0
    %v2669 = vsub.s32 0, %v2667
    %v2670 = vsel %vm2668, %v2669, %v2667
    %v2671 = vclz %v2670
    %v2672 = vsub.s32 %v2671, 2
    %vm2673 = vcmp.gt.s32.totalorder 0, %v2672
    %v2674 = vsel %vm2673, 0, %v2672
    %v2675 = vsub.s32 32, %v2674
    %v2676 = vshll.u32 %v2667, %v2674
    %v2677 = vshrl.u32 %v2659, %v2675
    %v2678 = vor.u32 %v2676, %v2677
    %v2679 = vsub.s32 4294967266, %v2674
    %v2680 = vadd.s32 %v2679, 127
    %v2681 = vshll.u32 %v2680, 23
    %v2682 = vor.u32 4788187, %v2681
    %v2683 = vand.u32 2147483647, %v2682
    %v2685 = vcvt.s32.f32 %v2678
    %v2686 = vmul.f32 %v2685, %v2683
    %v2687 = vxor.u32 %v2686, 2147483648
    %v2688 = vsel %vm2605, %v2687, %v2686
    %v2689 = vsub.s32 4, %v2665
    %v2690 = vsel %vm2605, %v2689, %v2665
    %v2691 = vsel %vm2604, %v184, %v2688
    %v2692 = vsel %vm2604, 0, %v2690
    %v2693 = vcosq.f32.pop %v2691
    %v2694 = vsinq.f32.pop %v2691
    %vm2695 = vweird.f32 %v184
    %v2696 = vadd.s32 %v2692, 3
    %v2697 = vand.u32 %v2696, 3
    %vm2698 = vcmp.lt.s32.totalorder %v2697, 2
    %vm2699 = vcmp.eq.s32.totalorder %v2697, 0
    %v2700 = vxor.u32 %v2694, 2147483648
    %v2701 = vsel %vm2699, %v2693, %v2700
    %vm2702 = vcmp.eq.s32.totalorder %v2697, 2
    %v2703 = vxor.u32 %v2693, 2147483648
    %v2704 = vsel %vm2702, %v2703, %v2694
    %v2705 = vsel %vm2698, %v2701, %v2704
    %v2706 = vsel %vm2695, nan, %v2705
    %v2707 = vand.u32 2147483647, %v189
    %vm2708 = vcmp.le.f32.partialorder %v2707, 0.7853982
    %vm2709 = vcmp.lt.s32.totalorder %v189, 0
    %v2710 = vand.u32 %v189, 2139095040
    %v2711 = vshrl.u32 %v2710, 23
    %v2712 = vsub.s32 %v2711, 127
    %v2713 = vand.u32 2147483647, %v189
    %v2714 = vand.u32 %v2713, 8388607
    %v2715 = vor.u32 %v2714, 8388608
    %v2716 = vsub.s32 0, %v2715
    %v2717 = vadd.s32 %v2712, 1
    %vm2718 = vcmp.gt.s32.totalorder %v2717, 0
    %v2719 = vsel %vm2718, %v2717, 0
    %v2720 = vshrl.u32 %v2719, 5
    %v2721 = vand.u32 %v2719, 31
    %v2722 = vsub.s32 32, %v2721
    %v2723 = vshrl.u32 683565275, %v2722
    %v2724 = vshll.u32 683565275, %v2721
    %v2725 = vshrl.u32 2475754826, %v2722
    %v2726 = vor.u32 %v2724, %v2725
    %v2727 = vshll.u32 2475754826, %v2721
    %v2728 = vshrl.u32 2131351028, %v2722
    %v2729 = vor.u32 %v2727, %v2728
    %v2730 = vshll.u32 2131351028, %v2721
    %v2731 = vshrl.u32 2102212464, %v2722
    %v2732 = vor.u32 %v2730, %v2731
    %v2733 = vshll.u32 2102212464, %v2721
    %v2734 = vshrl.u32 920167782, %v2722
    %v2735 = vor.u32 %v2733, %v2734
    %v2736 = vshll.u32 920167782, %v2721
    %v2737 = vshrl.u32 1326507024, %v2722
    %v2738 = vor.u32 %v2736, %v2737
    %vm2739 = vcmp.lt.s32.totalorder %v2720, 1
    %vm2740 = vcmp.lt.s32.totalorder %v2720, 2
    %vm2741 = vcmp.lt.s32.totalorder %v2720, 3
    %vm2742 = vcmp.lt.s32.totalorder %v2720, 4
    %v2743 = vsel %vm2739, %v2723, %v2726
    %v2744 = vsel %vm2742, %v2732, 2102212464
    %v2745 = vsel %vm2741, %v2729, %v2744
    %v2746 = vsel %vm2740, %v2743, %v2745
    %v2747 = vsel %vm2739, %v2726, %v2729
    %v2748 = vsel %vm2742, %v2735, 920167782
    %v2749 = vsel %vm2741, %v2732, %v2748
    %v2750 = vsel %vm2740, %v2747, %v2749
    %v2751 = vsel %vm2739, %v2729, %v2732
    %v2752 = vsel %vm2742, %v2738, 1326507024
    %v2753 = vsel %vm2741, %v2735, %v2752
    %v2754 = vsel %vm2740, %v2751, %v2753
    %v2755 = vshll.u32 %v2715, 8
    %v2756 = vmul.u32.u64.compose %v2755, %v2754
    %v2757 = vextract.low.u32 %v2756
    %v2758 = vextract.high.u32 %v2756
    %v2759 = vmul.u32.u64.compose %v2755, %v2750
    %v2760 = vextract.low.u32 %v2759
    %v2761 = vextract.high.u32 %v2759
    %v2762 = vmul.u32 %v2755, %v2746
    %v2763 = vadd.s32 %v2758, %v2760
    %vm2764 = vc.u32 %v2758, %v2760
    %v2765 = vadd.s32 %v2761, 1
    %v2766 = vsel %vm2764, %v2765, %v2761
    %v2767 = vadd.s32 %v2762, %v2766
    %v2768 = vadd.s32 %v2767, 536870912
    %v2769 = vshrl.u32 %v2768, 30
    %v2770 = vshll.u32 %v2769, 30
    %v2771 = vsub.s32 %v2767, %v2770
    %vm2772 = vcmp.lt.s32.totalorder %v2771, 0
    %v2773 = vsub.s32 0, %v2771
    %v2774 = vsel %vm2772, %v2773, %v2771
    %v2775 = vclz %v2774
    %v2776 = vsub.s32 %v2775, 2
    %vm2777 = vcmp.gt.s32.totalorder 0, %v2776
    %v2778 = vsel %vm2777, 0, %v2776
    %v2779 = vsub.s32 32, %v2778
    %v2780 = vshll.u32 %v2771, %v2778
    %v2781 = vshrl.u32 %v2763, %v2779
    %v2782 = vor.u32 %v2780, %v2781
    %v2783 = vsub.s32 4294967266, %v2778
    %v2784 = vadd.s32 %v2783, 127
    %v2785 = vshll.u32 %v2784, 23
    %v2786 = vor.u32 4788187, %v2785
    %v2787 = vand.u32 2147483647, %v2786
    %v2789 = vcvt.s32.f32 %v2782
    %v2790 = vmul.f32 %v2789, %v2787
    %v2791 = vxor.u32 %v2790, 2147483648
    %v2792 = vsel %vm2709, %v2791, %v2790
    %v2793 = vsub.s32 4, %v2769
    %v2794 = vsel %vm2709, %v2793, %v2769
    %v2795 = vsel %vm2708, %v189, %v2792
    %v2796 = vsel %vm2708, 0, %v2794
    %v2797 = vcosq.f32.pop %v2795
    %v2798 = vsinq.f32.pop %v2795
    %vm2799 = vweird.f32 %v189
    %v2800 = vadd.s32 %v2796, 3
    %v2801 = vand.u32 %v2800, 3
    %vm2802 = vcmp.lt.s32.totalorder %v2801, 2
    %vm2803 = vcmp.eq.s32.totalorder %v2801, 0
    %v2804 = vxor.u32 %v2798, 2147483648
    %v2805 = vsel %vm2803, %v2797, %v2804
    %vm2806 = vcmp.eq.s32.totalorder %v2801, 2
    %v2807 = vxor.u32 %v2797, 2147483648
    %v2808 = vsel %vm2806, %v2807, %v2798
    %v2809 = vsel %vm2802, %v2805, %v2808
    %v2810 = vsel %vm2799, nan, %v2809
    %v2811 = vand.u32 2147483647, %v194
    %vm2812 = vcmp.le.f32.partialorder %v2811, 0.7853982
    %vm2813 = vcmp.lt.s32.totalorder %v194, 0
    %v2814 = vand.u32 %v194, 2139095040
    %v2815 = vshrl.u32 %v2814, 23
    %v2816 = vsub.s32 %v2815, 127
    %v2817 = vand.u32 2147483647, %v194
    %v2818 = vand.u32 %v2817, 8388607
    %v2819 = vor.u32 %v2818, 8388608
    %v2820 = vsub.s32 0, %v2819
    %v2821 = vadd.s32 %v2816, 1
    %vm2822 = vcmp.gt.s32.totalorder %v2821, 0
    %v2823 = vsel %vm2822, %v2821, 0
    %v2824 = vshrl.u32 %v2823, 5
    %v2825 = vand.u32 %v2823, 31
    %v2826 = vsub.s32 32, %v2825
    %v2827 = vshrl.u32 683565275, %v2826
    %v2828 = vshll.u32 683565275, %v2825
    %v2829 = vshrl.u32 2475754826, %v2826
    %v2830 = vor.u32 %v2828, %v2829
    %v2831 = vshll.u32 2475754826, %v2825
    %v2832 = vshrl.u32 2131351028, %v2826
    %v2833 = vor.u32 %v2831, %v2832
    %v2834 = vshll.u32 2131351028, %v2825
    %v2835 = vshrl.u32 2102212464, %v2826
    %v2836 = vor.u32 %v2834, %v2835
    %v2837 = vshll.u32 2102212464, %v2825
    %v2838 = vshrl.u32 920167782, %v2826
    %v2839 = vor.u32 %v2837, %v2838
    %v2840 = vshll.u32 920167782, %v2825
    %v2841 = vshrl.u32 1326507024, %v2826
    %v2842 = vor.u32 %v2840, %v2841
    %vm2843 = vcmp.lt.s32.totalorder %v2824, 1
    %vm2844 = vcmp.lt.s32.totalorder %v2824, 2
    %vm2845 = vcmp.lt.s32.totalorder %v2824, 3
    %vm2846 = vcmp.lt.s32.totalorder %v2824, 4
    %v2847 = vsel %vm2843, %v2827, %v2830
    %v2848 = vsel %vm2846, %v2836, 2102212464
    %v2849 = vsel %vm2845, %v2833, %v2848
    %v2850 = vsel %vm2844, %v2847, %v2849
    %v2851 = vsel %vm2843, %v2830, %v2833
    %v2852 = vsel %vm2846, %v2839, 920167782
    %v2853 = vsel %vm2845, %v2836, %v2852
    %v2854 = vsel %vm2844, %v2851, %v2853
    %v2855 = vsel %vm2843, %v2833, %v2836
    %v2856 = vsel %vm2846, %v2842, 1326507024
    %v2857 = vsel %vm2845, %v2839, %v2856
    %v2858 = vsel %vm2844, %v2855, %v2857
    %v2859 = vshll.u32 %v2819, 8
    %v2860 = vmul.u32.u64.compose %v2859, %v2858
    %v2861 = vextract.low.u32 %v2860
    %v2862 = vextract.high.u32 %v2860
    %v2863 = vmul.u32.u64.compose %v2859, %v2854
    %v2864 = vextract.low.u32 %v2863
    %v2865 = vextract.high.u32 %v2863
    %v2866 = vmul.u32 %v2859, %v2850
    %v2867 = vadd.s32 %v2862, %v2864
    %vm2868 = vc.u32 %v2862, %v2864
    %v2869 = vadd.s32 %v2865, 1
    %v2870 = vsel %vm2868, %v2869, %v2865
    %v2871 = vadd.s32 %v2866, %v2870
    %v2872 = vadd.s32 %v2871, 536870912
    %v2873 = vshrl.u32 %v2872, 30
    %v2874 = vshll.u32 %v2873, 30
    %v2875 = vsub.s32 %v2871, %v2874
    %vm2876 = vcmp.lt.s32.totalorder %v2875, 0
    %v2877 = vsub.s32 0, %v2875
    %v2878 = vsel %vm2876, %v2877, %v2875
    %v2879 = vclz %v2878
    %v2880 = vsub.s32 %v2879, 2
    %vm2881 = vcmp.gt.s32.totalorder 0, %v2880
    %v2882 = vsel %vm2881, 0, %v2880
    %v2883 = vsub.s32 32, %v2882
    %v2884 = vshll.u32 %v2875, %v2882
    %v2885 = vshrl.u32 %v2867, %v2883
    %v2886 = vor.u32 %v2884, %v2885
    %v2887 = vsub.s32 4294967266, %v2882
    %v2888 = vadd.s32 %v2887, 127
    %v2889 = vshll.u32 %v2888, 23
    %v2890 = vor.u32 4788187, %v2889
    %v2891 = vand.u32 2147483647, %v2890
    %v2893 = vcvt.s32.f32 %v2886
    %v2894 = vmul.f32 %v2893, %v2891
    %v2895 = vxor.u32 %v2894, 2147483648
    %v2896 = vsel %vm2813, %v2895, %v2894
    %v2897 = vsub.s32 4, %v2873
    %v2898 = vsel %vm2813, %v2897, %v2873
    %v2899 = vsel %vm2812, %v194, %v2896
    %v2900 = vsel %vm2812, 0, %v2898
    %v2901 = vcosq.f32.pop %v2899
    %v2902 = vsinq.f32.pop %v2899
    %vm2903 = vweird.f32 %v194
    %v2904 = vadd.s32 %v2900, 3
    %v2905 = vand.u32 %v2904, 3
    %vm2906 = vcmp.lt.s32.totalorder %v2905, 2
    %vm2907 = vcmp.eq.s32.totalorder %v2905, 0
    %v2908 = vxor.u32 %v2902, 2147483648
    %v2909 = vsel %vm2907, %v2901, %v2908
    %vm2910 = vcmp.eq.s32.totalorder %v2905, 2
    %v2911 = vxor.u32 %v2901, 2147483648
    %v2912 = vsel %vm2910, %v2911, %v2902
    %v2913 = vsel %vm2906, %v2909, %v2912
    %v2914 = vsel %vm2903, nan, %v2913
    %v2915 = vand.u32 2147483647, %v199
    %vm2916 = vcmp.le.f32.partialorder %v2915, 0.7853982
    %vm2917 = vcmp.lt.s32.totalorder %v199, 0
    %v2918 = vand.u32 %v199, 2139095040
    %v2919 = vshrl.u32 %v2918, 23
    %v2920 = vsub.s32 %v2919, 127
    %v2921 = vand.u32 2147483647, %v199
    %v2922 = vand.u32 %v2921, 8388607
    %v2923 = vor.u32 %v2922, 8388608
    %v2924 = vsub.s32 0, %v2923
    %v2925 = vadd.s32 %v2920, 1
    %vm2926 = vcmp.gt.s32.totalorder %v2925, 0
    %v2927 = vsel %vm2926, %v2925, 0
    %v2928 = vshrl.u32 %v2927, 5
    %v2929 = vand.u32 %v2927, 31
    %v2930 = vsub.s32 32, %v2929
    %v2931 = vshrl.u32 683565275, %v2930
    %v2932 = vshll.u32 683565275, %v2929
    %v2933 = vshrl.u32 2475754826, %v2930
    %v2934 = vor.u32 %v2932, %v2933
    %v2935 = vshll.u32 2475754826, %v2929
    %v2936 = vshrl.u32 2131351028, %v2930
    %v2937 = vor.u32 %v2935, %v2936
    %v2938 = vshll.u32 2131351028, %v2929
    %v2939 = vshrl.u32 2102212464, %v2930
    %v2940 = vor.u32 %v2938, %v2939
    %v2941 = vshll.u32 2102212464, %v2929
    %v2942 = vshrl.u32 920167782, %v2930
    %v2943 = vor.u32 %v2941, %v2942
    %v2944 = vshll.u32 920167782, %v2929
    %v2945 = vshrl.u32 1326507024, %v2930
    %v2946 = vor.u32 %v2944, %v2945
    %vm2947 = vcmp.lt.s32.totalorder %v2928, 1
    %vm2948 = vcmp.lt.s32.totalorder %v2928, 2
    %vm2949 = vcmp.lt.s32.totalorder %v2928, 3
    %vm2950 = vcmp.lt.s32.totalorder %v2928, 4
    %v2951 = vsel %vm2947, %v2931, %v2934
    %v2952 = vsel %vm2950, %v2940, 2102212464
    %v2953 = vsel %vm2949, %v2937, %v2952
    %v2954 = vsel %vm2948, %v2951, %v2953
    %v2955 = vsel %vm2947, %v2934, %v2937
    %v2956 = vsel %vm2950, %v2943, 920167782
    %v2957 = vsel %vm2949, %v2940, %v2956
    %v2958 = vsel %vm2948, %v2955, %v2957
    %v2959 = vsel %vm2947, %v2937, %v2940
    %v2960 = vsel %vm2950, %v2946, 1326507024
    %v2961 = vsel %vm2949, %v2943, %v2960
    %v2962 = vsel %vm2948, %v2959, %v2961
    %v2963 = vshll.u32 %v2923, 8
    %v2964 = vmul.u32.u64.compose %v2963, %v2962
    %v2965 = vextract.low.u32 %v2964
    %v2966 = vextract.high.u32 %v2964
    %v2967 = vmul.u32.u64.compose %v2963, %v2958
    %v2968 = vextract.low.u32 %v2967
    %v2969 = vextract.high.u32 %v2967
    %v2970 = vmul.u32 %v2963, %v2954
    %v2971 = vadd.s32 %v2966, %v2968
    %vm2972 = vc.u32 %v2966, %v2968
    %v2973 = vadd.s32 %v2969, 1
    %v2974 = vsel %vm2972, %v2973, %v2969
    %v2975 = vadd.s32 %v2970, %v2974
    %v2976 = vadd.s32 %v2975, 536870912
    %v2977 = vshrl.u32 %v2976, 30
    %v2978 = vshll.u32 %v2977, 30
    %v2979 = vsub.s32 %v2975, %v2978
    %vm2980 = vcmp.lt.s32.totalorder %v2979, 0
    %v2981 = vsub.s32 0, %v2979
    %v2982 = vsel %vm2980, %v2981, %v2979
    %v2983 = vclz %v2982
    %v2984 = vsub.s32 %v2983, 2
    %vm2985 = vcmp.gt.s32.totalorder 0, %v2984
    %v2986 = vsel %vm2985, 0, %v2984
    %v2987 = vsub.s32 32, %v2986
    %v2988 = vshll.u32 %v2979, %v2986
    %v2989 = vshrl.u32 %v2971, %v2987
    %v2990 = vor.u32 %v2988, %v2989
    %v2991 = vsub.s32 4294967266, %v2986
    %v2992 = vadd.s32 %v2991, 127
    %v2993 = vshll.u32 %v2992, 23
    %v2994 = vor.u32 4788187, %v2993
    %v2995 = vand.u32 2147483647, %v2994
    %v2997 = vcvt.s32.f32 %v2990
    %v2998 = vmul.f32 %v2997, %v2995
    %v2999 = vxor.u32 %v2998, 2147483648
    %v3000 = vsel %vm2917, %v2999, %v2998
    %v3001 = vsub.s32 4, %v2977
    %v3002 = vsel %vm2917, %v3001, %v2977
    %v3003 = vsel %vm2916, %v199, %v3000
    %v3004 = vsel %vm2916, 0, %v3002
    %v3005 = vcosq.f32.pop %v3003
    %v3006 = vsinq.f32.pop %v3003
    %vm3007 = vweird.f32 %v199
    %v3008 = vadd.s32 %v3004, 3
    %v3009 = vand.u32 %v3008, 3
    %vm3010 = vcmp.lt.s32.totalorder %v3009, 2
    %vm3011 = vcmp.eq.s32.totalorder %v3009, 0
    %v3012 = vxor.u32 %v3006, 2147483648
    %v3013 = vsel %vm3011, %v3005, %v3012
    %vm3014 = vcmp.eq.s32.totalorder %v3009, 2
    %v3015 = vxor.u32 %v3005, 2147483648
    %v3016 = vsel %vm3014, %v3015, %v3006
    %v3017 = vsel %vm3010, %v3013, %v3016
    %v3018 = vsel %vm3007, nan, %v3017
    %v3019 = vand.u32 2147483647, %v204
    %vm3020 = vcmp.le.f32.partialorder %v3019, 0.7853982
    %vm3021 = vcmp.lt.s32.totalorder %v204, 0
    %v3022 = vand.u32 %v204, 2139095040
    %v3023 = vshrl.u32 %v3022, 23
    %v3024 = vsub.s32 %v3023, 127
    %v3025 = vand.u32 2147483647, %v204
    %v3026 = vand.u32 %v3025, 8388607
    %v3027 = vor.u32 %v3026, 8388608
    %v3028 = vsub.s32 0, %v3027
    %v3029 = vadd.s32 %v3024, 1
    %vm3030 = vcmp.gt.s32.totalorder %v3029, 0
    %v3031 = vsel %vm3030, %v3029, 0
    %v3032 = vshrl.u32 %v3031, 5
    %v3033 = vand.u32 %v3031, 31
    %v3034 = vsub.s32 32, %v3033
    %v3035 = vshrl.u32 683565275, %v3034
    %v3036 = vshll.u32 683565275, %v3033
    %v3037 = vshrl.u32 2475754826, %v3034
    %v3038 = vor.u32 %v3036, %v3037
    %v3039 = vshll.u32 2475754826, %v3033
    %v3040 = vshrl.u32 2131351028, %v3034
    %v3041 = vor.u32 %v3039, %v3040
    %v3042 = vshll.u32 2131351028, %v3033
    %v3043 = vshrl.u32 2102212464, %v3034
    %v3044 = vor.u32 %v3042, %v3043
    %v3045 = vshll.u32 2102212464, %v3033
    %v3046 = vshrl.u32 920167782, %v3034
    %v3047 = vor.u32 %v3045, %v3046
    %v3048 = vshll.u32 920167782, %v3033
    %v3049 = vshrl.u32 1326507024, %v3034
    %v3050 = vor.u32 %v3048, %v3049
    %vm3051 = vcmp.lt.s32.totalorder %v3032, 1
    %vm3052 = vcmp.lt.s32.totalorder %v3032, 2
    %vm3053 = vcmp.lt.s32.totalorder %v3032, 3
    %vm3054 = vcmp.lt.s32.totalorder %v3032, 4
    %v3055 = vsel %vm3051, %v3035, %v3038
    %v3056 = vsel %vm3054, %v3044, 2102212464
    %v3057 = vsel %vm3053, %v3041, %v3056
    %v3058 = vsel %vm3052, %v3055, %v3057
    %v3059 = vsel %vm3051, %v3038, %v3041
    %v3060 = vsel %vm3054, %v3047, 920167782
    %v3061 = vsel %vm3053, %v3044, %v3060
    %v3062 = vsel %vm3052, %v3059, %v3061
    %v3063 = vsel %vm3051, %v3041, %v3044
    %v3064 = vsel %vm3054, %v3050, 1326507024
    %v3065 = vsel %vm3053, %v3047, %v3064
    %v3066 = vsel %vm3052, %v3063, %v3065
    %v3067 = vshll.u32 %v3027, 8
    %v3068 = vmul.u32.u64.compose %v3067, %v3066
    %v3069 = vextract.low.u32 %v3068
    %v3070 = vextract.high.u32 %v3068
    %v3071 = vmul.u32.u64.compose %v3067, %v3062
    %v3072 = vextract.low.u32 %v3071
    %v3073 = vextract.high.u32 %v3071
    %v3074 = vmul.u32 %v3067, %v3058
    %v3075 = vadd.s32 %v3070, %v3072
    %vm3076 = vc.u32 %v3070, %v3072
    %v3077 = vadd.s32 %v3073, 1
    %v3078 = vsel %vm3076, %v3077, %v3073
    %v3079 = vadd.s32 %v3074, %v3078
    %v3080 = vadd.s32 %v3079, 536870912
    %v3081 = vshrl.u32 %v3080, 30
    %v3082 = vshll.u32 %v3081, 30
    %v3083 = vsub.s32 %v3079, %v3082
    %vm3084 = vcmp.lt.s32.totalorder %v3083, 0
    %v3085 = vsub.s32 0, %v3083
    %v3086 = vsel %vm3084, %v3085, %v3083
    %v3087 = vclz %v3086
    %v3088 = vsub.s32 %v3087, 2
    %vm3089 = vcmp.gt.s32.totalorder 0, %v3088
    %v3090 = vsel %vm3089, 0, %v3088
    %v3091 = vsub.s32 32, %v3090
    %v3092 = vshll.u32 %v3083, %v3090
    %v3093 = vshrl.u32 %v3075, %v3091
    %v3094 = vor.u32 %v3092, %v3093
    %v3095 = vsub.s32 4294967266, %v3090
    %v3096 = vadd.s32 %v3095, 127
    %v3097 = vshll.u32 %v3096, 23
    %v3098 = vor.u32 4788187, %v3097
    %v3099 = vand.u32 2147483647, %v3098
    %v3101 = vcvt.s32.f32 %v3094
    %v3102 = vmul.f32 %v3101, %v3099
    %v3103 = vxor.u32 %v3102, 2147483648
    %v3104 = vsel %vm3021, %v3103, %v3102
    %v3105 = vsub.s32 4, %v3081
    %v3106 = vsel %vm3021, %v3105, %v3081
    %v3107 = vsel %vm3020, %v204, %v3104
    %v3108 = vsel %vm3020, 0, %v3106
    %v3109 = vcosq.f32.pop %v3107
    %v3110 = vsinq.f32.pop %v3107
    %vm3111 = vweird.f32 %v204
    %v3112 = vadd.s32 %v3108, 3
    %v3113 = vand.u32 %v3112, 3
    %vm3114 = vcmp.lt.s32.totalorder %v3113, 2
    %vm3115 = vcmp.eq.s32.totalorder %v3113, 0
    %v3116 = vxor.u32 %v3110, 2147483648
    %v3117 = vsel %vm3115, %v3109, %v3116
    %vm3118 = vcmp.eq.s32.totalorder %v3113, 2
    %v3119 = vxor.u32 %v3109, 2147483648
    %v3120 = vsel %vm3118, %v3119, %v3110
    %v3121 = vsel %vm3114, %v3117, %v3120
    %v3122 = vsel %vm3111, nan, %v3121
    %v3123 = vand.u32 2147483647, %v209
    %vm3124 = vcmp.le.f32.partialorder %v3123, 0.7853982
    %vm3125 = vcmp.lt.s32.totalorder %v209, 0
    %v3126 = vand.u32 %v209, 2139095040
    %v3127 = vshrl.u32 %v3126, 23
    %v3128 = vsub.s32 %v3127, 127
    %v3129 = vand.u32 2147483647, %v209
    %v3130 = vand.u32 %v3129, 8388607
    %v3131 = vor.u32 %v3130, 8388608
    %v3132 = vsub.s32 0, %v3131
    %v3133 = vadd.s32 %v3128, 1
    %vm3134 = vcmp.gt.s32.totalorder %v3133, 0
    %v3135 = vsel %vm3134, %v3133, 0
    %v3136 = vshrl.u32 %v3135, 5
    %v3137 = vand.u32 %v3135, 31
    %v3138 = vsub.s32 32, %v3137
    %v3139 = vshrl.u32 683565275, %v3138
    %v3140 = vshll.u32 683565275, %v3137
    %v3141 = vshrl.u32 2475754826, %v3138
    %v3142 = vor.u32 %v3140, %v3141
    %v3143 = vshll.u32 2475754826, %v3137
    %v3144 = vshrl.u32 2131351028, %v3138
    %v3145 = vor.u32 %v3143, %v3144
    %v3146 = vshll.u32 2131351028, %v3137
    %v3147 = vshrl.u32 2102212464, %v3138
    %v3148 = vor.u32 %v3146, %v3147
    %v3149 = vshll.u32 2102212464, %v3137
    %v3150 = vshrl.u32 920167782, %v3138
    %v3151 = vor.u32 %v3149, %v3150
    %v3152 = vshll.u32 920167782, %v3137
    %v3153 = vshrl.u32 1326507024, %v3138
    %v3154 = vor.u32 %v3152, %v3153
    %vm3155 = vcmp.lt.s32.totalorder %v3136, 1
    %vm3156 = vcmp.lt.s32.totalorder %v3136, 2
    %vm3157 = vcmp.lt.s32.totalorder %v3136, 3
    %vm3158 = vcmp.lt.s32.totalorder %v3136, 4
    %v3159 = vsel %vm3155, %v3139, %v3142
    %v3160 = vsel %vm3158, %v3148, 2102212464
    %v3161 = vsel %vm3157, %v3145, %v3160
    %v3162 = vsel %vm3156, %v3159, %v3161
    %v3163 = vsel %vm3155, %v3142, %v3145
    %v3164 = vsel %vm3158, %v3151, 920167782
    %v3165 = vsel %vm3157, %v3148, %v3164
    %v3166 = vsel %vm3156, %v3163, %v3165
    %v3167 = vsel %vm3155, %v3145, %v3148
    %v3168 = vsel %vm3158, %v3154, 1326507024
    %v3169 = vsel %vm3157, %v3151, %v3168
    %v3170 = vsel %vm3156, %v3167, %v3169
    %v3171 = vshll.u32 %v3131, 8
    %v3172 = vmul.u32.u64.compose %v3171, %v3170
    %v3173 = vextract.low.u32 %v3172
    %v3174 = vextract.high.u32 %v3172
    %v3175 = vmul.u32.u64.compose %v3171, %v3166
    %v3176 = vextract.low.u32 %v3175
    %v3177 = vextract.high.u32 %v3175
    %v3178 = vmul.u32 %v3171, %v3162
    %v3179 = vadd.s32 %v3174, %v3176
    %vm3180 = vc.u32 %v3174, %v3176
    %v3181 = vadd.s32 %v3177, 1
    %v3182 = vsel %vm3180, %v3181, %v3177
    %v3183 = vadd.s32 %v3178, %v3182
    %v3184 = vadd.s32 %v3183, 536870912
    %v3185 = vshrl.u32 %v3184, 30
    %v3186 = vshll.u32 %v3185, 30
    %v3187 = vsub.s32 %v3183, %v3186
    %vm3188 = vcmp.lt.s32.totalorder %v3187, 0
    %v3189 = vsub.s32 0, %v3187
    %v3190 = vsel %vm3188, %v3189, %v3187
    %v3191 = vclz %v3190
    %v3192 = vsub.s32 %v3191, 2
    %vm3193 = vcmp.gt.s32.totalorder 0, %v3192
    %v3194 = vsel %vm3193, 0, %v3192
    %v3195 = vsub.s32 32, %v3194
    %v3196 = vshll.u32 %v3187, %v3194
    %v3197 = vshrl.u32 %v3179, %v3195
    %v3198 = vor.u32 %v3196, %v3197
    %v3199 = vsub.s32 4294967266, %v3194
    %v3200 = vadd.s32 %v3199, 127
    %v3201 = vshll.u32 %v3200, 23
    %v3202 = vor.u32 4788187, %v3201
    %v3203 = vand.u32 2147483647, %v3202
    %v3205 = vcvt.s32.f32 %v3198
    %v3206 = vmul.f32 %v3205, %v3203
    %v3207 = vxor.u32 %v3206, 2147483648
    %v3208 = vsel %vm3125, %v3207, %v3206
    %v3209 = vsub.s32 4, %v3185
    %v3210 = vsel %vm3125, %v3209, %v3185
    %v3211 = vsel %vm3124, %v209, %v3208
    %v3212 = vsel %vm3124, 0, %v3210
    %v3213 = vcosq.f32.pop %v3211
    %v3214 = vsinq.f32.pop %v3211
    %vm3215 = vweird.f32 %v209
    %v3216 = vadd.s32 %v3212, 3
    %v3217 = vand.u32 %v3216, 3
    %vm3218 = vcmp.lt.s32.totalorder %v3217, 2
    %vm3219 = vcmp.eq.s32.totalorder %v3217, 0
    %v3220 = vxor.u32 %v3214, 2147483648
    %v3221 = vsel %vm3219, %v3213, %v3220
    %vm3222 = vcmp.eq.s32.totalorder %v3217, 2
    %v3223 = vxor.u32 %v3213, 2147483648
    %v3224 = vsel %vm3222, %v3223, %v3214
    %v3225 = vsel %vm3218, %v3221, %v3224
    %v3226 = vsel %vm3215, nan, %v3225
    %v3227 = vand.u32 2147483647, %v214
    %vm3228 = vcmp.le.f32.partialorder %v3227, 0.7853982
    %vm3229 = vcmp.lt.s32.totalorder %v214, 0
    %v3230 = vand.u32 %v214, 2139095040
    %v3231 = vshrl.u32 %v3230, 23
    %v3232 = vsub.s32 %v3231, 127
    %v3233 = vand.u32 2147483647, %v214
    %v3234 = vand.u32 %v3233, 8388607
    %v3235 = vor.u32 %v3234, 8388608
    %v3236 = vsub.s32 0, %v3235
    %v3237 = vadd.s32 %v3232, 1
    %vm3238 = vcmp.gt.s32.totalorder %v3237, 0
    %v3239 = vsel %vm3238, %v3237, 0
    %v3240 = vshrl.u32 %v3239, 5
    %v3241 = vand.u32 %v3239, 31
    %v3242 = vsub.s32 32, %v3241
    %v3243 = vshrl.u32 683565275, %v3242
    %v3244 = vshll.u32 683565275, %v3241
    %v3245 = vshrl.u32 2475754826, %v3242
    %v3246 = vor.u32 %v3244, %v3245
    %v3247 = vshll.u32 2475754826, %v3241
    %v3248 = vshrl.u32 2131351028, %v3242
    %v3249 = vor.u32 %v3247, %v3248
    %v3250 = vshll.u32 2131351028, %v3241
    %v3251 = vshrl.u32 2102212464, %v3242
    %v3252 = vor.u32 %v3250, %v3251
    %v3253 = vshll.u32 2102212464, %v3241
    %v3254 = vshrl.u32 920167782, %v3242
    %v3255 = vor.u32 %v3253, %v3254
    %v3256 = vshll.u32 920167782, %v3241
    %v3257 = vshrl.u32 1326507024, %v3242
    %v3258 = vor.u32 %v3256, %v3257
    %vm3259 = vcmp.lt.s32.totalorder %v3240, 1
    %vm3260 = vcmp.lt.s32.totalorder %v3240, 2
    %vm3261 = vcmp.lt.s32.totalorder %v3240, 3
    %vm3262 = vcmp.lt.s32.totalorder %v3240, 4
    %v3263 = vsel %vm3259, %v3243, %v3246
    %v3264 = vsel %vm3262, %v3252, 2102212464
    %v3265 = vsel %vm3261, %v3249, %v3264
    %v3266 = vsel %vm3260, %v3263, %v3265
    %v3267 = vsel %vm3259, %v3246, %v3249
    %v3268 = vsel %vm3262, %v3255, 920167782
    %v3269 = vsel %vm3261, %v3252, %v3268
    %v3270 = vsel %vm3260, %v3267, %v3269
    %v3271 = vsel %vm3259, %v3249, %v3252
    %v3272 = vsel %vm3262, %v3258, 1326507024
    %v3273 = vsel %vm3261, %v3255, %v3272
    %v3274 = vsel %vm3260, %v3271, %v3273
    %v3275 = vshll.u32 %v3235, 8
    %v3276 = vmul.u32.u64.compose %v3275, %v3274
    %v3277 = vextract.low.u32 %v3276
    %v3278 = vextract.high.u32 %v3276
    %v3279 = vmul.u32.u64.compose %v3275, %v3270
    %v3280 = vextract.low.u32 %v3279
    %v3281 = vextract.high.u32 %v3279
    %v3282 = vmul.u32 %v3275, %v3266
    %v3283 = vadd.s32 %v3278, %v3280
    %vm3284 = vc.u32 %v3278, %v3280
    %v3285 = vadd.s32 %v3281, 1
    %v3286 = vsel %vm3284, %v3285, %v3281
    %v3287 = vadd.s32 %v3282, %v3286
    %v3288 = vadd.s32 %v3287, 536870912
    %v3289 = vshrl.u32 %v3288, 30
    %v3290 = vshll.u32 %v3289, 30
    %v3291 = vsub.s32 %v3287, %v3290
    %vm3292 = vcmp.lt.s32.totalorder %v3291, 0
    %v3293 = vsub.s32 0, %v3291
    %v3294 = vsel %vm3292, %v3293, %v3291
    %v3295 = vclz %v3294
    %v3296 = vsub.s32 %v3295, 2
    %vm3297 = vcmp.gt.s32.totalorder 0, %v3296
    %v3298 = vsel %vm3297, 0, %v3296
    %v3299 = vsub.s32 32, %v3298
    %v3300 = vshll.u32 %v3291, %v3298
    %v3301 = vshrl.u32 %v3283, %v3299
    %v3302 = vor.u32 %v3300, %v3301
    %v3303 = vsub.s32 4294967266, %v3298
    %v3304 = vadd.s32 %v3303, 127
    %v3305 = vshll.u32 %v3304, 23
    %v3306 = vor.u32 4788187, %v3305
    %v3307 = vand.u32 2147483647, %v3306
    %v3309 = vcvt.s32.f32 %v3302
    %v3310 = vmul.f32 %v3309, %v3307
    %v3311 = vxor.u32 %v3310, 2147483648
    %v3312 = vsel %vm3229, %v3311, %v3310
    %v3313 = vsub.s32 4, %v3289
    %v3314 = vsel %vm3229, %v3313, %v3289
    %v3315 = vsel %vm3228, %v214, %v3312
    %v3316 = vsel %vm3228, 0, %v3314
    %v3317 = vcosq.f32.pop %v3315
    %v3318 = vsinq.f32.pop %v3315
    %vm3319 = vweird.f32 %v214
    %v3320 = vadd.s32 %v3316, 3
    %v3321 = vand.u32 %v3320, 3
    %vm3322 = vcmp.lt.s32.totalorder %v3321, 2
    %vm3323 = vcmp.eq.s32.totalorder %v3321, 0
    %v3324 = vxor.u32 %v3318, 2147483648
    %v3325 = vsel %vm3323, %v3317, %v3324
    %vm3326 = vcmp.eq.s32.totalorder %v3321, 2
    %v3327 = vxor.u32 %v3317, 2147483648
    %v3328 = vsel %vm3326, %v3327, %v3318
    %v3329 = vsel %vm3322, %v3325, %v3328
    %v3330 = vsel %vm3319, nan, %v3329
    %v3331 = vand.u32 2147483647, %v219
    %vm3332 = vcmp.le.f32.partialorder %v3331, 0.7853982
    %vm3333 = vcmp.lt.s32.totalorder %v219, 0
    %v3334 = vand.u32 %v219, 2139095040
    %v3335 = vshrl.u32 %v3334, 23
    %v3336 = vsub.s32 %v3335, 127
    %v3337 = vand.u32 2147483647, %v219
    %v3338 = vand.u32 %v3337, 8388607
    %v3339 = vor.u32 %v3338, 8388608
    %v3340 = vsub.s32 0, %v3339
    %v3341 = vadd.s32 %v3336, 1
    %vm3342 = vcmp.gt.s32.totalorder %v3341, 0
    %v3343 = vsel %vm3342, %v3341, 0
    %v3344 = vshrl.u32 %v3343, 5
    %v3345 = vand.u32 %v3343, 31
    %v3346 = vsub.s32 32, %v3345
    %v3347 = vshrl.u32 683565275, %v3346
    %v3348 = vshll.u32 683565275, %v3345
    %v3349 = vshrl.u32 2475754826, %v3346
    %v3350 = vor.u32 %v3348, %v3349
    %v3351 = vshll.u32 2475754826, %v3345
    %v3352 = vshrl.u32 2131351028, %v3346
    %v3353 = vor.u32 %v3351, %v3352
    %v3354 = vshll.u32 2131351028, %v3345
    %v3355 = vshrl.u32 2102212464, %v3346
    %v3356 = vor.u32 %v3354, %v3355
    %v3357 = vshll.u32 2102212464, %v3345
    %v3358 = vshrl.u32 920167782, %v3346
    %v3359 = vor.u32 %v3357, %v3358
    %v3360 = vshll.u32 920167782, %v3345
    %v3361 = vshrl.u32 1326507024, %v3346
    %v3362 = vor.u32 %v3360, %v3361
    %vm3363 = vcmp.lt.s32.totalorder %v3344, 1
    %vm3364 = vcmp.lt.s32.totalorder %v3344, 2
    %vm3365 = vcmp.lt.s32.totalorder %v3344, 3
    %vm3366 = vcmp.lt.s32.totalorder %v3344, 4
    %v3367 = vsel %vm3363, %v3347, %v3350
    %v3368 = vsel %vm3366, %v3356, 2102212464
    %v3369 = vsel %vm3365, %v3353, %v3368
    %v3370 = vsel %vm3364, %v3367, %v3369
    %v3371 = vsel %vm3363, %v3350, %v3353
    %v3372 = vsel %vm3366, %v3359, 920167782
    %v3373 = vsel %vm3365, %v3356, %v3372
    %v3374 = vsel %vm3364, %v3371, %v3373
    %v3375 = vsel %vm3363, %v3353, %v3356
    %v3376 = vsel %vm3366, %v3362, 1326507024
    %v3377 = vsel %vm3365, %v3359, %v3376
    %v3378 = vsel %vm3364, %v3375, %v3377
    %v3379 = vshll.u32 %v3339, 8
    %v3380 = vmul.u32.u64.compose %v3379, %v3378
    %v3381 = vextract.low.u32 %v3380
    %v3382 = vextract.high.u32 %v3380
    %v3383 = vmul.u32.u64.compose %v3379, %v3374
    %v3384 = vextract.low.u32 %v3383
    %v3385 = vextract.high.u32 %v3383
    %v3386 = vmul.u32 %v3379, %v3370
    %v3387 = vadd.s32 %v3382, %v3384
    %vm3388 = vc.u32 %v3382, %v3384
    %v3389 = vadd.s32 %v3385, 1
    %v3390 = vsel %vm3388, %v3389, %v3385
    %v3391 = vadd.s32 %v3386, %v3390
    %v3392 = vadd.s32 %v3391, 536870912
    %v3393 = vshrl.u32 %v3392, 30
    %v3394 = vshll.u32 %v3393, 30
    %v3395 = vsub.s32 %v3391, %v3394
    %vm3396 = vcmp.lt.s32.totalorder %v3395, 0
    %v3397 = vsub.s32 0, %v3395
    %v3398 = vsel %vm3396, %v3397, %v3395
    %v3399 = vclz %v3398
    %v3400 = vsub.s32 %v3399, 2
    %vm3401 = vcmp.gt.s32.totalorder 0, %v3400
    %v3402 = vsel %vm3401, 0, %v3400
    %v3403 = vsub.s32 32, %v3402
    %v3404 = vshll.u32 %v3395, %v3402
    %v3405 = vshrl.u32 %v3387, %v3403
    %v3406 = vor.u32 %v3404, %v3405
    %v3407 = vsub.s32 4294967266, %v3402
    %v3408 = vadd.s32 %v3407, 127
    %v3409 = vshll.u32 %v3408, 23
    %v3410 = vor.u32 4788187, %v3409
    %v3411 = vand.u32 2147483647, %v3410
    %v3413 = vcvt.s32.f32 %v3406
    %v3414 = vmul.f32 %v3413, %v3411
    %v3415 = vxor.u32 %v3414, 2147483648
    %v3416 = vsel %vm3333, %v3415, %v3414
    %v3417 = vsub.s32 4, %v3393
    %v3418 = vsel %vm3333, %v3417, %v3393
    %v3419 = vsel %vm3332, %v219, %v3416
    %v3420 = vsel %vm3332, 0, %v3418
    %v3421 = vcosq.f32.pop %v3419
    %v3422 = vsinq.f32.pop %v3419
    %vm3423 = vweird.f32 %v219
    %v3424 = vadd.s32 %v3420, 3
    %v3425 = vand.u32 %v3424, 3
    %vm3426 = vcmp.lt.s32.totalorder %v3425, 2
    %vm3427 = vcmp.eq.s32.totalorder %v3425, 0
    %v3428 = vxor.u32 %v3422, 2147483648
    %v3429 = vsel %vm3427, %v3421, %v3428
    %vm3430 = vcmp.eq.s32.totalorder %v3425, 2
    %v3431 = vxor.u32 %v3421, 2147483648
    %v3432 = vsel %vm3430, %v3431, %v3422
    %v3433 = vsel %vm3426, %v3429, %v3432
    %v3434 = vsel %vm3423, nan, %v3433
    %v3435 = vand.u32 2147483647, %v224
    %vm3436 = vcmp.le.f32.partialorder %v3435, 0.7853982
    %vm3437 = vcmp.lt.s32.totalorder %v224, 0
    %v3438 = vand.u32 %v224, 2139095040
    %v3439 = vshrl.u32 %v3438, 23
    %v3440 = vsub.s32 %v3439, 127
    %v3441 = vand.u32 2147483647, %v224
    %v3442 = vand.u32 %v3441, 8388607
    %v3443 = vor.u32 %v3442, 8388608
    %v3444 = vsub.s32 0, %v3443
    %v3445 = vadd.s32 %v3440, 1
    %vm3446 = vcmp.gt.s32.totalorder %v3445, 0
    %v3447 = vsel %vm3446, %v3445, 0
    %v3448 = vshrl.u32 %v3447, 5
    %v3449 = vand.u32 %v3447, 31
    %v3450 = vsub.s32 32, %v3449
    %v3451 = vshrl.u32 683565275, %v3450
    %v3452 = vshll.u32 683565275, %v3449
    %v3453 = vshrl.u32 2475754826, %v3450
    %v3454 = vor.u32 %v3452, %v3453
    %v3455 = vshll.u32 2475754826, %v3449
    %v3456 = vshrl.u32 2131351028, %v3450
    %v3457 = vor.u32 %v3455, %v3456
    %v3458 = vshll.u32 2131351028, %v3449
    %v3459 = vshrl.u32 2102212464, %v3450
    %v3460 = vor.u32 %v3458, %v3459
    %v3461 = vshll.u32 2102212464, %v3449
    %v3462 = vshrl.u32 920167782, %v3450
    %v3463 = vor.u32 %v3461, %v3462
    %v3464 = vshll.u32 920167782, %v3449
    %v3465 = vshrl.u32 1326507024, %v3450
    %v3466 = vor.u32 %v3464, %v3465
    %vm3467 = vcmp.lt.s32.totalorder %v3448, 1
    %vm3468 = vcmp.lt.s32.totalorder %v3448, 2
    %vm3469 = vcmp.lt.s32.totalorder %v3448, 3
    %vm3470 = vcmp.lt.s32.totalorder %v3448, 4
    %v3471 = vsel %vm3467, %v3451, %v3454
    %v3472 = vsel %vm3470, %v3460, 2102212464
    %v3473 = vsel %vm3469, %v3457, %v3472
    %v3474 = vsel %vm3468, %v3471, %v3473
    %v3475 = vsel %vm3467, %v3454, %v3457
    %v3476 = vsel %vm3470, %v3463, 920167782
    %v3477 = vsel %vm3469, %v3460, %v3476
    %v3478 = vsel %vm3468, %v3475, %v3477
    %v3479 = vsel %vm3467, %v3457, %v3460
    %v3480 = vsel %vm3470, %v3466, 1326507024
    %v3481 = vsel %vm3469, %v3463, %v3480
    %v3482 = vsel %vm3468, %v3479, %v3481
    %v3483 = vshll.u32 %v3443, 8
    %v3484 = vmul.u32.u64.compose %v3483, %v3482
    %v3485 = vextract.low.u32 %v3484
    %v3486 = vextract.high.u32 %v3484
    %v3487 = vmul.u32.u64.compose %v3483, %v3478
    %v3488 = vextract.low.u32 %v3487
    %v3489 = vextract.high.u32 %v3487
    %v3490 = vmul.u32 %v3483, %v3474
    %v3491 = vadd.s32 %v3486, %v3488
    %vm3492 = vc.u32 %v3486, %v3488
    %v3493 = vadd.s32 %v3489, 1
    %v3494 = vsel %vm3492, %v3493, %v3489
    %v3495 = vadd.s32 %v3490, %v3494
    %v3496 = vadd.s32 %v3495, 536870912
    %v3497 = vshrl.u32 %v3496, 30
    %v3498 = vshll.u32 %v3497, 30
    %v3499 = vsub.s32 %v3495, %v3498
    %vm3500 = vcmp.lt.s32.totalorder %v3499, 0
    %v3501 = vsub.s32 0, %v3499
    %v3502 = vsel %vm3500, %v3501, %v3499
    %v3503 = vclz %v3502
    %v3504 = vsub.s32 %v3503, 2
    %vm3505 = vcmp.gt.s32.totalorder 0, %v3504
    %v3506 = vsel %vm3505, 0, %v3504
    %v3507 = vsub.s32 32, %v3506
    %v3508 = vshll.u32 %v3499, %v3506
    %v3509 = vshrl.u32 %v3491, %v3507
    %v3510 = vor.u32 %v3508, %v3509
    %v3511 = vsub.s32 4294967266, %v3506
    %v3512 = vadd.s32 %v3511, 127
    %v3513 = vshll.u32 %v3512, 23
    %v3514 = vor.u32 4788187, %v3513
    %v3515 = vand.u32 2147483647, %v3514
    %v3517 = vcvt.s32.f32 %v3510
    %v3518 = vmul.f32 %v3517, %v3515
    %v3519 = vxor.u32 %v3518, 2147483648
    %v3520 = vsel %vm3437, %v3519, %v3518
    %v3521 = vsub.s32 4, %v3497
    %v3522 = vsel %vm3437, %v3521, %v3497
    %v3523 = vsel %vm3436, %v224, %v3520
    %v3524 = vsel %vm3436, 0, %v3522
    %v3525 = vcosq.f32.pop %v3523
    %v3526 = vsinq.f32.pop %v3523
    %vm3527 = vweird.f32 %v224
    %v3528 = vadd.s32 %v3524, 3
    %v3529 = vand.u32 %v3528, 3
    %vm3530 = vcmp.lt.s32.totalorder %v3529, 2
    %vm3531 = vcmp.eq.s32.totalorder %v3529, 0
    %v3532 = vxor.u32 %v3526, 2147483648
    %v3533 = vsel %vm3531, %v3525, %v3532
    %vm3534 = vcmp.eq.s32.totalorder %v3529, 2
    %v3535 = vxor.u32 %v3525, 2147483648
    %v3536 = vsel %vm3534, %v3535, %v3526
    %v3537 = vsel %vm3530, %v3533, %v3536
    %v3538 = vsel %vm3527, nan, %v3537
    %3555 = vrot.lane.b32.xlu0 %v1978, 64
    %v3556 = vpop.permute.xlu0 %3555
    %3557 = vrot.lane.b32.xlu0 %v2082, 64
    %v3558 = vpop.permute.xlu0 %3557
    %3559 = vrot.lane.b32.xlu0 %v2186, 64
    %v3560 = vpop.permute.xlu0 %3559
    %3561 = vrot.lane.b32.xlu0 %v2290, 64
    %v3562 = vpop.permute.xlu0 %3561
    %3563 = vrot.lane.b32.xlu0 %v2394, 64
    %v3564 = vpop.permute.xlu0 %3563
    %3565 = vrot.lane.b32.xlu0 %v2498, 64
    %v3566 = vpop.permute.xlu0 %3565
    %3567 = vrot.lane.b32.xlu0 %v2602, 64
    %v3568 = vpop.permute.xlu0 %3567
    %3569 = vrot.lane.b32.xlu0 %v2706, 64
    %v3570 = vpop.permute.xlu0 %3569
    %3571 = vrot.lane.b32.xlu0 %v2810, 64
    %v3572 = vpop.permute.xlu0 %3571
    %3573 = vrot.lane.b32.xlu0 %v2914, 64
    %v3574 = vpop.permute.xlu0 %3573
    %3575 = vrot.lane.b32.xlu0 %v3018, 64
    %v3576 = vpop.permute.xlu0 %3575
    %3577 = vrot.lane.b32.xlu0 %v3122, 64
    %v3578 = vpop.permute.xlu0 %3577
    %3579 = vrot.lane.b32.xlu0 %v3226, 64
    %v3580 = vpop.permute.xlu0 %3579
    %3581 = vrot.lane.b32.xlu0 %v3330, 64
    %v3582 = vpop.permute.xlu0 %3581
    %3583 = vrot.lane.b32.xlu0 %v3434, 64
    %v3584 = vpop.permute.xlu0 %3583
    %3585 = vrot.lane.b32.xlu0 %v3538, 64
    %v3586 = vpop.permute.xlu0 %3585
    %vm3603 = vcmask 523264
    %v3604 = vsel %vm3603, %v329, %v3556
    %v3605 = vsel %vm3603, %v432, %v3558
    %v3606 = vsel %vm3603, %v535, %v3560
    %v3607 = vsel %vm3603, %v638, %v3562
    %v3608 = vsel %vm3603, %v741, %v3564
    %v3609 = vsel %vm3603, %v844, %v3566
    %v3610 = vsel %vm3603, %v947, %v3568
    %v3611 = vsel %vm3603, %v1050, %v3570
    %v3612 = vsel %vm3603, %v1153, %v3572
    %v3613 = vsel %vm3603, %v1256, %v3574
    %v3614 = vsel %vm3603, %v1359, %v3576
    %v3615 = vsel %vm3603, %v1462, %v3578
    %v3616 = vsel %vm3603, %v1565, %v3580
    %v3617 = vsel %vm3603, %v1668, %v3582
    %v3618 = vsel %vm3603, %v1771, %v3584
    %v3619 = vsel %vm3603, %v1874, %v3586
    %3620 = vst [vmem:[#allocation2] sm:$0xff] %v3604
    %3621 = vst [vmem:[#allocation2 + $0x8] sm:$0xff] %v3605
    %3622 = vst [vmem:[#allocation2 + $0x10] sm:$0xff] %v3606
    %3623 = vst [vmem:[#allocation2 + $0x18] sm:$0xff] %v3607
    %3624 = vst [vmem:[#allocation2 + $0x20] sm:$0xff] %v3608
    %3625 = vst [vmem:[#allocation2 + $0x28] sm:$0xff] %v3609
    %3626 = vst [vmem:[#allocation2 + $0x30] sm:$0xff] %v3610
    %3627 = vst [vmem:[#allocation2 + $0x38] sm:$0xff] %v3611
    %3628 = vst [vmem:[#allocation2 + $0x40] sm:$0xff] %v3612
    %3629 = vst [vmem:[#allocation2 + $0x48] sm:$0xff] %v3613
    %3630 = vst [vmem:[#allocation2 + $0x50] sm:$0xff] %v3614
    %3631 = vst [vmem:[#allocation2 + $0x58] sm:$0xff] %v3615
    %3632 = vst [vmem:[#allocation2 + $0x60] sm:$0xff] %v3616
    %3633 = vst [vmem:[#allocation2 + $0x68] sm:$0xff] %v3617
    %3634 = vst [vmem:[#allocation2 + $0x70] sm:$0xff] %v3618
    %3635 = vst [vmem:[#allocation2 + $0x78] sm:$0xff] %v3619
    // Predicated region
    $region10: #{tpu_custom_call.1} parent=1 // pred_check
      _
    $region11: #{tpu_custom_call.1} parent=1 // pred_check_branch
      %3637 = sbr.rel (0) target = $region13
    $region12: #{tpu_custom_call.1} parent=1 // pred_region
      %s3639 = ssub.s32 2048, 2048
      %3640 = vsyncadd [#allocation3], %s3639
      %s3641 = sshll.u32 [#allocation2], 4
      %s3642 = int_to_ptr.vmem [resolvable:$true] %s3641
      %3647 = dma.vmem_to_hbm [thread:$0]  %s3642, 2048, %s2, [#allocation3], 128, 128, 8
    $region13: #{tpu_custom_call.1} parent=1 // pred_fallthru
      _
    // Predicated region
    $region14: #{tpu_custom_call.1} parent=1 // pred_check
      _
    $region15: #{tpu_custom_call.1} parent=1 // pred_check_branch
      %3649 = sbr.rel (0) target = $region17
    $region16: #{tpu_custom_call.1} parent=1 // pred_region
      %3650 = dma.done [#allocation3], 2048
    $region17: #{tpu_custom_call.1} parent=1 // pred_fallthru
      _
    %3651 = vsyncpa [#allocation3], 1

</llo_original>
